<compile_context>
chip_gen: v6e
topology: v6e:2x2x1
jax: 0.10.0
libtpu: 0.0.40
codegen_flags: <defaults>
</compile_context>

<pallas_src>
import functools
import math

import jax
import jax.numpy as jnp
from jax.experimental import pallas as pl
from jax.experimental.pallas import tpu as pltpu

# ---- small synthetic CLIP vision-tower hyper-parameters ----
BATCH = 2
CIN = 3                          # input image channels
IMG = 32                         # image height / width
PATCH = 8                        # conv1 kernel == stride == patch size
GRID = IMG // PATCH              # 4
NPATCH = GRID * GRID             # 16 patches
SEQ = NPATCH + 1                 # 17 tokens (CLS + patches)
SEQ_PAD = 24                     # padded to a multiple of 8 sublanes
WIDTH = 32                       # transformer width
HEADS = 4
HEAD_DIM = WIDTH // HEADS        # 8
LAYERS = 2
EMBED = 16                       # visual.proj output dim
HID = 4 * WIDTH                  # 128 (MLP hidden, already lane-dense)
CPP = CIN * PATCH * PATCH        # 192 flattened patch length
D_PAD = 128                      # lane-padded transformer width
CPP_PAD = 256                    # lane-padded patch length
EMBED_PAD = 128                  # lane-padded output dim
LN_EPS = 1e-5                    # torch.nn.LayerNorm default
NEG = -1e30                      # finite "minus infinity" for masked keys


# ------------------------------ Pallas kernel --------------------------------
def encoder_kernel(patches_ref, wconv_ref, prefix_ref, lnpre_ref, hm_ref,
                   wqkv_ref, bqkv_ref, wo_ref, wfc_ref, wpr_ref, vec_ref,
                   lnpost_ref, proj_ref, o_ref,
                   *, n_layers, n_heads, seq, seq_pad, d_real):
    """Full VisionEncoderZS forward for ONE image (one grid step)."""
    dp = wconv_ref.shape[-1]                       # 128 lane-padded width
    inv_d = 1.0 / d_real

    # ---- constants generated once per grid step ----
    lane = jax.lax.broadcasted_iota(jnp.int32, (1, dp), 1)
    fmask = (lane < d_real).astype(jnp.float32)                      # real features
    kidx = jax.lax.broadcasted_iota(jnp.int32, (1, seq_pad), 1)
    kbias = jnp.where(kidx < seq, 0.0, NEG).astype(jnp.float32)      # key padding

    def layer_norm(v, g, b):
        # stats over the d_real real features (padded lanes are zero)
        mu = jnp.sum(v, axis=-1, keepdims=True) * inv_d
        c = (v - mu) * fmask
        var = jnp.sum(c * c, axis=-1, keepdims=True) * inv_d
        return c * jax.lax.rsqrt(var + LN_EPS) * g + b               # g,b zero-padded

    # ---- conv1-as-matmul patch embedding + (CLS + positional) prefix + ln_pre ----
    emb = jnp.dot(patches_ref[...], wconv_ref[...],
                  preferred_element_type=jnp.float32)                # (Sp, 128)
    x = emb + prefix_ref[...]
    x = layer_norm(x, lnpre_ref[0:1], lnpre_ref[1:2])

    hm = hm_ref[...]                                                 # (H*Sp, 128) head-block mask

    # ---- residual attention blocks (static unroll, weights VMEM-resident) ----
    for l in range(n_layers):
        vec = vec_ref[l]                                             # (8, 128)
        g1, b1 = vec[0:1], vec[1:2]
        g2, b2 = vec[2:3], vec[3:4]
        bo, bfc, bpr = vec[4:5], vec[5:6], vec[6:7]

        # -- fused QKV projection (scale folded into the Q slice at pack time) --
        xn = layer_norm(x, g1, b1)
        qkv = jnp.dot(xn, wqkv_ref[l], preferred_element_type=jnp.float32) + bqkv_ref[l]
        q = qkv[:, 0 * dp:1 * dp]
        k = qkv[:, 1 * dp:2 * dp]
        v = qkv[:, 2 * dp:3 * dp]

        # -- all heads in one score matmul / one softmax / one PV matmul --
        # rows h*Sp+m of qs hold q[m] restricted to head h's lanes
        qs = jnp.concatenate([q] * n_heads, axis=0) * hm             # (H*Sp, 128)
        s = jnp.einsum('md,nd->mn', qs, k,
                       preferred_element_type=jnp.float32) + kbias   # (H*Sp, Sp)
        s = s - jnp.max(s, axis=-1, keepdims=True)
        p = jnp.exp(s)
        p = p * pl.reciprocal(jnp.sum(p, axis=-1, keepdims=True), approx=True)
        ph = jnp.dot(p, v, preferred_element_type=jnp.float32) * hm  # (H*Sp, 128)
        attn = ph[0:seq_pad]
        for h in range(1, n_heads):
            attn = attn + ph[h * seq_pad:(h + 1) * seq_pad]          # fold heads back

        x = x + jnp.dot(attn, wo_ref[l], preferred_element_type=jnp.float32) + bo

        # -- MLP with QuickGELU --
        xn2 = layer_norm(x, g2, b2)
        h1 = jnp.dot(xn2, wfc_ref[l], preferred_element_type=jnp.float32) + bfc
        h1 = h1 * jax.nn.sigmoid(1.702 * h1)
        x = x + jnp.dot(h1, wpr_ref[l], preferred_element_type=jnp.float32) + bpr

    # ---- ln_post + projection on the first (aligned) 8 rows; row 0 is CLS ----
    cls = layer_norm(x[0:8], lnpost_ref[0:1], lnpost_ref[1:2])
    o_ref[...] = jnp.dot(cls, proj_ref[...], preferred_element_type=jnp.float32)


def _full_spec(a):
    return pl.BlockSpec(a.shape, lambda b, _n=a.ndim: (0,) * _n)


@jax.jit
def vision_encoder_zs(x_img, kp):
    """Mirror of VisionEncoderZS.forward: (B, 3, H, W) -> (B, EMBED)."""
    B = x_img.shape[0]
    # im2col: conv1 (kernel == stride == PATCH, no bias) == per-patch flatten + matmul
    xr = x_img.reshape(B, CIN, GRID, PATCH, GRID, PATCH)
    xr = xr.transpose(0, 2, 4, 1, 3, 5)                              # (B, gy, gx, C, p, p)
    patches = xr.reshape(B, NPATCH, CPP)
    # row 0 = CLS slot, trailing rows / lanes = zero padding
    patches = jnp.pad(patches, ((0, 0), (1, SEQ_PAD - SEQ), (0, CPP_PAD - CPP)))
    patches_flat = patches.reshape(B * SEQ_PAD, CPP_PAD).astype(jnp.float32)

    const_args = (kp["w_conv"], kp["prefix"], kp["ln_pre"], kp["hm"],
                  kp["wqkv"], kp["bqkv"], kp["wo"], kp["wfc"], kp["wpr"],
                  kp["vec"], kp["ln_post"], kp["proj"])
    kernel = functools.partial(encoder_kernel, n_layers=LAYERS, n_heads=HEADS,
                               seq=SEQ, seq_pad=SEQ_PAD, d_real=WIDTH)
    out = pl.pallas_call(
        kernel,
        out_shape=jax.ShapeDtypeStruct((B * 8, EMBED_PAD), jnp.float32),
        grid=(B,),
        in_specs=[pl.BlockSpec((SEQ_PAD, CPP_PAD), lambda b: (b, 0))]
                 + [_full_spec(a) for a in const_args],
        out_specs=pl.BlockSpec((8, EMBED_PAD), lambda b: (b, 0)),
        compiler_params=pltpu.CompilerParams(dimension_semantics=("parallel",)),
    )(patches_flat, *const_args)
    return out.reshape(B, 8, EMBED_PAD)[:, 0, :EMBED]


# ------------------------- parameters (torch layout) -------------------------
def init_params(key):
    keys = iter(jax.random.split(key, 8 + 12 * LAYERS))

    def nrm(shape, s=0.02):
        return (s * jax.random.normal(next(keys), shape)).astype(jnp.float32)

    p = {
        "conv_w": nrm((WIDTH, CIN, PATCH, PATCH)),       # visual.conv1.weight (bias=False)
        "class_embedding": nrm((WIDTH,)),
        "positional_embedding": nrm((SEQ, WIDTH), 0.01),
        "ln_pre_g": jnp.ones((WIDTH,), jnp.float32),
        "ln_pre_b": jnp.zeros((WIDTH,), jnp.float32),
        "ln_post_g": jnp.ones((WIDTH,), jnp.float32),
        "ln_post_b": jnp.zeros((WIDTH,), jnp.float32),
        "proj": nrm((WIDTH, EMBED)),                     # visual.proj
        "layers": [],
    }
    for _ in range(LAYERS):
        p["layers"].append({
            "in_proj_w": nrm((3 * WIDTH, WIDTH)),        # nn.MultiheadAttention.in_proj_weight
            "in_proj_b": nrm((3 * WIDTH,)),
            "out_w": nrm((WIDTH, WIDTH)),                # out_proj
            "out_b": nrm((WIDTH,)),
            "ln1_g": jnp.ones((WIDTH,), jnp.float32),
            "ln1_b": jnp.zeros((WIDTH,), jnp.float32),
            "ln2_g": jnp.ones((WIDTH,), jnp.float32),
            "ln2_b": jnp.zeros((WIDTH,), jnp.float32),
            "fc_w": nrm((4 * WIDTH, WIDTH)),             # mlp.c_fc
            "fc_b": nrm((4 * WIDTH,)),
            "proj_w": nrm((WIDTH, 4 * WIDTH)),           # mlp.c_proj
            "proj_b": nrm((WIDTH,)),
        })
    return p


def pack_params(p):
    """One-time host-side layout: transpose, lane-pad to 128, fuse QKV, fold scale."""
    D = WIDTH
    scale = 1.0 / math.sqrt(HEAD_DIM)

    def pad2(a, r, c):
        return jnp.pad(a, ((0, r - a.shape[0]), (0, c - a.shape[1]))).astype(jnp.float32)

    def pad1(a, n):
        return jnp.pad(a, (0, n - a.shape[0])).astype(jnp.float32)

    w_conv = pad2(p["conv_w"].reshape(D, CPP).T, CPP_PAD, D_PAD)     # (256, 128)

    # CLS + positional embedding, padded to (SEQ_PAD, 128)
    prefix = jnp.zeros((SEQ_PAD, D_PAD), jnp.float32)
    prefix = prefix.at[0, :D].set(p["class_embedding"] + p["positional_embedding"][0])
    prefix = prefix.at[1:SEQ, :D].set(p["positional_embedding"][1:])

    # head-block mask: row h*SEQ_PAD+m selects head h's HEAD_DIM lanes
    rows = jnp.arange(HEADS * SEQ_PAD)[:, None] // SEQ_PAD
    lanes = jnp.arange(D_PAD)[None, :]
    hm = ((lanes >= rows * HEAD_DIM) & (lanes < (rows + 1) * HEAD_DIM)).astype(jnp.float32)

    wqkv, bqkv, wo, wfc, wpr, vec = ([] for _ in range(6))
    for lp in p["layers"]:
        wq = pad2(lp["in_proj_w"][:D].T * scale, D_PAD, D_PAD)       # fold 1/sqrt(hd) into Q
        wk = pad2(lp["in_proj_w"][D:2 * D].T, D_PAD, D_PAD)
        wv = pad2(lp["in_proj_w"][2 * D:].T, D_PAD, D_PAD)
        wqkv.append(jnp.concatenate([wq, wk, wv], axis=1))           # (128, 384)
        bqkv.append(jnp.concatenate([pad1(lp["in_proj_b"][:D] * scale, D_PAD),
                                     pad1(lp["in_proj_b"][D:2 * D], D_PAD),
                                     pad1(lp["in_proj_b"][2 * D:], D_PAD)])[None, :])
        wo.append(pad2(lp["out_w"].T, D_PAD, D_PAD))
        wfc.append(pad2(lp["fc_w"].T, D_PAD, HID))                   # (128, 128)
        wpr.append(pad2(lp["proj_w"].T, HID, D_PAD))                 # (128, 128)
        vec.append(jnp.stack([pad1(lp["ln1_g"], D_PAD), pad1(lp["ln1_b"], D_PAD),
                              pad1(lp["ln2_g"], D_PAD), pad1(lp["ln2_b"], D_PAD),
                              pad1(lp["out_b"], D_PAD), pad1(lp["fc_b"], HID),
                              pad1(lp["proj_b"], D_PAD),
                              jnp.zeros((D_PAD,), jnp.float32)]))    # (8, 128)
    return {
        "w_conv": w_conv, "prefix": prefix, "hm": hm,
        "ln_pre": jnp.stack([pad1(p["ln_pre_g"], D_PAD), pad1(p["ln_pre_b"], D_PAD)]),
        "ln_post": jnp.stack([pad1(p["ln_post_g"], D_PAD), pad1(p["ln_post_b"], D_PAD)]),
        "wqkv": jnp.stack(wqkv), "bqkv": jnp.stack(bqkv), "wo": jnp.stack(wo),
        "wfc": jnp.stack(wfc), "wpr": jnp.stack(wpr), "vec": jnp.stack(vec),
        "proj": pad2(p["proj"], D_PAD, EMBED_PAD),
    }


# --------------------------- pure-JAX reference ------------------------------
def _layer_norm_ref(v, g, b):
    mu = jnp.mean(v, axis=-1, keepdims=True)
    var = jnp.mean((v - mu) ** 2, axis=-1, keepdims=True)
    return (v - mu) * jax.lax.rsqrt(var + LN_EPS) * g + b


def reference_forward(x_img, p):
    B = x_img.shape[0]
    w = p["conv_w"].reshape(WIDTH, CPP)
    xr = x_img.reshape(B, CIN, GRID, PATCH, GRID, PATCH).transpose(0, 2, 4, 1, 3, 5)
    x = xr.reshape(B, NPATCH, CPP) @ w.T
    cls = jnp.broadcast_to(p["class_embedding"], (B, 1, WIDTH))
    x = jnp.concatenate([cls, x], axis=1) + p["positional_embedding"]
    x = _layer_norm_ref(x, p["ln_pre_g"], p["ln_pre_b"])
    for lp in p["layers"]:
        xn = _layer_norm_ref(x, lp["ln1_g"], lp["ln1_b"])
        qkv = xn @ lp["in_proj_w"].T + lp["in_proj_b"]
        q, k, v = jnp.split(qkv, 3, axis=-1)

        def heads(t):
            return t.reshape(B, SEQ, HEADS, HEAD_DIM).transpose(0, 2, 1, 3)

        qh = heads(q) / math.sqrt(HEAD_DIM)
        kh, vh = heads(k), heads(v)
        a = jax.nn.softmax(qh @ kh.transpose(0, 1, 3, 2), axis=-1)
        o = (a @ vh).transpose(0, 2, 1, 3).reshape(B, SEQ, WIDTH)
        x = x + (o @ lp["out_w"].T + lp["out_b"])
        xn2 = _layer_norm_ref(x, lp["ln2_g"], lp["ln2_b"])
        h = xn2 @ lp["fc_w"].T + lp["fc_b"]
        h = h * jax.nn.sigmoid(1.702 * h)
        x = x + (h @ lp["proj_w"].T + lp["proj_b"])
    c = _layer_norm_ref(x[:, 0, :], p["ln_post_g"], p["ln_post_b"])
    return c @ p["proj"]


if __name__ == "__main__":
    key = jax.random.PRNGKey(0)
    pkey, xkey = jax.random.split(key)
    raw = init_params(pkey)
    packed = pack_params(raw)
    x_img = jax.random.normal(xkey, (BATCH, CIN, IMG, IMG), dtype=jnp.float32)

    out = vision_encoder_zs(x_img, packed)
    jax.block_until_ready(out)

    assert out.shape == (BATCH, EMBED)
    assert bool(jnp.all(jnp.isfinite(out)))
    with jax.default_matmul_precision("float32"):
        ref = reference_forward(x_img, raw)
    err = float(jnp.max(jnp.abs(out - ref)))
    assert err < 5e-3, f"mismatch vs reference: {err}"
    print("KERNEL_OK")
</pallas_src>

<mosaic_0001>
module attributes {stable_mosaic.version = 11 : i64} {
  func.func @encoder_kernel(%arg0: i32, %arg1: memref<24x256xf32, #tpu.memory_space<vmem>>, %arg2: memref<256x128xf32, #tpu.memory_space<vmem>>, %arg3: memref<24x128xf32, #tpu.memory_space<vmem>>, %arg4: memref<2x128xf32, #tpu.memory_space<vmem>>, %arg5: memref<96x128xf32, #tpu.memory_space<vmem>>, %arg6: memref<2x128x384xf32, #tpu.memory_space<vmem>>, %arg7: memref<2x1x384xf32, #tpu.memory_space<vmem>>, %arg8: memref<2x128x128xf32, #tpu.memory_space<vmem>>, %arg9: memref<2x128x128xf32, #tpu.memory_space<vmem>>, %arg10: memref<2x128x128xf32, #tpu.memory_space<vmem>>, %arg11: memref<2x8x128xf32, #tpu.memory_space<vmem>>, %arg12: memref<2x128xf32, #tpu.memory_space<vmem>>, %arg13: memref<128x128xf32, #tpu.memory_space<vmem>>, %arg14: memref<8x128xf32, #tpu.memory_space<vmem>>) attributes {dimension_semantics = [#tpu.dimension_semantics<parallel>], iteration_bounds = array<i64: 2>, scalar_prefetch = 0 : i64, scratch_operands = 0 : i64, tpu.core_type = #tpu.core_type<tc>, window_params = [{transform_indices = @transform_0, window_bounds = array<i64: 24, 256>}, {pipeline_mode = #tpu.pipeline_mode<synchronous>, transform_indices = @transform_1, window_bounds = array<i64: 256, 128>}, {pipeline_mode = #tpu.pipeline_mode<synchronous>, transform_indices = @transform_2, window_bounds = array<i64: 24, 128>}, {pipeline_mode = #tpu.pipeline_mode<synchronous>, transform_indices = @transform_3, window_bounds = array<i64: 2, 128>}, {pipeline_mode = #tpu.pipeline_mode<synchronous>, transform_indices = @transform_4, window_bounds = array<i64: 96, 128>}, {pipeline_mode = #tpu.pipeline_mode<synchronous>, transform_indices = @transform_5, window_bounds = array<i64: 2, 128, 384>}, {pipeline_mode = #tpu.pipeline_mode<synchronous>, transform_indices = @transform_6, window_bounds = array<i64: 2, 1, 384>}, {pipeline_mode = #tpu.pipeline_mode<synchronous>, transform_indices = @transform_7, window_bounds = array<i64: 2, 128, 128>}, {pipeline_mode = #tpu.pipeline_mode<synchronous>, transform_indices = @transform_8, window_bounds = array<i64: 2, 128, 128>}, {pipeline_mode = #tpu.pipeline_mode<synchronous>, transform_indices = @transform_9, window_bounds = array<i64: 2, 128, 128>}, {pipeline_mode = #tpu.pipeline_mode<synchronous>, transform_indices = @transform_10, window_bounds = array<i64: 2, 8, 128>}, {pipeline_mode = #tpu.pipeline_mode<synchronous>, transform_indices = @transform_11, window_bounds = array<i64: 2, 128>}, {pipeline_mode = #tpu.pipeline_mode<synchronous>, transform_indices = @transform_12, window_bounds = array<i64: 128, 128>}, {transform_indices = @transform_13, window_bounds = array<i64: 8, 128>}]} {
    %0 = tpu.iota {dimensions = array<i32: 1>} : vector<1x128xi32>
    %c32_i32 = arith.constant 32 : i32
    %1 = vector.broadcast %c32_i32 : i32 to vector<1x128xi32>
    %2 = arith.cmpi slt, %0, %1 : vector<1x128xi32>
    %3 = arith.extui %2 : vector<1x128xi1> to vector<1x128xi32>
    %4 = arith.sitofp %3 : vector<1x128xi32> to vector<1x128xf32>
    %5 = tpu.iota {dimensions = array<i32: 1>} : vector<1x24xi32>
    %c17_i32 = arith.constant 17 : i32
    %6 = vector.broadcast %c17_i32 : i32 to vector<1x24xi32>
    %7 = arith.cmpi slt, %5, %6 : vector<1x24xi32>
    %cst = arith.constant 0.000000e+00 : f32
    %cst_0 = arith.constant -1.000000e+30 : f32
    %8 = vector.broadcast %cst : f32 to vector<1x24xf32>
    %9 = vector.broadcast %cst_0 : f32 to vector<1x24xf32>
    %10 = arith.select %7, %8, %9 : vector<1x24xi1>, vector<1x24xf32>
    %c0 = arith.constant 0 : index
    %c0_1 = arith.constant 0 : index
    %11 = vector.load %arg1[%c0, %c0_1] : memref<24x256xf32, #tpu.memory_space<vmem>>, vector<24x256xf32>
    %c0_2 = arith.constant 0 : index
    %c0_3 = arith.constant 0 : index
    %12 = vector.load %arg2[%c0_2, %c0_3] : memref<256x128xf32, #tpu.memory_space<vmem>>, vector<256x128xf32>
    %cst_4 = arith.constant dense<0.000000e+00> : vector<24x128xf32>
    %13 = tpu.matmul %11, %12, %cst_4 {dimension_numbers = #tpu.dot_dimension_numbers<[1], [0], [0], [1], [0, 0, 1, 1], [], []>} : vector<24x256xf32>, vector<256x128xf32>, vector<24x128xf32> -> vector<24x128xf32>
    %c0_5 = arith.constant 0 : index
    %c0_6 = arith.constant 0 : index
    %14 = vector.load %arg3[%c0_5, %c0_6] : memref<24x128xf32, #tpu.memory_space<vmem>>, vector<24x128xf32>
    %15 = arith.addf %13, %14 : vector<24x128xf32>
    %c0_7 = arith.constant 0 : index
    %c0_8 = arith.constant 0 : index
    %16 = vector.load %arg4[%c0_7, %c0_8] : memref<2x128xf32, #tpu.memory_space<vmem>>, vector<1x128xf32>
    %c1 = arith.constant 1 : index
    %c0_9 = arith.constant 0 : index
    %17 = vector.load %arg4[%c1, %c0_9] : memref<2x128xf32, #tpu.memory_space<vmem>>, vector<1x128xf32>
    %cst_10 = arith.constant dense<0.000000e+00> : vector<24xf32>
    %18 = vector.multi_reduction <add>, %15, %cst_10 [1] : vector<24x128xf32> to vector<24xf32>
    %19 = vector.shape_cast %18 : vector<24xf32> to vector<24x1xf32>
    %cst_11 = arith.constant 3.125000e-02 : f32
    %20 = vector.broadcast %cst_11 : f32 to vector<24x1xf32>
    %21 = arith.mulf %19, %20 : vector<24x1xf32>
    %22 = vector.broadcast %21 : vector<24x1xf32> to vector<24x128xf32>
    %23 = arith.subf %15, %22 : vector<24x128xf32>
    %24 = vector.broadcast %4 : vector<1x128xf32> to vector<24x128xf32>
    %25 = arith.mulf %23, %24 : vector<24x128xf32>
    %26 = arith.mulf %25, %25 : vector<24x128xf32>
    %cst_12 = arith.constant dense<0.000000e+00> : vector<24xf32>
    %27 = vector.multi_reduction <add>, %26, %cst_12 [1] : vector<24x128xf32> to vector<24xf32>
    %28 = vector.shape_cast %27 : vector<24xf32> to vector<24x1xf32>
    %cst_13 = arith.constant 3.125000e-02 : f32
    %29 = vector.broadcast %cst_13 : f32 to vector<24x1xf32>
    %30 = arith.mulf %28, %29 : vector<24x1xf32>
    %cst_14 = arith.constant 9.99999974E-6 : f32
    %31 = vector.broadcast %cst_14 : f32 to vector<24x1xf32>
    %32 = arith.addf %30, %31 : vector<24x1xf32>
    %33 = math.rsqrt %32 : vector<24x1xf32>
    %34 = vector.broadcast %33 : vector<24x1xf32> to vector<24x128xf32>
    %35 = arith.mulf %25, %34 : vector<24x128xf32>
    %36 = vector.broadcast %16 : vector<1x128xf32> to vector<24x128xf32>
    %37 = arith.mulf %35, %36 : vector<24x128xf32>
    %38 = vector.broadcast %17 : vector<1x128xf32> to vector<24x128xf32>
    %39 = arith.addf %37, %38 : vector<24x128xf32>
    %c0_15 = arith.constant 0 : index
    %c0_16 = arith.constant 0 : index
    %40 = vector.load %arg5[%c0_15, %c0_16] : memref<96x128xf32, #tpu.memory_space<vmem>>, vector<96x128xf32>
    %c0_17 = arith.constant 0 : index
    %c0_18 = arith.constant 0 : index
    %c0_19 = arith.constant 0 : index
    %41 = vector.load %arg11[%c0_17, %c0_18, %c0_19] : memref<2x8x128xf32, #tpu.memory_space<vmem>>, vector<1x8x128xf32>
    %42 = vector.shape_cast %41 : vector<1x8x128xf32> to vector<8x128xf32>
    %43 = vector.extract_strided_slice %42 {offsets = [0, 0], sizes = [1, 128], strides = [1, 1]} : vector<8x128xf32> to vector<1x128xf32>
    %44 = vector.extract_strided_slice %42 {offsets = [1, 0], sizes = [1, 128], strides = [1, 1]} : vector<8x128xf32> to vector<1x128xf32>
    %45 = vector.extract_strided_slice %42 {offsets = [2, 0], sizes = [1, 128], strides = [1, 1]} : vector<8x128xf32> to vector<1x128xf32>
    %46 = vector.extract_strided_slice %42 {offsets = [3, 0], sizes = [1, 128], strides = [1, 1]} : vector<8x128xf32> to vector<1x128xf32>
    %47 = vector.extract_strided_slice %42 {offsets = [4, 0], sizes = [1, 128], strides = [1, 1]} : vector<8x128xf32> to vector<1x128xf32>
    %48 = vector.extract_strided_slice %42 {offsets = [5, 0], sizes = [1, 128], strides = [1, 1]} : vector<8x128xf32> to vector<1x128xf32>
    %49 = vector.extract_strided_slice %42 {offsets = [6, 0], sizes = [1, 128], strides = [1, 1]} : vector<8x128xf32> to vector<1x128xf32>
    %cst_20 = arith.constant dense<0.000000e+00> : vector<24xf32>
    %50 = vector.multi_reduction <add>, %39, %cst_20 [1] : vector<24x128xf32> to vector<24xf32>
    %51 = vector.shape_cast %50 : vector<24xf32> to vector<24x1xf32>
    %cst_21 = arith.constant 3.125000e-02 : f32
    %52 = vector.broadcast %cst_21 : f32 to vector<24x1xf32>
    %53 = arith.mulf %51, %52 : vector<24x1xf32>
    %54 = vector.broadcast %53 : vector<24x1xf32> to vector<24x128xf32>
    %55 = arith.subf %39, %54 : vector<24x128xf32>
    %56 = vector.broadcast %4 : vector<1x128xf32> to vector<24x128xf32>
    %57 = arith.mulf %55, %56 : vector<24x128xf32>
    %58 = arith.mulf %57, %57 : vector<24x128xf32>
    %cst_22 = arith.constant dense<0.000000e+00> : vector<24xf32>
    %59 = vector.multi_reduction <add>, %58, %cst_22 [1] : vector<24x128xf32> to vector<24xf32>
    %60 = vector.shape_cast %59 : vector<24xf32> to vector<24x1xf32>
    %cst_23 = arith.constant 3.125000e-02 : f32
    %61 = vector.broadcast %cst_23 : f32 to vector<24x1xf32>
    %62 = arith.mulf %60, %61 : vector<24x1xf32>
    %cst_24 = arith.constant 9.99999974E-6 : f32
    %63 = vector.broadcast %cst_24 : f32 to vector<24x1xf32>
    %64 = arith.addf %62, %63 : vector<24x1xf32>
    %65 = math.rsqrt %64 : vector<24x1xf32>
    %66 = vector.broadcast %65 : vector<24x1xf32> to vector<24x128xf32>
    %67 = arith.mulf %57, %66 : vector<24x128xf32>
    %68 = vector.broadcast %43 : vector<1x128xf32> to vector<24x128xf32>
    %69 = arith.mulf %67, %68 : vector<24x128xf32>
    %70 = vector.broadcast %44 : vector<1x128xf32> to vector<24x128xf32>
    %71 = arith.addf %69, %70 : vector<24x128xf32>
    %c0_25 = arith.constant 0 : index
    %c0_26 = arith.constant 0 : index
    %c0_27 = arith.constant 0 : index
    %72 = vector.load %arg6[%c0_25, %c0_26, %c0_27] : memref<2x128x384xf32, #tpu.memory_space<vmem>>, vector<1x128x384xf32>
    %73 = vector.shape_cast %72 : vector<1x128x384xf32> to vector<128x384xf32>
    %cst_28 = arith.constant dense<0.000000e+00> : vector<24x384xf32>
    %74 = tpu.matmul %71, %73, %cst_28 {dimension_numbers = #tpu.dot_dimension_numbers<[1], [0], [0], [1], [0, 0, 1, 1], [], []>} : vector<24x128xf32>, vector<128x384xf32>, vector<24x384xf32> -> vector<24x384xf32>
    %c0_29 = arith.constant 0 : index
    %c0_30 = arith.constant 0 : index
    %c0_31 = arith.constant 0 : index
    %75 = vector.load %arg7[%c0_29, %c0_30, %c0_31] : memref<2x1x384xf32, #tpu.memory_space<vmem>>, vector<1x1x384xf32>
    %76 = vector.shape_cast %75 : vector<1x1x384xf32> to vector<1x384xf32>
    %77 = vector.broadcast %76 : vector<1x384xf32> to vector<24x384xf32>
    %78 = arith.addf %74, %77 : vector<24x384xf32>
    %79 = vector.extract_strided_slice %78 {offsets = [0, 0], sizes = [24, 128], strides = [1, 1]} : vector<24x384xf32> to vector<24x128xf32>
    %80 = vector.extract_strided_slice %78 {offsets = [0, 128], sizes = [24, 128], strides = [1, 1]} : vector<24x384xf32> to vector<24x128xf32>
    %81 = vector.extract_strided_slice %78 {offsets = [0, 256], sizes = [24, 128], strides = [1, 1]} : vector<24x384xf32> to vector<24x128xf32>
    %82 = tpu.concatenate %79, %79, %79, %79 in 0 : vector<24x128xf32>, vector<24x128xf32>, vector<24x128xf32>, vector<24x128xf32> -> vector<96x128xf32>
    %83 = arith.mulf %82, %40 : vector<96x128xf32>
    "tpu.trace_start"() <{level = 10 : i32, message = "md,nd->mn"}> : () -> ()
    %cst_32 = arith.constant dense<0.000000e+00> : vector<96x24xf32>
    %84 = tpu.matmul %83, %80, %cst_32 {dimension_numbers = #tpu.dot_dimension_numbers<[1], [1], [0], [0], [0, 0, 1, 0], [], []>} : vector<96x128xf32>, vector<24x128xf32>, vector<96x24xf32> -> vector<96x24xf32>
    "tpu.trace_stop"() : () -> ()
    %85 = vector.broadcast %10 : vector<1x24xf32> to vector<96x24xf32>
    %86 = arith.addf %84, %85 : vector<96x24xf32>
    %cst_33 = arith.constant dense<0xFF800000> : vector<96xf32>
    %87 = vector.multi_reduction <maximumf>, %86, %cst_33 [1] : vector<96x24xf32> to vector<96xf32>
    %88 = vector.shape_cast %87 : vector<96xf32> to vector<96x1xf32>
    %89 = vector.broadcast %88 : vector<96x1xf32> to vector<96x24xf32>
    %90 = arith.subf %86, %89 : vector<96x24xf32>
    %91 = math.exp %90 : vector<96x24xf32>
    %cst_34 = arith.constant dense<0.000000e+00> : vector<96xf32>
    %92 = vector.multi_reduction <add>, %91, %cst_34 [1] : vector<96x24xf32> to vector<96xf32>
    %93 = vector.shape_cast %92 : vector<96xf32> to vector<96x1xf32>
    %94 = tpu.reciprocal %93 {approx = true} : vector<96x1xf32> -> vector<96x1xf32>
    %95 = vector.broadcast %94 : vector<96x1xf32> to vector<96x24xf32>
    %96 = arith.mulf %91, %95 : vector<96x24xf32>
    %cst_35 = arith.constant dense<0.000000e+00> : vector<96x128xf32>
    %97 = tpu.matmul %96, %81, %cst_35 {dimension_numbers = #tpu.dot_dimension_numbers<[1], [0], [0], [1], [0, 0, 1, 1], [], []>} : vector<96x24xf32>, vector<24x128xf32>, vector<96x128xf32> -> vector<96x128xf32>
    %98 = arith.mulf %97, %40 : vector<96x128xf32>
    %99 = vector.extract_strided_slice %98 {offsets = [0, 0], sizes = [24, 128], strides = [1, 1]} : vector<96x128xf32> to vector<24x128xf32>
    %100 = vector.extract_strided_slice %98 {offsets = [24, 0], sizes = [24, 128], strides = [1, 1]} : vector<96x128xf32> to vector<24x128xf32>
    %101 = arith.addf %99, %100 : vector<24x128xf32>
    %102 = vector.extract_strided_slice %98 {offsets = [48, 0], sizes = [24, 128], strides = [1, 1]} : vector<96x128xf32> to vector<24x128xf32>
    %103 = arith.addf %101, %102 : vector<24x128xf32>
    %104 = vector.extract_strided_slice %98 {offsets = [72, 0], sizes = [24, 128], strides = [1, 1]} : vector<96x128xf32> to vector<24x128xf32>
    %105 = arith.addf %103, %104 : vector<24x128xf32>
    %c0_36 = arith.constant 0 : index
    %c0_37 = arith.constant 0 : index
    %c0_38 = arith.constant 0 : index
    %106 = vector.load %arg8[%c0_36, %c0_37, %c0_38] : memref<2x128x128xf32, #tpu.memory_space<vmem>>, vector<1x128x128xf32>
    %107 = vector.shape_cast %106 : vector<1x128x128xf32> to vector<128x128xf32>
    %cst_39 = arith.constant dense<0.000000e+00> : vector<24x128xf32>
    %108 = tpu.matmul %105, %107, %cst_39 {dimension_numbers = #tpu.dot_dimension_numbers<[1], [0], [0], [1], [0, 0, 1, 1], [], []>} : vector<24x128xf32>, vector<128x128xf32>, vector<24x128xf32> -> vector<24x128xf32>
    %109 = arith.addf %39, %108 : vector<24x128xf32>
    %110 = vector.broadcast %47 : vector<1x128xf32> to vector<24x128xf32>
    %111 = arith.addf %109, %110 : vector<24x128xf32>
    %cst_40 = arith.constant dense<0.000000e+00> : vector<24xf32>
    %112 = vector.multi_reduction <add>, %111, %cst_40 [1] : vector<24x128xf32> to vector<24xf32>
    %113 = vector.shape_cast %112 : vector<24xf32> to vector<24x1xf32>
    %cst_41 = arith.constant 3.125000e-02 : f32
    %114 = vector.broadcast %cst_41 : f32 to vector<24x1xf32>
    %115 = arith.mulf %113, %114 : vector<24x1xf32>
    %116 = vector.broadcast %115 : vector<24x1xf32> to vector<24x128xf32>
    %117 = arith.subf %111, %116 : vector<24x128xf32>
    %118 = vector.broadcast %4 : vector<1x128xf32> to vector<24x128xf32>
    %119 = arith.mulf %117, %118 : vector<24x128xf32>
    %120 = arith.mulf %119, %119 : vector<24x128xf32>
    %cst_42 = arith.constant dense<0.000000e+00> : vector<24xf32>
    %121 = vector.multi_reduction <add>, %120, %cst_42 [1] : vector<24x128xf32> to vector<24xf32>
    %122 = vector.shape_cast %121 : vector<24xf32> to vector<24x1xf32>
    %cst_43 = arith.constant 3.125000e-02 : f32
    %123 = vector.broadcast %cst_43 : f32 to vector<24x1xf32>
    %124 = arith.mulf %122, %123 : vector<24x1xf32>
    %cst_44 = arith.constant 9.99999974E-6 : f32
    %125 = vector.broadcast %cst_44 : f32 to vector<24x1xf32>
    %126 = arith.addf %124, %125 : vector<24x1xf32>
    %127 = math.rsqrt %126 : vector<24x1xf32>
    %128 = vector.broadcast %127 : vector<24x1xf32> to vector<24x128xf32>
    %129 = arith.mulf %119, %128 : vector<24x128xf32>
    %130 = vector.broadcast %45 : vector<1x128xf32> to vector<24x128xf32>
    %131 = arith.mulf %129, %130 : vector<24x128xf32>
    %132 = vector.broadcast %46 : vector<1x128xf32> to vector<24x128xf32>
    %133 = arith.addf %131, %132 : vector<24x128xf32>
    %c0_45 = arith.constant 0 : index
    %c0_46 = arith.constant 0 : index
    %c0_47 = arith.constant 0 : index
    %134 = vector.load %arg9[%c0_45, %c0_46, %c0_47] : memref<2x128x128xf32, #tpu.memory_space<vmem>>, vector<1x128x128xf32>
    %135 = vector.shape_cast %134 : vector<1x128x128xf32> to vector<128x128xf32>
    %cst_48 = arith.constant dense<0.000000e+00> : vector<24x128xf32>
    %136 = tpu.matmul %133, %135, %cst_48 {dimension_numbers = #tpu.dot_dimension_numbers<[1], [0], [0], [1], [0, 0, 1, 1], [], []>} : vector<24x128xf32>, vector<128x128xf32>, vector<24x128xf32> -> vector<24x128xf32>
    %137 = vector.broadcast %48 : vector<1x128xf32> to vector<24x128xf32>
    %138 = arith.addf %136, %137 : vector<24x128xf32>
    %cst_49 = arith.constant 1.702000e+00 : f32
    %139 = vector.broadcast %cst_49 : f32 to vector<24x128xf32>
    %140 = arith.mulf %139, %138 : vector<24x128xf32>
    %141 = arith.negf %140 : vector<24x128xf32>
    %142 = math.exp %141 : vector<24x128xf32>
    %cst_50 = arith.constant 1.000000e+00 : f32
    %143 = vector.broadcast %cst_50 : f32 to vector<24x128xf32>
    %144 = arith.addf %143, %142 : vector<24x128xf32>
    %145 = arith.divf %143, %144 : vector<24x128xf32>
    %146 = arith.mulf %138, %145 : vector<24x128xf32>
    %c0_51 = arith.constant 0 : index
    %c0_52 = arith.constant 0 : index
    %c0_53 = arith.constant 0 : index
    %147 = vector.load %arg10[%c0_51, %c0_52, %c0_53] : memref<2x128x128xf32, #tpu.memory_space<vmem>>, vector<1x128x128xf32>
    %148 = vector.shape_cast %147 : vector<1x128x128xf32> to vector<128x128xf32>
    %cst_54 = arith.constant dense<0.000000e+00> : vector<24x128xf32>
    %149 = tpu.matmul %146, %148, %cst_54 {dimension_numbers = #tpu.dot_dimension_numbers<[1], [0], [0], [1], [0, 0, 1, 1], [], []>} : vector<24x128xf32>, vector<128x128xf32>, vector<24x128xf32> -> vector<24x128xf32>
    %150 = arith.addf %111, %149 : vector<24x128xf32>
    %151 = vector.broadcast %49 : vector<1x128xf32> to vector<24x128xf32>
    %152 = arith.addf %150, %151 : vector<24x128xf32>
    %c1_55 = arith.constant 1 : index
    %c0_56 = arith.constant 0 : index
    %c0_57 = arith.constant 0 : index
    %153 = vector.load %arg11[%c1_55, %c0_56, %c0_57] : memref<2x8x128xf32, #tpu.memory_space<vmem>>, vector<1x8x128xf32>
    %154 = vector.shape_cast %153 : vector<1x8x128xf32> to vector<8x128xf32>
    %155 = vector.extract_strided_slice %154 {offsets = [0, 0], sizes = [1, 128], strides = [1, 1]} : vector<8x128xf32> to vector<1x128xf32>
    %156 = vector.extract_strided_slice %154 {offsets = [1, 0], sizes = [1, 128], strides = [1, 1]} : vector<8x128xf32> to vector<1x128xf32>
    %157 = vector.extract_strided_slice %154 {offsets = [2, 0], sizes = [1, 128], strides = [1, 1]} : vector<8x128xf32> to vector<1x128xf32>
    %158 = vector.extract_strided_slice %154 {offsets = [3, 0], sizes = [1, 128], strides = [1, 1]} : vector<8x128xf32> to vector<1x128xf32>
    %159 = vector.extract_strided_slice %154 {offsets = [4, 0], sizes = [1, 128], strides = [1, 1]} : vector<8x128xf32> to vector<1x128xf32>
    %160 = vector.extract_strided_slice %154 {offsets = [5, 0], sizes = [1, 128], strides = [1, 1]} : vector<8x128xf32> to vector<1x128xf32>
    %161 = vector.extract_strided_slice %154 {offsets = [6, 0], sizes = [1, 128], strides = [1, 1]} : vector<8x128xf32> to vector<1x128xf32>
    %cst_58 = arith.constant dense<0.000000e+00> : vector<24xf32>
    %162 = vector.multi_reduction <add>, %152, %cst_58 [1] : vector<24x128xf32> to vector<24xf32>
    %163 = vector.shape_cast %162 : vector<24xf32> to vector<24x1xf32>
    %cst_59 = arith.constant 3.125000e-02 : f32
    %164 = vector.broadcast %cst_59 : f32 to vector<24x1xf32>
    %165 = arith.mulf %163, %164 : vector<24x1xf32>
    %166 = vector.broadcast %165 : vector<24x1xf32> to vector<24x128xf32>
    %167 = arith.subf %152, %166 : vector<24x128xf32>
    %168 = vector.broadcast %4 : vector<1x128xf32> to vector<24x128xf32>
    %169 = arith.mulf %167, %168 : vector<24x128xf32>
    %170 = arith.mulf %169, %169 : vector<24x128xf32>
    %cst_60 = arith.constant dense<0.000000e+00> : vector<24xf32>
    %171 = vector.multi_reduction <add>, %170, %cst_60 [1] : vector<24x128xf32> to vector<24xf32>
    %172 = vector.shape_cast %171 : vector<24xf32> to vector<24x1xf32>
    %cst_61 = arith.constant 3.125000e-02 : f32
    %173 = vector.broadcast %cst_61 : f32 to vector<24x1xf32>
    %174 = arith.mulf %172, %173 : vector<24x1xf32>
    %cst_62 = arith.constant 9.99999974E-6 : f32
    %175 = vector.broadcast %cst_62 : f32 to vector<24x1xf32>
    %176 = arith.addf %174, %175 : vector<24x1xf32>
    %177 = math.rsqrt %176 : vector<24x1xf32>
    %178 = vector.broadcast %177 : vector<24x1xf32> to vector<24x128xf32>
    %179 = arith.mulf %169, %178 : vector<24x128xf32>
    %180 = vector.broadcast %155 : vector<1x128xf32> to vector<24x128xf32>
    %181 = arith.mulf %179, %180 : vector<24x128xf32>
    %182 = vector.broadcast %156 : vector<1x128xf32> to vector<24x128xf32>
    %183 = arith.addf %181, %182 : vector<24x128xf32>
    %c1_63 = arith.constant 1 : index
    %c0_64 = arith.constant 0 : index
    %c0_65 = arith.constant 0 : index
    %184 = vector.load %arg6[%c1_63, %c0_64, %c0_65] : memref<2x128x384xf32, #tpu.memory_space<vmem>>, vector<1x128x384xf32>
    %185 = vector.shape_cast %184 : vector<1x128x384xf32> to vector<128x384xf32>
    %cst_66 = arith.constant dense<0.000000e+00> : vector<24x384xf32>
    %186 = tpu.matmul %183, %185, %cst_66 {dimension_numbers = #tpu.dot_dimension_numbers<[1], [0], [0], [1], [0, 0, 1, 1], [], []>} : vector<24x128xf32>, vector<128x384xf32>, vector<24x384xf32> -> vector<24x384xf32>
    %c1_67 = arith.constant 1 : index
    %c0_68 = arith.constant 0 : index
    %c0_69 = arith.constant 0 : index
    %187 = vector.load %arg7[%c1_67, %c0_68, %c0_69] : memref<2x1x384xf32, #tpu.memory_space<vmem>>, vector<1x1x384xf32>
    %188 = vector.shape_cast %187 : vector<1x1x384xf32> to vector<1x384xf32>
    %189 = vector.broadcast %188 : vector<1x384xf32> to vector<24x384xf32>
    %190 = arith.addf %186, %189 : vector<24x384xf32>
    %191 = vector.extract_strided_slice %190 {offsets = [0, 0], sizes = [24, 128], strides = [1, 1]} : vector<24x384xf32> to vector<24x128xf32>
    %192 = vector.extract_strided_slice %190 {offsets = [0, 128], sizes = [24, 128], strides = [1, 1]} : vector<24x384xf32> to vector<24x128xf32>
    %193 = vector.extract_strided_slice %190 {offsets = [0, 256], sizes = [24, 128], strides = [1, 1]} : vector<24x384xf32> to vector<24x128xf32>
    %194 = tpu.concatenate %191, %191, %191, %191 in 0 : vector<24x128xf32>, vector<24x128xf32>, vector<24x128xf32>, vector<24x128xf32> -> vector<96x128xf32>
    %195 = arith.mulf %194, %40 : vector<96x128xf32>
    "tpu.trace_start"() <{level = 10 : i32, message = "md,nd->mn"}> : () -> ()
    %cst_70 = arith.constant dense<0.000000e+00> : vector<96x24xf32>
    %196 = tpu.matmul %195, %192, %cst_70 {dimension_numbers = #tpu.dot_dimension_numbers<[1], [1], [0], [0], [0, 0, 1, 0], [], []>} : vector<96x128xf32>, vector<24x128xf32>, vector<96x24xf32> -> vector<96x24xf32>
    "tpu.trace_stop"() : () -> ()
    %197 = vector.broadcast %10 : vector<1x24xf32> to vector<96x24xf32>
    %198 = arith.addf %196, %197 : vector<96x24xf32>
    %cst_71 = arith.constant dense<0xFF800000> : vector<96xf32>
    %199 = vector.multi_reduction <maximumf>, %198, %cst_71 [1] : vector<96x24xf32> to vector<96xf32>
    %200 = vector.shape_cast %199 : vector<96xf32> to vector<96x1xf32>
    %201 = vector.broadcast %200 : vector<96x1xf32> to vector<96x24xf32>
    %202 = arith.subf %198, %201 : vector<96x24xf32>
    %203 = math.exp %202 : vector<96x24xf32>
    %cst_72 = arith.constant dense<0.000000e+00> : vector<96xf32>
    %204 = vector.multi_reduction <add>, %203, %cst_72 [1] : vector<96x24xf32> to vector<96xf32>
    %205 = vector.shape_cast %204 : vector<96xf32> to vector<96x1xf32>
    %206 = tpu.reciprocal %205 {approx = true} : vector<96x1xf32> -> vector<96x1xf32>
    %207 = vector.broadcast %206 : vector<96x1xf32> to vector<96x24xf32>
    %208 = arith.mulf %203, %207 : vector<96x24xf32>
    %cst_73 = arith.constant dense<0.000000e+00> : vector<96x128xf32>
    %209 = tpu.matmul %208, %193, %cst_73 {dimension_numbers = #tpu.dot_dimension_numbers<[1], [0], [0], [1], [0, 0, 1, 1], [], []>} : vector<96x24xf32>, vector<24x128xf32>, vector<96x128xf32> -> vector<96x128xf32>
    %210 = arith.mulf %209, %40 : vector<96x128xf32>
    %211 = vector.extract_strided_slice %210 {offsets = [0, 0], sizes = [24, 128], strides = [1, 1]} : vector<96x128xf32> to vector<24x128xf32>
    %212 = vector.extract_strided_slice %210 {offsets = [24, 0], sizes = [24, 128], strides = [1, 1]} : vector<96x128xf32> to vector<24x128xf32>
    %213 = arith.addf %211, %212 : vector<24x128xf32>
    %214 = vector.extract_strided_slice %210 {offsets = [48, 0], sizes = [24, 128], strides = [1, 1]} : vector<96x128xf32> to vector<24x128xf32>
    %215 = arith.addf %213, %214 : vector<24x128xf32>
    %216 = vector.extract_strided_slice %210 {offsets = [72, 0], sizes = [24, 128], strides = [1, 1]} : vector<96x128xf32> to vector<24x128xf32>
    %217 = arith.addf %215, %216 : vector<24x128xf32>
    %c1_74 = arith.constant 1 : index
    %c0_75 = arith.constant 0 : index
    %c0_76 = arith.constant 0 : index
    %218 = vector.load %arg8[%c1_74, %c0_75, %c0_76] : memref<2x128x128xf32, #tpu.memory_space<vmem>>, vector<1x128x128xf32>
    %219 = vector.shape_cast %218 : vector<1x128x128xf32> to vector<128x128xf32>
    %cst_77 = arith.constant dense<0.000000e+00> : vector<24x128xf32>
    %220 = tpu.matmul %217, %219, %cst_77 {dimension_numbers = #tpu.dot_dimension_numbers<[1], [0], [0], [1], [0, 0, 1, 1], [], []>} : vector<24x128xf32>, vector<128x128xf32>, vector<24x128xf32> -> vector<24x128xf32>
    %221 = arith.addf %152, %220 : vector<24x128xf32>
    %222 = vector.broadcast %159 : vector<1x128xf32> to vector<24x128xf32>
    %223 = arith.addf %221, %222 : vector<24x128xf32>
    %cst_78 = arith.constant dense<0.000000e+00> : vector<24xf32>
    %224 = vector.multi_reduction <add>, %223, %cst_78 [1] : vector<24x128xf32> to vector<24xf32>
    %225 = vector.shape_cast %224 : vector<24xf32> to vector<24x1xf32>
    %cst_79 = arith.constant 3.125000e-02 : f32
    %226 = vector.broadcast %cst_79 : f32 to vector<24x1xf32>
    %227 = arith.mulf %225, %226 : vector<24x1xf32>
    %228 = vector.broadcast %227 : vector<24x1xf32> to vector<24x128xf32>
    %229 = arith.subf %223, %228 : vector<24x128xf32>
    %230 = vector.broadcast %4 : vector<1x128xf32> to vector<24x128xf32>
    %231 = arith.mulf %229, %230 : vector<24x128xf32>
    %232 = arith.mulf %231, %231 : vector<24x128xf32>
    %cst_80 = arith.constant dense<0.000000e+00> : vector<24xf32>
    %233 = vector.multi_reduction <add>, %232, %cst_80 [1] : vector<24x128xf32> to vector<24xf32>
    %234 = vector.shape_cast %233 : vector<24xf32> to vector<24x1xf32>
    %cst_81 = arith.constant 3.125000e-02 : f32
    %235 = vector.broadcast %cst_81 : f32 to vector<24x1xf32>
    %236 = arith.mulf %234, %235 : vector<24x1xf32>
    %cst_82 = arith.constant 9.99999974E-6 : f32
    %237 = vector.broadcast %cst_82 : f32 to vector<24x1xf32>
    %238 = arith.addf %236, %237 : vector<24x1xf32>
    %239 = math.rsqrt %238 : vector<24x1xf32>
    %240 = vector.broadcast %239 : vector<24x1xf32> to vector<24x128xf32>
    %241 = arith.mulf %231, %240 : vector<24x128xf32>
    %242 = vector.broadcast %157 : vector<1x128xf32> to vector<24x128xf32>
    %243 = arith.mulf %241, %242 : vector<24x128xf32>
    %244 = vector.broadcast %158 : vector<1x128xf32> to vector<24x128xf32>
    %245 = arith.addf %243, %244 : vector<24x128xf32>
    %c1_83 = arith.constant 1 : index
    %c0_84 = arith.constant 0 : index
    %c0_85 = arith.constant 0 : index
    %246 = vector.load %arg9[%c1_83, %c0_84, %c0_85] : memref<2x128x128xf32, #tpu.memory_space<vmem>>, vector<1x128x128xf32>
    %247 = vector.shape_cast %246 : vector<1x128x128xf32> to vector<128x128xf32>
    %cst_86 = arith.constant dense<0.000000e+00> : vector<24x128xf32>
    %248 = tpu.matmul %245, %247, %cst_86 {dimension_numbers = #tpu.dot_dimension_numbers<[1], [0], [0], [1], [0, 0, 1, 1], [], []>} : vector<24x128xf32>, vector<128x128xf32>, vector<24x128xf32> -> vector<24x128xf32>
    %249 = vector.broadcast %160 : vector<1x128xf32> to vector<24x128xf32>
    %250 = arith.addf %248, %249 : vector<24x128xf32>
    %cst_87 = arith.constant 1.702000e+00 : f32
    %251 = vector.broadcast %cst_87 : f32 to vector<24x128xf32>
    %252 = arith.mulf %251, %250 : vector<24x128xf32>
    %253 = arith.negf %252 : vector<24x128xf32>
    %254 = math.exp %253 : vector<24x128xf32>
    %cst_88 = arith.constant 1.000000e+00 : f32
    %255 = vector.broadcast %cst_88 : f32 to vector<24x128xf32>
    %256 = arith.addf %255, %254 : vector<24x128xf32>
    %257 = arith.divf %255, %256 : vector<24x128xf32>
    %258 = arith.mulf %250, %257 : vector<24x128xf32>
    %c1_89 = arith.constant 1 : index
    %c0_90 = arith.constant 0 : index
    %c0_91 = arith.constant 0 : index
    %259 = vector.load %arg10[%c1_89, %c0_90, %c0_91] : memref<2x128x128xf32, #tpu.memory_space<vmem>>, vector<1x128x128xf32>
    %260 = vector.shape_cast %259 : vector<1x128x128xf32> to vector<128x128xf32>
    %cst_92 = arith.constant dense<0.000000e+00> : vector<24x128xf32>
    %261 = tpu.matmul %258, %260, %cst_92 {dimension_numbers = #tpu.dot_dimension_numbers<[1], [0], [0], [1], [0, 0, 1, 1], [], []>} : vector<24x128xf32>, vector<128x128xf32>, vector<24x128xf32> -> vector<24x128xf32>
    %262 = arith.addf %223, %261 : vector<24x128xf32>
    %263 = vector.broadcast %161 : vector<1x128xf32> to vector<24x128xf32>
    %264 = arith.addf %262, %263 : vector<24x128xf32>
    %265 = vector.extract_strided_slice %264 {offsets = [0, 0], sizes = [8, 128], strides = [1, 1]} : vector<24x128xf32> to vector<8x128xf32>
    %c0_93 = arith.constant 0 : index
    %c0_94 = arith.constant 0 : index
    %266 = vector.load %arg12[%c0_93, %c0_94] : memref<2x128xf32, #tpu.memory_space<vmem>>, vector<1x128xf32>
    %c1_95 = arith.constant 1 : index
    %c0_96 = arith.constant 0 : index
    %267 = vector.load %arg12[%c1_95, %c0_96] : memref<2x128xf32, #tpu.memory_space<vmem>>, vector<1x128xf32>
    %cst_97 = arith.constant dense<0.000000e+00> : vector<8xf32>
    %268 = vector.multi_reduction <add>, %265, %cst_97 [1] : vector<8x128xf32> to vector<8xf32>
    %269 = vector.shape_cast %268 : vector<8xf32> to vector<8x1xf32>
    %cst_98 = arith.constant 3.125000e-02 : f32
    %270 = vector.broadcast %cst_98 : f32 to vector<8x1xf32>
    %271 = arith.mulf %269, %270 : vector<8x1xf32>
    %272 = vector.broadcast %271 : vector<8x1xf32> to vector<8x128xf32>
    %273 = arith.subf %265, %272 : vector<8x128xf32>
    %274 = vector.broadcast %4 : vector<1x128xf32> to vector<8x128xf32>
    %275 = arith.mulf %273, %274 : vector<8x128xf32>
    %276 = arith.mulf %275, %275 : vector<8x128xf32>
    %cst_99 = arith.constant dense<0.000000e+00> : vector<8xf32>
    %277 = vector.multi_reduction <add>, %276, %cst_99 [1] : vector<8x128xf32> to vector<8xf32>
    %278 = vector.shape_cast %277 : vector<8xf32> to vector<8x1xf32>
    %cst_100 = arith.constant 3.125000e-02 : f32
    %279 = vector.broadcast %cst_100 : f32 to vector<8x1xf32>
    %280 = arith.mulf %278, %279 : vector<8x1xf32>
    %cst_101 = arith.constant 9.99999974E-6 : f32
    %281 = vector.broadcast %cst_101 : f32 to vector<8x1xf32>
    %282 = arith.addf %280, %281 : vector<8x1xf32>
    %283 = math.rsqrt %282 : vector<8x1xf32>
    %284 = vector.broadcast %283 : vector<8x1xf32> to vector<8x128xf32>
    %285 = arith.mulf %275, %284 : vector<8x128xf32>
    %286 = vector.broadcast %266 : vector<1x128xf32> to vector<8x128xf32>
    %287 = arith.mulf %285, %286 : vector<8x128xf32>
    %288 = vector.broadcast %267 : vector<1x128xf32> to vector<8x128xf32>
    %289 = arith.addf %287, %288 : vector<8x128xf32>
    %c0_102 = arith.constant 0 : index
    %c0_103 = arith.constant 0 : index
    %290 = vector.load %arg13[%c0_102, %c0_103] : memref<128x128xf32, #tpu.memory_space<vmem>>, vector<128x128xf32>
    %cst_104 = arith.constant dense<0.000000e+00> : vector<8x128xf32>
    %291 = tpu.matmul %289, %290, %cst_104 {dimension_numbers = #tpu.dot_dimension_numbers<[1], [0], [0], [1], [0, 0, 1, 1], [], []>} : vector<8x128xf32>, vector<128x128xf32>, vector<8x128xf32> -> vector<8x128xf32>
    %c0_105 = arith.constant 0 : index
    %c0_106 = arith.constant 0 : index
    %292 = vector.load %arg14[%c0_105, %c0_106] : memref<8x128xf32, #tpu.memory_space<vmem>>, vector<8x128xf32>
    tpu.vector_store %arg14[%c0_105, %c0_106], %291 {strides = array<i32>} : memref<8x128xf32, #tpu.memory_space<vmem>>, vector<8x128xf32>,
    return
  }
  func.func @transform_0(%arg0: i32) -> (i32, i32) {
    %c0_i32 = arith.constant 0 : i32
    %c0_i32_0 = arith.constant 0 : i32
    return %arg0, %c0_i32 : i32, i32
  }
  func.func @transform_1(%arg0: i32) -> (i32, i32) {
    %c0_i32 = arith.constant 0 : i32
    %c0_i32_0 = arith.constant 0 : i32
    %c0_i32_1 = arith.constant 0 : i32
    return %c0_i32, %c0_i32_0 : i32, i32
  }
  func.func @transform_2(%arg0: i32) -> (i32, i32) {
    %c0_i32 = arith.constant 0 : i32
    %c0_i32_0 = arith.constant 0 : i32
    %c0_i32_1 = arith.constant 0 : i32
    return %c0_i32, %c0_i32_0 : i32, i32
  }
  func.func @transform_3(%arg0: i32) -> (i32, i32) {
    %c0_i32 = arith.constant 0 : i32
    %c0_i32_0 = arith.constant 0 : i32
    %c0_i32_1 = arith.constant 0 : i32
    return %c0_i32, %c0_i32_0 : i32, i32
  }
  func.func @transform_4(%arg0: i32) -> (i32, i32) {
    %c0_i32 = arith.constant 0 : i32
    %c0_i32_0 = arith.constant 0 : i32
    %c0_i32_1 = arith.constant 0 : i32
    return %c0_i32, %c0_i32_0 : i32, i32
  }
  func.func @transform_5(%arg0: i32) -> (i32, i32, i32) {
    %c0_i32 = arith.constant 0 : i32
    %c0_i32_0 = arith.constant 0 : i32
    %c0_i32_1 = arith.constant 0 : i32
    %c0_i32_2 = arith.constant 0 : i32
    return %c0_i32, %c0_i32_0, %c0_i32_1 : i32, i32, i32
  }
  func.func @transform_6(%arg0: i32) -> (i32, i32, i32) {
    %c0_i32 = arith.constant 0 : i32
    %c0_i32_0 = arith.constant 0 : i32
    %c0_i32_1 = arith.constant 0 : i32
    %c0_i32_2 = arith.constant 0 : i32
    return %c0_i32, %c0_i32_0, %c0_i32_1 : i32, i32, i32
  }
  func.func @transform_7(%arg0: i32) -> (i32, i32, i32) {
    %c0_i32 = arith.constant 0 : i32
    %c0_i32_0 = arith.constant 0 : i32
    %c0_i32_1 = arith.constant 0 : i32
    %c0_i32_2 = arith.constant 0 : i32
    return %c0_i32, %c0_i32_0, %c0_i32_1 : i32, i32, i32
  }
  func.func @transform_8(%arg0: i32) -> (i32, i32, i32) {
    %c0_i32 = arith.constant 0 : i32
    %c0_i32_0 = arith.constant 0 : i32
    %c0_i32_1 = arith.constant 0 : i32
    %c0_i32_2 = arith.constant 0 : i32
    return %c0_i32, %c0_i32_0, %c0_i32_1 : i32, i32, i32
  }
  func.func @transform_9(%arg0: i32) -> (i32, i32, i32) {
    %c0_i32 = arith.constant 0 : i32
    %c0_i32_0 = arith.constant 0 : i32
    %c0_i32_1 = arith.constant 0 : i32
    %c0_i32_2 = arith.constant 0 : i32
    return %c0_i32, %c0_i32_0, %c0_i32_1 : i32, i32, i32
  }
  func.func @transform_10(%arg0: i32) -> (i32, i32, i32) {
    %c0_i32 = arith.constant 0 : i32
    %c0_i32_0 = arith.constant 0 : i32
    %c0_i32_1 = arith.constant 0 : i32
    %c0_i32_2 = arith.constant 0 : i32
    return %c0_i32, %c0_i32_0, %c0_i32_1 : i32, i32, i32
  }
  func.func @transform_11(%arg0: i32) -> (i32, i32) {
    %c0_i32 = arith.constant 0 : i32
    %c0_i32_0 = arith.constant 0 : i32
    %c0_i32_1 = arith.constant 0 : i32
    return %c0_i32, %c0_i32_0 : i32, i32
  }
  func.func @transform_12(%arg0: i32) -> (i32, i32) {
    %c0_i32 = arith.constant 0 : i32
    %c0_i32_0 = arith.constant 0 : i32
    %c0_i32_1 = arith.constant 0 : i32
    return %c0_i32, %c0_i32_0 : i32, i32
  }
  func.func @transform_13(%arg0: i32) -> (i32, i32) {
    %c0_i32 = arith.constant 0 : i32
    %c0_i32_0 = arith.constant 0 : i32
    return %arg0, %c0_i32 : i32, i32
  }
}

</mosaic_0001>

<llo_original>
// kernel: vision_encoder_zs.1
$region0: #{vision_encoder_zs.1}
  #allocation0 [shape = 'u32[]', space=smem, size = 0x4, offset = 0x4, fixed_abs, tag = 'smem constant byte address 0x4 - core index']
  #allocation1 [shape = 'u32[144,128]{1,0:T(1,128)}', space=vmem, size = 0x12000, scoped, tag = 'internal scratch']
  %s0 = inlined_call_operand.vmem [shape: f32[48,256], index: 0, kind: input, shape index: {}]
  %s1 = inlined_call_operand.vmem [shape: f32[256,128], index: 1, kind: input, shape index: {}]
  %s2 = inlined_call_operand.vmem [shape: f32[24,128], index: 2, kind: input, shape index: {}]
  %s3 = inlined_call_operand.vmem [shape: f32[2,128], index: 3, kind: input, shape index: {}]
  %s4 = inlined_call_operand.vmem [shape: f32[96,128], index: 4, kind: input, shape index: {}]
  %s5 = inlined_call_operand.vmem [shape: f32[2,128,384], index: 5, kind: input, shape index: {}]
  %s6 = inlined_call_operand.vmem [shape: f32[2,1,384], index: 6, kind: input, shape index: {}]
  %s7 = inlined_call_operand.vmem [shape: f32[2,128,128], index: 7, kind: input, shape index: {}]
  %s8 = inlined_call_operand.vmem [shape: f32[2,128,128], index: 8, kind: input, shape index: {}]
  %s9 = inlined_call_operand.vmem [shape: f32[2,128,128], index: 9, kind: input, shape index: {}]
  %s10 = inlined_call_operand.vmem [shape: f32[2,8,128], index: 10, kind: input, shape index: {}]
  %s11 = inlined_call_operand.vmem [shape: f32[2,128], index: 11, kind: input, shape index: {}]
  %s12 = inlined_call_operand.vmem [shape: f32[128,128], index: 12, kind: input, shape index: {}]
  %s13 = inlined_call_operand.vmem [shape: f32[16,128], index: 13, kind: output, shape index: {}]
  %s14 = sld [smem:[#allocation0]]
  $region85: #{vision_encoder_zs.1} parent=0
    _
  %s16 = ssub.s32 1, %s14
  %s17 = scalar_select 0, %s16, %s14
  loop: start=0, step=1, limit=4
  $region2: #{vision_encoder_zs.1} parent=0 // loop_pre_header
    _
  $region3: #{vision_encoder_zs.1} parent=0 // loop_header
    %s19 = sphi 0, %s23
    %p20 = scmp.ge.s32.totalorder %s19, 4
    %s29 = sphi 0, %s31
    %s32 = sphi 0, %s29
    %s33 = sphi 0, %s32
    %s49 = sphi 0, %s33
    %s53 = sphi 0, %s53
    %s55 = sphi 0, %s53
    %s56 = sphi 0, %s55
    %s70 = sphi 0, %s56
    %s74 = sphi 0, %s74
    %s76 = sphi 0, %s74
    %s77 = sphi 0, %s76
    %s91 = sphi 0, %s77
    %s95 = sphi 0, %s95
    %s97 = sphi 0, %s95
    %s98 = sphi 0, %s97
    %s112 = sphi 0, %s98
    %s116 = sphi 0, %s116
    %s118 = sphi 0, %s116
    %s119 = sphi 0, %s118
    %s133 = sphi 0, %s119
    %s137 = sphi 0, %s137
    %s139 = sphi 0, %s137
    %s140 = sphi 0, %s139
    %s154 = sphi 0, %s140
    %s158 = sphi 0, %s158
    %s160 = sphi 0, %s158
    %s161 = sphi 0, %s160
    %s175 = sphi 0, %s161
    %s179 = sphi 0, %s179
    %s181 = sphi 0, %s179
    %s182 = sphi 0, %s181
    %s196 = sphi 0, %s182
    %s200 = sphi 0, %s200
    %s202 = sphi 0, %s200
    %s203 = sphi 0, %s202
    %s217 = sphi 0, %s203
    %s221 = sphi 0, %s221
    %s223 = sphi 0, %s221
    %s224 = sphi 0, %s223
    %s238 = sphi 0, %s224
    %s242 = sphi 0, %s242
    %s244 = sphi 0, %s242
    %s245 = sphi 0, %s244
    %s259 = sphi 0, %s245
    %s263 = sphi 0, %s263
    %s265 = sphi 0, %s263
    %s266 = sphi 0, %s265
    %s280 = sphi 0, %s266
    %s284 = sphi 0, %s284
    %s286 = sphi 0, %s284
    %s287 = sphi 0, %s286
    %s301 = sphi 0, %s287
    %s307 = sphi 0, %s309
    %s310 = sphi 0, %s307
    %s311 = sphi 0, %s310
    %s327 = sphi 0, %s311
  $region4: #{vision_encoder_zs.1} parent=0 // loop_header_branch
    %22 = sbr.rel (%p20) target = $region8
  $region5: #{vision_encoder_zs.1} parent=0 // loop_body
    %s24 = ssub.s32 %s19, 1
    %s25 = ssub.s32 %s19, 2
    %s26 = sadd.s32 %s19, 1
    %s27 = ssub.s32 %s19, %s26
    %p28 = scmp.eq.s32.totalorder %s27, 0
    %s30 = sadd.s32 %s29, 1
    %s31 = scalar_select %p28, %s29, %s30
    %p34 = pneg %p28
    %p35 = scmp.eq.s32.totalorder %s19, 1
    %p36 = por %p34, %p35
    %p37 = scmp.ne.s32.totalorder %s29, %s32
    %p38 = scmp.eq.s32.totalorder %s19, 0
    %p39 = por %p37, %p38
    %p40 = scmp.ne.s32.totalorder %s29, %s32
    %p41 = scmp.eq.s32.totalorder %s24, 1
    %p42 = por %p40, %p41
    %p43 = scmp.ne.s32.totalorder %s32, %s33
    %p44 = scmp.eq.s32.totalorder %s24, 0
    %p45 = por %p43, %p44
    %p46 = scmp.ne.s32.totalorder %s32, %s33
    %p47 = scmp.eq.s32.totalorder %s25, 1
    %p48 = por %p46, %p47
    %p50 = scmp.ne.s32.totalorder %s33, %s49
    %p51 = scmp.eq.s32.totalorder %s25, 0
    %p52 = por %p50, %p51
    %s54 = sadd.s32 %s53, 1
    %p57 = scmp.eq.s32.totalorder %s19, 1
    %p58 = scmp.ne.s32.totalorder %s53, %s55
    %p59 = scmp.eq.s32.totalorder %s19, 0
    %p60 = por %p58, %p59
    %p61 = scmp.ne.s32.totalorder %s53, %s55
    %p62 = scmp.eq.s32.totalorder %s24, 1
    %p63 = por %p61, %p62
    %p64 = scmp.ne.s32.totalorder %s55, %s56
    %p65 = scmp.eq.s32.totalorder %s24, 0
    %p66 = por %p64, %p65
    %p67 = scmp.ne.s32.totalorder %s55, %s56
    %p68 = scmp.eq.s32.totalorder %s25, 1
    %p69 = por %p67, %p68
    %p71 = scmp.ne.s32.totalorder %s56, %s70
    %p72 = scmp.eq.s32.totalorder %s25, 0
    %p73 = por %p71, %p72
    %s75 = sadd.s32 %s74, 1
    %p78 = scmp.eq.s32.totalorder %s19, 1
    %p79 = scmp.ne.s32.totalorder %s74, %s76
    %p80 = scmp.eq.s32.totalorder %s19, 0
    %p81 = por %p79, %p80
    %p82 = scmp.ne.s32.totalorder %s74, %s76
    %p83 = scmp.eq.s32.totalorder %s24, 1
    %p84 = por %p82, %p83
    %p85 = scmp.ne.s32.totalorder %s76, %s77
    %p86 = scmp.eq.s32.totalorder %s24, 0
    %p87 = por %p85, %p86
    %p88 = scmp.ne.s32.totalorder %s76, %s77
    %p89 = scmp.eq.s32.totalorder %s25, 1
    %p90 = por %p88, %p89
    %p92 = scmp.ne.s32.totalorder %s77, %s91
    %p93 = scmp.eq.s32.totalorder %s25, 0
    %p94 = por %p92, %p93
    %s96 = sadd.s32 %s95, 1
    %p99 = scmp.eq.s32.totalorder %s19, 1
    %p100 = scmp.ne.s32.totalorder %s95, %s97
    %p101 = scmp.eq.s32.totalorder %s19, 0
    %p102 = por %p100, %p101
    %p103 = scmp.ne.s32.totalorder %s95, %s97
    %p104 = scmp.eq.s32.totalorder %s24, 1
    %p105 = por %p103, %p104
    %p106 = scmp.ne.s32.totalorder %s97, %s98
    %p107 = scmp.eq.s32.totalorder %s24, 0
    %p108 = por %p106, %p107
    %p109 = scmp.ne.s32.totalorder %s97, %s98
    %p110 = scmp.eq.s32.totalorder %s25, 1
    %p111 = por %p109, %p110
    %p113 = scmp.ne.s32.totalorder %s98, %s112
    %p114 = scmp.eq.s32.totalorder %s25, 0
    %p115 = por %p113, %p114
    %s117 = sadd.s32 %s116, 1
    %p120 = scmp.eq.s32.totalorder %s19, 1
    %p121 = scmp.ne.s32.totalorder %s116, %s118
    %p122 = scmp.eq.s32.totalorder %s19, 0
    %p123 = por %p121, %p122
    %p124 = scmp.ne.s32.totalorder %s116, %s118
    %p125 = scmp.eq.s32.totalorder %s24, 1
    %p126 = por %p124, %p125
    %p127 = scmp.ne.s32.totalorder %s118, %s119
    %p128 = scmp.eq.s32.totalorder %s24, 0
    %p129 = por %p127, %p128
    %p130 = scmp.ne.s32.totalorder %s118, %s119
    %p131 = scmp.eq.s32.totalorder %s25, 1
    %p132 = por %p130, %p131
    %p134 = scmp.ne.s32.totalorder %s119, %s133
    %p135 = scmp.eq.s32.totalorder %s25, 0
    %p136 = por %p134, %p135
    %s138 = sadd.s32 %s137, 1
    %p141 = scmp.eq.s32.totalorder %s19, 1
    %p142 = scmp.ne.s32.totalorder %s137, %s139
    %p143 = scmp.eq.s32.totalorder %s19, 0
    %p144 = por %p142, %p143
    %p145 = scmp.ne.s32.totalorder %s137, %s139
    %p146 = scmp.eq.s32.totalorder %s24, 1
    %p147 = por %p145, %p146
    %p148 = scmp.ne.s32.totalorder %s139, %s140
    %p149 = scmp.eq.s32.totalorder %s24, 0
    %p150 = por %p148, %p149
    %p151 = scmp.ne.s32.totalorder %s139, %s140
    %p152 = scmp.eq.s32.totalorder %s25, 1
    %p153 = por %p151, %p152
    %p155 = scmp.ne.s32.totalorder %s140, %s154
    %p156 = scmp.eq.s32.totalorder %s25, 0
    %p157 = por %p155, %p156
    %s159 = sadd.s32 %s158, 1
    %p162 = scmp.eq.s32.totalorder %s19, 1
    %p163 = scmp.ne.s32.totalorder %s158, %s160
    %p164 = scmp.eq.s32.totalorder %s19, 0
    %p165 = por %p163, %p164
    %p166 = scmp.ne.s32.totalorder %s158, %s160
    %p167 = scmp.eq.s32.totalorder %s24, 1
    %p168 = por %p166, %p167
    %p169 = scmp.ne.s32.totalorder %s160, %s161
    %p170 = scmp.eq.s32.totalorder %s24, 0
    %p171 = por %p169, %p170
    %p172 = scmp.ne.s32.totalorder %s160, %s161
    %p173 = scmp.eq.s32.totalorder %s25, 1
    %p174 = por %p172, %p173
    %p176 = scmp.ne.s32.totalorder %s161, %s175
    %p177 = scmp.eq.s32.totalorder %s25, 0
    %p178 = por %p176, %p177
    %s180 = sadd.s32 %s179, 1
    %p183 = scmp.eq.s32.totalorder %s19, 1
    %p184 = scmp.ne.s32.totalorder %s179, %s181
    %p185 = scmp.eq.s32.totalorder %s19, 0
    %p186 = por %p184, %p185
    %p187 = scmp.ne.s32.totalorder %s179, %s181
    %p188 = scmp.eq.s32.totalorder %s24, 1
    %p189 = por %p187, %p188
    %p190 = scmp.ne.s32.totalorder %s181, %s182
    %p191 = scmp.eq.s32.totalorder %s24, 0
    %p192 = por %p190, %p191
    %p193 = scmp.ne.s32.totalorder %s181, %s182
    %p194 = scmp.eq.s32.totalorder %s25, 1
    %p195 = por %p193, %p194
    %p197 = scmp.ne.s32.totalorder %s182, %s196
    %p198 = scmp.eq.s32.totalorder %s25, 0
    %p199 = por %p197, %p198
    %s201 = sadd.s32 %s200, 1
    %p204 = scmp.eq.s32.totalorder %s19, 1
    %p205 = scmp.ne.s32.totalorder %s200, %s202
    %p206 = scmp.eq.s32.totalorder %s19, 0
    %p207 = por %p205, %p206
    %p208 = scmp.ne.s32.totalorder %s200, %s202
    %p209 = scmp.eq.s32.totalorder %s24, 1
    %p210 = por %p208, %p209
    %p211 = scmp.ne.s32.totalorder %s202, %s203
    %p212 = scmp.eq.s32.totalorder %s24, 0
    %p213 = por %p211, %p212
    %p214 = scmp.ne.s32.totalorder %s202, %s203
    %p215 = scmp.eq.s32.totalorder %s25, 1
    %p216 = por %p214, %p215
    %p218 = scmp.ne.s32.totalorder %s203, %s217
    %p219 = scmp.eq.s32.totalorder %s25, 0
    %p220 = por %p218, %p219
    %s222 = sadd.s32 %s221, 1
    %p225 = scmp.eq.s32.totalorder %s19, 1
    %p226 = scmp.ne.s32.totalorder %s221, %s223
    %p227 = scmp.eq.s32.totalorder %s19, 0
    %p228 = por %p226, %p227
    %p229 = scmp.ne.s32.totalorder %s221, %s223
    %p230 = scmp.eq.s32.totalorder %s24, 1
    %p231 = por %p229, %p230
    %p232 = scmp.ne.s32.totalorder %s223, %s224
    %p233 = scmp.eq.s32.totalorder %s24, 0
    %p234 = por %p232, %p233
    %p235 = scmp.ne.s32.totalorder %s223, %s224
    %p236 = scmp.eq.s32.totalorder %s25, 1
    %p237 = por %p235, %p236
    %p239 = scmp.ne.s32.totalorder %s224, %s238
    %p240 = scmp.eq.s32.totalorder %s25, 0
    %p241 = por %p239, %p240
    %s243 = sadd.s32 %s242, 1
    %p246 = scmp.eq.s32.totalorder %s19, 1
    %p247 = scmp.ne.s32.totalorder %s242, %s244
    %p248 = scmp.eq.s32.totalorder %s19, 0
    %p249 = por %p247, %p248
    %p250 = scmp.ne.s32.totalorder %s242, %s244
    %p251 = scmp.eq.s32.totalorder %s24, 1
    %p252 = por %p250, %p251
    %p253 = scmp.ne.s32.totalorder %s244, %s245
    %p254 = scmp.eq.s32.totalorder %s24, 0
    %p255 = por %p253, %p254
    %p256 = scmp.ne.s32.totalorder %s244, %s245
    %p257 = scmp.eq.s32.totalorder %s25, 1
    %p258 = por %p256, %p257
    %p260 = scmp.ne.s32.totalorder %s245, %s259
    %p261 = scmp.eq.s32.totalorder %s25, 0
    %p262 = por %p260, %p261
    %s264 = sadd.s32 %s263, 1
    %p267 = scmp.eq.s32.totalorder %s19, 1
    %p268 = scmp.ne.s32.totalorder %s263, %s265
    %p269 = scmp.eq.s32.totalorder %s19, 0
    %p270 = por %p268, %p269
    %p271 = scmp.ne.s32.totalorder %s263, %s265
    %p272 = scmp.eq.s32.totalorder %s24, 1
    %p273 = por %p271, %p272
    %p274 = scmp.ne.s32.totalorder %s265, %s266
    %p275 = scmp.eq.s32.totalorder %s24, 0
    %p276 = por %p274, %p275
    %p277 = scmp.ne.s32.totalorder %s265, %s266
    %p278 = scmp.eq.s32.totalorder %s25, 1
    %p279 = por %p277, %p278
    %p281 = scmp.ne.s32.totalorder %s266, %s280
    %p282 = scmp.eq.s32.totalorder %s25, 0
    %p283 = por %p281, %p282
    %s285 = sadd.s32 %s284, 1
    %p288 = scmp.eq.s32.totalorder %s19, 1
    %p289 = scmp.ne.s32.totalorder %s284, %s286
    %p290 = scmp.eq.s32.totalorder %s19, 0
    %p291 = por %p289, %p290
    %p292 = scmp.ne.s32.totalorder %s284, %s286
    %p293 = scmp.eq.s32.totalorder %s24, 1
    %p294 = por %p292, %p293
    %p295 = scmp.ne.s32.totalorder %s286, %s287
    %p296 = scmp.eq.s32.totalorder %s24, 0
    %p297 = por %p295, %p296
    %p298 = scmp.ne.s32.totalorder %s286, %s287
    %p299 = scmp.eq.s32.totalorder %s25, 1
    %p300 = por %p298, %p299
    %p302 = scmp.ne.s32.totalorder %s287, %s301
    %p303 = scmp.eq.s32.totalorder %s25, 0
    %p304 = por %p302, %p303
    %s305 = ssub.s32 %s19, %s26
    %p306 = scmp.eq.s32.totalorder %s305, 0
    %s308 = sadd.s32 %s307, 1
    %s309 = scalar_select %p306, %s307, %s308
    %p312 = pneg %p306
    %p313 = scmp.eq.s32.totalorder %s19, 1
    %p314 = por %p312, %p313
    %p315 = scmp.ne.s32.totalorder %s307, %s310
    %p316 = scmp.eq.s32.totalorder %s19, 0
    %p317 = por %p315, %p316
    %p318 = scmp.ne.s32.totalorder %s307, %s310
    %p319 = scmp.eq.s32.totalorder %s24, 1
    %p320 = por %p318, %p319
    %p321 = scmp.ne.s32.totalorder %s310, %s311
    %p322 = scmp.eq.s32.totalorder %s24, 0
    %p323 = por %p321, %p322
    %p324 = scmp.ne.s32.totalorder %s310, %s311
    %p325 = scmp.eq.s32.totalorder %s25, 1
    %p326 = por %p324, %p325
    %p328 = scmp.ne.s32.totalorder %s311, %s327
    %p329 = scmp.eq.s32.totalorder %s25, 0
    %p330 = por %p328, %p329
    %p331 = scmp.le.s32.totalorder 1, %s19
    %p332 = scmp.lt.s32.totalorder %s19, 3
    %p333 = pnand %p331, %p332
    %p334 = pneg %p333
    // Predicated region
    $region9: #{vision_encoder_zs.1} parent=5 // pred_check
      _
    $region10: #{vision_encoder_zs.1} parent=5 // pred_check_branch
      %336 = sbr.rel (%p333) target = $region12
    $region11: #{vision_encoder_zs.1} parent=5 // pred_region
      %s337 = ssub.s32 %s19, 1
      // Predicated region
      $region13: #{vision_encoder_zs.1} parent=11 // pred_check
        %p338 = pneg %p66
      $region14: #{vision_encoder_zs.1} parent=11 // pred_check_branch
        %340 = sbr.rel (%p338) target = $region16
      $region15: #{vision_encoder_zs.1} parent=11 // pred_region
        _
      $region16: #{vision_encoder_zs.1} parent=11 // pred_fallthru
        _
      // Predicated region
      $region17: #{vision_encoder_zs.1} parent=11 // pred_check
        %p341 = pneg %p87
      $region18: #{vision_encoder_zs.1} parent=11 // pred_check_branch
        %343 = sbr.rel (%p341) target = $region20
      $region19: #{vision_encoder_zs.1} parent=11 // pred_region
        _
      $region20: #{vision_encoder_zs.1} parent=11 // pred_fallthru
        _
      // Predicated region
      $region21: #{vision_encoder_zs.1} parent=11 // pred_check
        %p344 = pneg %p108
      $region22: #{vision_encoder_zs.1} parent=11 // pred_check_branch
        %346 = sbr.rel (%p344) target = $region24
      $region23: #{vision_encoder_zs.1} parent=11 // pred_region
        _
      $region24: #{vision_encoder_zs.1} parent=11 // pred_fallthru
        _
      // Predicated region
      $region25: #{vision_encoder_zs.1} parent=11 // pred_check
        %p347 = pneg %p129
      $region26: #{vision_encoder_zs.1} parent=11 // pred_check_branch
        %349 = sbr.rel (%p347) target = $region28
      $region27: #{vision_encoder_zs.1} parent=11 // pred_region
        _
      $region28: #{vision_encoder_zs.1} parent=11 // pred_fallthru
        _
      // Predicated region
      $region29: #{vision_encoder_zs.1} parent=11 // pred_check
        %p350 = pneg %p150
      $region30: #{vision_encoder_zs.1} parent=11 // pred_check_branch
        %352 = sbr.rel (%p350) target = $region32
      $region31: #{vision_encoder_zs.1} parent=11 // pred_region
        _
      $region32: #{vision_encoder_zs.1} parent=11 // pred_fallthru
        _
      // Predicated region
      $region33: #{vision_encoder_zs.1} parent=11 // pred_check
        %p353 = pneg %p171
      $region34: #{vision_encoder_zs.1} parent=11 // pred_check_branch
        %355 = sbr.rel (%p353) target = $region36
      $region35: #{vision_encoder_zs.1} parent=11 // pred_region
        _
      $region36: #{vision_encoder_zs.1} parent=11 // pred_fallthru
        _
      // Predicated region
      $region37: #{vision_encoder_zs.1} parent=11 // pred_check
        %p356 = pneg %p192
      $region38: #{vision_encoder_zs.1} parent=11 // pred_check_branch
        %358 = sbr.rel (%p356) target = $region40
      $region39: #{vision_encoder_zs.1} parent=11 // pred_region
        _
      $region40: #{vision_encoder_zs.1} parent=11 // pred_fallthru
        _
      // Predicated region
      $region41: #{vision_encoder_zs.1} parent=11 // pred_check
        %p359 = pneg %p213
      $region42: #{vision_encoder_zs.1} parent=11 // pred_check_branch
        %361 = sbr.rel (%p359) target = $region44
      $region43: #{vision_encoder_zs.1} parent=11 // pred_region
        _
      $region44: #{vision_encoder_zs.1} parent=11 // pred_fallthru
        _
      // Predicated region
      $region45: #{vision_encoder_zs.1} parent=11 // pred_check
        %p362 = pneg %p234
      $region46: #{vision_encoder_zs.1} parent=11 // pred_check_branch
        %364 = sbr.rel (%p362) target = $region48
      $region47: #{vision_encoder_zs.1} parent=11 // pred_region
        _
      $region48: #{vision_encoder_zs.1} parent=11 // pred_fallthru
        _
      // Predicated region
      $region49: #{vision_encoder_zs.1} parent=11 // pred_check
        %p365 = pneg %p255
      $region50: #{vision_encoder_zs.1} parent=11 // pred_check_branch
        %367 = sbr.rel (%p365) target = $region52
      $region51: #{vision_encoder_zs.1} parent=11 // pred_region
        _
      $region52: #{vision_encoder_zs.1} parent=11 // pred_fallthru
        _
      // Predicated region
      $region53: #{vision_encoder_zs.1} parent=11 // pred_check
        %p368 = pneg %p276
      $region54: #{vision_encoder_zs.1} parent=11 // pred_check_branch
        %370 = sbr.rel (%p368) target = $region56
      $region55: #{vision_encoder_zs.1} parent=11 // pred_region
        _
      $region56: #{vision_encoder_zs.1} parent=11 // pred_fallthru
        _
      // Predicated region
      $region57: #{vision_encoder_zs.1} parent=11 // pred_check
        %p371 = pneg %p297
      $region58: #{vision_encoder_zs.1} parent=11 // pred_check_branch
        %373 = sbr.rel (%p371) target = $region60
      $region59: #{vision_encoder_zs.1} parent=11 // pred_region
        _
      $region60: #{vision_encoder_zs.1} parent=11 // pred_fallthru
        _
    $region12: #{vision_encoder_zs.1} parent=5 // pred_fallthru
      _
    %p374 = scmp.lt.s32.totalorder %s19, 2
    // Predicated region
    $region61: #{vision_encoder_zs.1} parent=5 // pred_check
      %p375 = pneg %p374
    $region62: #{vision_encoder_zs.1} parent=5 // pred_check_branch
      %377 = sbr.rel (%p375) target = $region64
    $region63: #{vision_encoder_zs.1} parent=5 // pred_region
      // Predicated region
      $region65: #{vision_encoder_zs.1} parent=63 // pred_check
        %p378 = pneg %p39
      $region66: #{vision_encoder_zs.1} parent=63 // pred_check_branch
        %380 = sbr.rel (%p378) target = $region68
      $region67: #{vision_encoder_zs.1} parent=63 // pred_region
        %s381 = smul.u32 3, %s19
        %p382 = scmp.lt.s32.totalorder %s381, 5
        %s383 = scalar_select %p382, %s381, 5
        %s384 = smul.addr %s383, 2
        %s385 = smul.addr %s384, 8
        %s386 = scalar_lea.vmem %s0, %s385
        %s387 = smul.u32 3, %s19
      $region68: #{vision_encoder_zs.1} parent=63 // pred_fallthru
        _
    $region64: #{vision_encoder_zs.1} parent=5 // pred_fallthru
      _
    %p388 = scmp.le.s32.totalorder 1, %s19
    %p389 = scmp.lt.s32.totalorder %s19, 3
    %p390 = pnand %p388, %p389
    %p391 = pneg %p390
    // Predicated region
    $region69: #{vision_encoder_zs.1} parent=5 // pred_check
      _
    $region70: #{vision_encoder_zs.1} parent=5 // pred_check_branch
      %393 = sbr.rel (%p390) target = $region72
    $region71: #{vision_encoder_zs.1} parent=5 // pred_region
      %s394 = ssub.s32 %s19, 1
      %s395 = smul.u32 3, %s24
      %p396 = scmp.lt.s32.totalorder %s395, 5
      %s397 = scalar_select %p396, %s395, 5
      %s398 = smul.addr %s397, 2
      %s399 = smul.addr %s398, 8
      %s400 = scalar_lea.vmem %s0, %s399
      %p401 = pneg %p45
      %p402 = pneg %p42
      %p403 = pneg %p66
      %p404 = pneg %p63
      %p405 = pneg %p87
      %p406 = pneg %p84
      %p407 = pneg %p108
      %p408 = pneg %p105
      %p409 = pneg %p129
      %p410 = pneg %p126
      %p411 = pneg %p150
      %p412 = pneg %p147
      %p413 = pneg %p171
      %p414 = pneg %p168
      %p415 = pneg %p192
      %p416 = pneg %p189
      %p417 = pneg %p213
      %p418 = pneg %p210
      %p419 = pneg %p234
      %p420 = pneg %p231
      %p421 = pneg %p255
      %p422 = pneg %p252
      %p423 = pneg %p276
      %p424 = pneg %p273
      %p425 = pneg %p297
      %p426 = pneg %p294
      %p427 = pneg %p323
      %p428 = pneg %p320
      %p429 = scmp.lt.s32.totalorder %s24, 1
      %s430 = scalar_select %p429, %s24, 1
      %s431 = smul.addr %s430, 8
      %s432 = scalar_lea.vmem %s13, %s431
      %s433 = smul.u32 3, %s24
      %p434 = scmp.lt.s32.totalorder %s433, 5
      %s435 = scalar_select %p434, %s433, 5
      %s436 = smul.addr %s435, 2
      %s437 = smul.addr %s436, 8
      %s438 = scalar_lea.vmem %s0, %s437
      %s439 = smul.u32 3, %s24
      %p440 = scmp.lt.s32.totalorder %s24, 1
      %s441 = scalar_select %p440, %s24, 1
      %s442 = smul.addr %s441, 8
      %s443 = scalar_lea.vmem %s13, %s442
      %v444 = vlaneseq
      %v445 = vand.u32 %v444, 127
      %vm446 = vcmp.lt.s32.totalorder %v445, 32
      %v447 = vsel %vm446, 1, 0
      %v448 = vcvt.s32.f32 %v447
      %vm449 = vcmp.lt.s32.totalorder %v445, 17
      %v450 = vsel %vm449, 0.0, -1e+30
      %v451 = vld [vmem:[%s438] sm:$0xff]
      %v452 = vld [vmem:[%s438 + $0x8] sm:$0xff]
      %v453 = vld [vmem:[%s438 + $0x10] sm:$0xff]
      %v454 = vld [vmem:[%s438 + $0x18] sm:$0xff]
      %v455 = vld [vmem:[%s438 + $0x20] sm:$0xff]
      %v456 = vld [vmem:[%s438 + $0x28] sm:$0xff]
      %v457 = vld [vmem:[%s1] sm:$0xff]
      %v458 = vld [vmem:[%s1 + $0x8] sm:$0xff]
      %v459 = vld [vmem:[%s1 + $0x10] sm:$0xff]
      %v460 = vld [vmem:[%s1 + $0x18] sm:$0xff]
      %v461 = vld [vmem:[%s1 + $0x20] sm:$0xff]
      %v462 = vld [vmem:[%s1 + $0x28] sm:$0xff]
      %v463 = vld [vmem:[%s1 + $0x30] sm:$0xff]
      %v464 = vld [vmem:[%s1 + $0x38] sm:$0xff]
      %v465 = vld [vmem:[%s1 + $0x40] sm:$0xff]
      %v466 = vld [vmem:[%s1 + $0x48] sm:$0xff]
      %v467 = vld [vmem:[%s1 + $0x50] sm:$0xff]
      %v468 = vld [vmem:[%s1 + $0x58] sm:$0xff]
      %v469 = vld [vmem:[%s1 + $0x60] sm:$0xff]
      %v470 = vld [vmem:[%s1 + $0x68] sm:$0xff]
      %v471 = vld [vmem:[%s1 + $0x70] sm:$0xff]
      %v472 = vld [vmem:[%s1 + $0x78] sm:$0xff]
      %v473 = vld [vmem:[%s1 + $0x80] sm:$0xff]
      %v474 = vld [vmem:[%s1 + $0x88] sm:$0xff]
      %v475 = vld [vmem:[%s1 + $0x90] sm:$0xff]
      %v476 = vld [vmem:[%s1 + $0x98] sm:$0xff]
      %v477 = vld [vmem:[%s1 + $0xa0] sm:$0xff]
      %v478 = vld [vmem:[%s1 + $0xa8] sm:$0xff]
      %v479 = vld [vmem:[%s1 + $0xb0] sm:$0xff]
      %v480 = vld [vmem:[%s1 + $0xb8] sm:$0xff]
      %v481 = vld [vmem:[%s1 + $0xc0] sm:$0xff]
      %v482 = vld [vmem:[%s1 + $0xc8] sm:$0xff]
      %v483 = vld [vmem:[%s1 + $0xd0] sm:$0xff]
      %v484 = vld [vmem:[%s1 + $0xd8] sm:$0xff]
      %v485 = vld [vmem:[%s1 + $0xe0] sm:$0xff]
      %v486 = vld [vmem:[%s1 + $0xe8] sm:$0xff]
      %v487 = vld [vmem:[%s1 + $0xf0] sm:$0xff]
      %v488 = vld [vmem:[%s1 + $0xf8] sm:$0xff]
      %v489 = vld [vmem:[%s2] sm:$0xff]
      %v490 = vld [vmem:[%s2 + $0x8] sm:$0xff]
      %v491 = vld [vmem:[%s2 + $0x10] sm:$0xff]
      %492 = vmatprep.subr.mxu0 0.0
      %493 = vmatpush1.msra.mxu0 %v472
      %494 = vmatprep.subr.mxu0 0.0
      %495 = vmatpush1.msra.mxu0 %v471
      %496 = vmatprep.subr.mxu0 0.0
      %497 = vmatpush1.msra.mxu0 %v470
      %498 = vmatprep.subr.mxu0 0.0
      %499 = vmatpush1.msra.mxu0 %v469
      %500 = vmatprep.subr.mxu0 0.0
      %501 = vmatpush1.msra.mxu0 %v468
      %502 = vmatprep.subr.mxu0 0.0
      %503 = vmatpush1.msra.mxu0 %v467
      %504 = vmatprep.subr.mxu0 0.0
      %505 = vmatpush1.msra.mxu0 %v466
      %506 = vmatprep.subr.mxu0 0.0
      %507 = vmatpush1.msra.mxu0 %v465
      %508 = vmatprep.subr.mxu0 0.0
      %509 = vmatpush1.msra.mxu0 %v464
      %510 = vmatprep.subr.mxu0 0.0
      %511 = vmatpush1.msra.mxu0 %v463
      %512 = vmatprep.subr.mxu0 0.0
      %513 = vmatpush1.msra.mxu0 %v462
      %514 = vmatprep.subr.mxu0 0.0
      %515 = vmatpush1.msra.mxu0 %v461
      %516 = vmatprep.subr.mxu0 0.0
      %517 = vmatpush1.msra.mxu0 %v460
      %518 = vmatprep.subr.mxu0 0.0
      %519 = vmatpush1.msra.mxu0 %v459
      %520 = vmatprep.subr.mxu0 0.0
      %521 = vmatpush1.msra.mxu0 %v458
      %522 = vmatprep.subr.mxu0 0.0
      %523 = vmatpush1.msra.mxu0 %v457
      %524 = vmatprep.subr.mxu0 0.0
      %525 = vmatpush2.msra.mxu0 %v488
      %526 = vmatprep.subr.mxu0 0.0
      %527 = vmatpush2.msra.mxu0 %v487
      %528 = vmatprep.subr.mxu0 0.0
      %529 = vmatpush2.msra.mxu0 %v486
      %530 = vmatprep.subr.mxu0 0.0
      %531 = vmatpush2.msra.mxu0 %v485
      %532 = vmatprep.subr.mxu0 0.0
      %533 = vmatpush2.msra.mxu0 %v484
      %534 = vmatprep.subr.mxu0 0.0
      %535 = vmatpush2.msra.mxu0 %v483
      %536 = vmatprep.subr.mxu0 0.0
      %537 = vmatpush2.msra.mxu0 %v482
      %538 = vmatprep.subr.mxu0 0.0
      %539 = vmatpush2.msra.mxu0 %v481
      %540 = vmatprep.subr.mxu0 0.0
      %541 = vmatpush2.msra.mxu0 %v480
      %542 = vmatprep.subr.mxu0 0.0
      %543 = vmatpush2.msra.mxu0 %v479
      %544 = vmatprep.subr.mxu0 0.0
      %545 = vmatpush2.msra.mxu0 %v478
      %546 = vmatprep.subr.mxu0 0.0
      %547 = vmatpush2.msra.mxu0 %v477
      %548 = vmatprep.subr.mxu0 0.0
      %549 = vmatpush2.msra.mxu0 %v476
      %550 = vmatprep.subr.mxu0 0.0
      %551 = vmatpush2.msra.mxu0 %v475
      %552 = vmatprep.subr.mxu0 0.0
      %553 = vmatpush2.msra.mxu0 %v474
      %554 = vmatprep.subr.mxu0 0.0
      %555 = vmatpush2.msra.mxu0 %v473
      %556 = vmatprep.mubr.f32.mxu0 %v452
      %557 = vmatmul.mubr.f32.gmra.mxu0 %v451
      %v558 = vpop.f32.mrf.mxu0
      %v559 = vadd.f32 %v489, %v558
      %v560 = vpop.f32.mrf.mxu0
      %561 = vmatprep.mubr.f32.mxu0 %v454
      %562 = vmatmul.mubr.f32.gmra.mxu0 %v453
      %v563 = vpop.f32.mrf.mxu0
      %v564 = vadd.f32 %v490, %v563
      %v565 = vpop.f32.mrf.mxu0
      %566 = vmatprep.mubr.f32.mxu0 %v456
      %567 = vmatmul.mubr.f32.gmra.mxu0 %v455
      %v568 = vpop.f32.mrf.mxu0
      %v569 = vadd.f32 %v491, %v568
      %v570 = vpop.f32.mrf.mxu0
      %571 = vdwg.mxu0
      %v572 = vld [vmem:[%s3] sm:$0x1]
      %v573 = vld [vmem:[%s3 + $0x1] sm:$0x1]
      %574 = vadd.xlane.f32.xlu0 %v559
      %v575 = vpop.xlane.xlu0 %574
      %576 = vadd.xlane.f32.xlu0 %v564
      %v577 = vpop.xlane.xlu0 %576
      %578 = vadd.xlane.f32.xlu0 %v569
      %v579 = vpop.xlane.xlu0 %578
      %v580 = vmul.f32 %v575, 0.03125
      %v581 = vmul.f32 %v577, 0.03125
      %v582 = vmul.f32 %v579, 0.03125
      %v583 = vsub.f32 %v559, %v580
      %v584 = vsub.f32 %v564, %v581
      %v585 = vsub.f32 %v569, %v582
      %v586 = vmul.f32 %v583, %v448
      %v587 = vmul.f32 %v584, %v448
      %v588 = vmul.f32 %v585, %v448
      %v589 = vmul.f32 %v586, %v586
      %v590 = vmul.f32 %v587, %v587
      %v591 = vmul.f32 %v588, %v588
      %592 = vadd.xlane.f32.xlu0 %v589
      %v593 = vpop.xlane.xlu0 %592
      %594 = vadd.xlane.f32.xlu0 %v590
      %v595 = vpop.xlane.xlu0 %594
      %596 = vadd.xlane.f32.xlu0 %v591
      %v597 = vpop.xlane.xlu0 %596
      %v598 = vmul.f32 %v593, 0.03125
      %v599 = vmul.f32 %v595, 0.03125
      %v600 = vmul.f32 %v597, 0.03125
      %v601 = vadd.f32 %v598, 1e-05
      %v602 = vadd.f32 %v599, 1e-05
      %v603 = vadd.f32 %v600, 1e-05
      %v604 = vrsqrt.pop %v601
      %v605 = vrsqrt.pop %v602
      %v606 = vrsqrt.pop %v603
      %v607 = vmul.f32 %v586, %v604
      %v608 = vmul.f32 %v587, %v605
      %v609 = vmul.f32 %v588, %v606
      %v610 = vlaneseq
      %v611 = vshrl.u32 %v610, 7
      %v612 = vsub.s32 0, %v611
      %v613 = vrot.slane %v572, %v612
      %v614 = vmul.f32 %v607, %v613
      %v615 = vmul.f32 %v608, %v613
      %v616 = vmul.f32 %v609, %v613
      %v617 = vlaneseq
      %v618 = vshrl.u32 %v617, 7
      %v619 = vsub.s32 0, %v618
      %v620 = vrot.slane %v573, %v619
      %v621 = vadd.f32 %v614, %v620
      %v622 = vadd.f32 %v615, %v620
      %v623 = vadd.f32 %v616, %v620
      %v624 = vld [vmem:[%s4] sm:$0xff]
      %v625 = vld [vmem:[%s4 + $0x8] sm:$0xff]
      %v626 = vld [vmem:[%s4 + $0x10] sm:$0xff]
      %v627 = vld [vmem:[%s4 + $0x18] sm:$0xff]
      %v628 = vld [vmem:[%s4 + $0x20] sm:$0xff]
      %v629 = vld [vmem:[%s4 + $0x28] sm:$0xff]
      %v630 = vld [vmem:[%s4 + $0x30] sm:$0xff]
      %v631 = vld [vmem:[%s4 + $0x38] sm:$0xff]
      %v632 = vld [vmem:[%s4 + $0x40] sm:$0xff]
      %v633 = vld [vmem:[%s4 + $0x48] sm:$0xff]
      %v634 = vld [vmem:[%s4 + $0x50] sm:$0xff]
      %v635 = vld [vmem:[%s4 + $0x58] sm:$0xff]
      %v636 = vld [vmem:[%s10] sm:$0xff]
      %637 = vadd.xlane.f32.xlu0 %v621
      %v638 = vpop.xlane.xlu0 %637
      %639 = vadd.xlane.f32.xlu0 %v622
      %v640 = vpop.xlane.xlu0 %639
      %641 = vadd.xlane.f32.xlu0 %v623
      %v642 = vpop.xlane.xlu0 %641
      %v643 = vmul.f32 %v638, 0.03125
      %v644 = vmul.f32 %v640, 0.03125
      %v645 = vmul.f32 %v642, 0.03125
      %v646 = vsub.f32 %v621, %v643
      %v647 = vsub.f32 %v622, %v644
      %v648 = vsub.f32 %v623, %v645
      %v649 = vmul.f32 %v646, %v448
      %v650 = vmul.f32 %v647, %v448
      %v651 = vmul.f32 %v648, %v448
      %v652 = vmul.f32 %v649, %v649
      %v653 = vmul.f32 %v650, %v650
      %v654 = vmul.f32 %v651, %v651
      %655 = vadd.xlane.f32.xlu0 %v652
      %v656 = vpop.xlane.xlu0 %655
      %657 = vadd.xlane.f32.xlu0 %v653
      %v658 = vpop.xlane.xlu0 %657
      %659 = vadd.xlane.f32.xlu0 %v654
      %v660 = vpop.xlane.xlu0 %659
      %v661 = vmul.f32 %v656, 0.03125
      %v662 = vmul.f32 %v658, 0.03125
      %v663 = vmul.f32 %v660, 0.03125
      %v664 = vadd.f32 %v661, 1e-05
      %v665 = vadd.f32 %v662, 1e-05
      %v666 = vadd.f32 %v663, 1e-05
      %v667 = vrsqrt.pop %v664
      %v668 = vrsqrt.pop %v665
      %v669 = vrsqrt.pop %v666
      %v670 = vmul.f32 %v649, %v667
      %v671 = vmul.f32 %v650, %v668
      %v672 = vmul.f32 %v651, %v669
      %v673 = vlaneseq
      %v674 = vshrl.u32 %v673, 7
      %v675 = vsub.s32 0, %v674
      %v676 = vrot.slane %v636, %v675
      %v677 = vmul.f32 %v670, %v676
      %v678 = vmul.f32 %v671, %v676
      %v679 = vmul.f32 %v672, %v676
      %v680 = vlaneseq
      %v681 = vshrl.u32 %v680, 7
      %v682 = vsub.s32 1, %v681
      %v683 = vrot.slane %v636, %v682
      %v684 = vadd.f32 %v677, %v683
      %v685 = vadd.f32 %v678, %v683
      %v686 = vadd.f32 %v679, %v683
      %v687 = vld [vmem:[%s5] sm:$0xff]
      %v688 = vld [vmem:[%s5 + $0x8] sm:$0xff]
      %v689 = vld [vmem:[%s5 + $0x10] sm:$0xff]
      %v690 = vld [vmem:[%s5 + $0x18] sm:$0xff]
      %v691 = vld [vmem:[%s5 + $0x20] sm:$0xff]
      %v692 = vld [vmem:[%s5 + $0x28] sm:$0xff]
      %v693 = vld [vmem:[%s5 + $0x30] sm:$0xff]
      %v694 = vld [vmem:[%s5 + $0x38] sm:$0xff]
      %v695 = vld [vmem:[%s5 + $0x40] sm:$0xff]
      %v696 = vld [vmem:[%s5 + $0x48] sm:$0xff]
      %v697 = vld [vmem:[%s5 + $0x50] sm:$0xff]
      %v698 = vld [vmem:[%s5 + $0x58] sm:$0xff]
      %v699 = vld [vmem:[%s5 + $0x60] sm:$0xff]
      %v700 = vld [vmem:[%s5 + $0x68] sm:$0xff]
      %v701 = vld [vmem:[%s5 + $0x70] sm:$0xff]
      %v702 = vld [vmem:[%s5 + $0x78] sm:$0xff]
      %v703 = vld [vmem:[%s5 + $0x80] sm:$0xff]
      %v704 = vld [vmem:[%s5 + $0x88] sm:$0xff]
      %v705 = vld [vmem:[%s5 + $0x90] sm:$0xff]
      %v706 = vld [vmem:[%s5 + $0x98] sm:$0xff]
      %v707 = vld [vmem:[%s5 + $0xa0] sm:$0xff]
      %v708 = vld [vmem:[%s5 + $0xa8] sm:$0xff]
      %v709 = vld [vmem:[%s5 + $0xb0] sm:$0xff]
      %v710 = vld [vmem:[%s5 + $0xb8] sm:$0xff]
      %v711 = vld [vmem:[%s5 + $0xc0] sm:$0xff]
      %v712 = vld [vmem:[%s5 + $0xc8] sm:$0xff]
      %v713 = vld [vmem:[%s5 + $0xd0] sm:$0xff]
      %v714 = vld [vmem:[%s5 + $0xd8] sm:$0xff]
      %v715 = vld [vmem:[%s5 + $0xe0] sm:$0xff]
      %v716 = vld [vmem:[%s5 + $0xe8] sm:$0xff]
      %v717 = vld [vmem:[%s5 + $0xf0] sm:$0xff]
      %v718 = vld [vmem:[%s5 + $0xf8] sm:$0xff]
      %v719 = vld [vmem:[%s5 + $0x100] sm:$0xff]
      %v720 = vld [vmem:[%s5 + $0x108] sm:$0xff]
      %v721 = vld [vmem:[%s5 + $0x110] sm:$0xff]
      %v722 = vld [vmem:[%s5 + $0x118] sm:$0xff]
      %v723 = vld [vmem:[%s5 + $0x120] sm:$0xff]
      %v724 = vld [vmem:[%s5 + $0x128] sm:$0xff]
      %v725 = vld [vmem:[%s5 + $0x130] sm:$0xff]
      %v726 = vld [vmem:[%s5 + $0x138] sm:$0xff]
      %v727 = vld [vmem:[%s5 + $0x140] sm:$0xff]
      %v728 = vld [vmem:[%s5 + $0x148] sm:$0xff]
      %v729 = vld [vmem:[%s5 + $0x150] sm:$0xff]
      %v730 = vld [vmem:[%s5 + $0x158] sm:$0xff]
      %v731 = vld [vmem:[%s5 + $0x160] sm:$0xff]
      %v732 = vld [vmem:[%s5 + $0x168] sm:$0xff]
      %v733 = vld [vmem:[%s5 + $0x170] sm:$0xff]
      %v734 = vld [vmem:[%s5 + $0x178] sm:$0xff]
      %v735 = vld [vmem:[%s6] sm:$0x7]
      %v737 = vlaneseq
      %v738 = vshrl.u32 %v737, 7
      %v739 = vsub.s32 0, %v738
      %v740 = vrot.slane %v735, %v739
      %v741 = vlaneseq
      %v742 = vshrl.u32 %v741, 7
      %v743 = vsub.s32 1, %v742
      %v744 = vrot.slane %v735, %v743
      %v745 = vlaneseq
      %v746 = vshrl.u32 %v745, 7
      %v747 = vsub.s32 2, %v746
      %v748 = vrot.slane %v735, %v747
      %752 = vmatprep.subr.mxu0 %v733
      %753 = vmatpush1.msra.mxu0 %v732
      %754 = vmatprep.subr.mxu0 %v730
      %755 = vmatpush1.msra.mxu0 %v729
      %756 = vmatprep.subr.mxu0 %v727
      %757 = vmatpush1.msra.mxu0 %v726
      %758 = vmatprep.subr.mxu0 %v724
      %759 = vmatpush1.msra.mxu0 %v723
      %760 = vmatprep.subr.mxu0 %v721
      %761 = vmatpush1.msra.mxu0 %v720
      %762 = vmatprep.subr.mxu0 %v718
      %763 = vmatpush1.msra.mxu0 %v717
      %764 = vmatprep.subr.mxu0 %v715
      %765 = vmatpush1.msra.mxu0 %v714
      %766 = vmatprep.subr.mxu0 %v712
      %767 = vmatpush1.msra.mxu0 %v711
      %768 = vmatprep.subr.mxu0 %v709
      %769 = vmatpush1.msra.mxu0 %v708
      %770 = vmatprep.subr.mxu0 %v706
      %771 = vmatpush1.msra.mxu0 %v705
      %772 = vmatprep.subr.mxu0 %v703
      %773 = vmatpush1.msra.mxu0 %v702
      %774 = vmatprep.subr.mxu0 %v700
      %775 = vmatpush1.msra.mxu0 %v699
      %776 = vmatprep.subr.mxu0 %v697
      %777 = vmatpush1.msra.mxu0 %v696
      %778 = vmatprep.subr.mxu0 %v694
      %779 = vmatpush1.msra.mxu0 %v693
      %780 = vmatprep.subr.mxu0 %v691
      %781 = vmatpush1.msra.mxu0 %v690
      %782 = vmatprep.subr.mxu0 %v688
      %783 = vmatpush1.msra.mxu0 %v687
      %784 = vmatprep.subr.mxu0 0.0
      %785 = vmatpush2.msra.mxu0 0.0
      %786 = vmatprep.subr.mxu0 0.0
      %787 = vmatpush2.msra.mxu0 0.0
      %788 = vmatprep.subr.mxu0 0.0
      %789 = vmatpush2.msra.mxu0 0.0
      %790 = vmatprep.subr.mxu0 0.0
      %791 = vmatpush2.msra.mxu0 0.0
      %792 = vmatprep.subr.mxu0 0.0
      %793 = vmatpush2.msra.mxu0 0.0
      %794 = vmatprep.subr.mxu0 0.0
      %795 = vmatpush2.msra.mxu0 0.0
      %796 = vmatprep.subr.mxu0 0.0
      %797 = vmatpush2.msra.mxu0 0.0
      %798 = vmatprep.subr.mxu0 0.0
      %799 = vmatpush2.msra.mxu0 0.0
      %800 = vmatprep.subr.mxu0 0.0
      %801 = vmatpush2.msra.mxu0 0.0
      %802 = vmatprep.subr.mxu0 0.0
      %803 = vmatpush2.msra.mxu0 0.0
      %804 = vmatprep.subr.mxu0 0.0
      %805 = vmatpush2.msra.mxu0 0.0
      %806 = vmatprep.subr.mxu0 0.0
      %807 = vmatpush2.msra.mxu0 0.0
      %808 = vmatprep.subr.mxu0 0.0
      %809 = vmatpush2.msra.mxu0 0.0
      %810 = vmatprep.subr.mxu0 0.0
      %811 = vmatpush2.msra.mxu0 0.0
      %812 = vmatprep.subr.mxu0 0.0
      %813 = vmatpush2.msra.mxu0 0.0
      %814 = vmatprep.subr.mxu0 0.0
      %815 = vmatpush2.msra.mxu0 0.0
      %816 = vmatprep.mubr.f32.mxu0 0.0
      %817 = vmatmul.mubr.f32.gmra.mxu0 %v684
      %v818 = vpop.f32.mrf.mxu0
      %v819 = vadd.f32 %v740, %v818
      %v820 = vpop.f32.mrf.mxu0
      %v821 = vadd.f32 %v744, %v820
      %822 = vmatprep.mubr.f32.mxu0 0.0
      %823 = vmatmul.mubr.f32.gmra.mxu0 %v685
      %v824 = vpop.f32.mrf.mxu0
      %v825 = vadd.f32 %v740, %v824
      %v826 = vpop.f32.mrf.mxu0
      %v827 = vadd.f32 %v744, %v826
      %828 = vmatprep.mubr.f32.mxu0 0.0
      %829 = vmatmul.mubr.f32.gmra.mxu0 %v686
      %v830 = vpop.f32.mrf.mxu0
      %v831 = vadd.f32 %v740, %v830
      %v832 = vpop.f32.mrf.mxu0
      %v833 = vadd.f32 %v744, %v832
      %834 = vdwg.mxu0
      %835 = vmatprep.subr.mxu0 0.0
      %836 = vmatpush1.msra.mxu0 %v734
      %837 = vmatprep.subr.mxu0 0.0
      %838 = vmatpush1.msra.mxu0 %v731
      %839 = vmatprep.subr.mxu0 0.0
      %840 = vmatpush1.msra.mxu0 %v728
      %841 = vmatprep.subr.mxu0 0.0
      %842 = vmatpush1.msra.mxu0 %v725
      %843 = vmatprep.subr.mxu0 0.0
      %844 = vmatpush1.msra.mxu0 %v722
      %845 = vmatprep.subr.mxu0 0.0
      %846 = vmatpush1.msra.mxu0 %v719
      %847 = vmatprep.subr.mxu0 0.0
      %848 = vmatpush1.msra.mxu0 %v716
      %849 = vmatprep.subr.mxu0 0.0
      %850 = vmatpush1.msra.mxu0 %v713
      %851 = vmatprep.subr.mxu0 0.0
      %852 = vmatpush1.msra.mxu0 %v710
      %853 = vmatprep.subr.mxu0 0.0
      %854 = vmatpush1.msra.mxu0 %v707
      %855 = vmatprep.subr.mxu0 0.0
      %856 = vmatpush1.msra.mxu0 %v704
      %857 = vmatprep.subr.mxu0 0.0
      %858 = vmatpush1.msra.mxu0 %v701
      %859 = vmatprep.subr.mxu0 0.0
      %860 = vmatpush1.msra.mxu0 %v698
      %861 = vmatprep.subr.mxu0 0.0
      %862 = vmatpush1.msra.mxu0 %v695
      %863 = vmatprep.subr.mxu0 0.0
      %864 = vmatpush1.msra.mxu0 %v692
      %865 = vmatprep.subr.mxu0 0.0
      %866 = vmatpush1.msra.mxu0 %v689
      %867 = vmatprep.subr.mxu0 0.0
      %868 = vmatpush2.msra.mxu0 0.0
      %869 = vmatprep.subr.mxu0 0.0
      %870 = vmatpush2.msra.mxu0 0.0
      %871 = vmatprep.subr.mxu0 0.0
      %872 = vmatpush2.msra.mxu0 0.0
      %873 = vmatprep.subr.mxu0 0.0
      %874 = vmatpush2.msra.mxu0 0.0
      %875 = vmatprep.subr.mxu0 0.0
      %876 = vmatpush2.msra.mxu0 0.0
      %877 = vmatprep.subr.mxu0 0.0
      %878 = vmatpush2.msra.mxu0 0.0
      %879 = vmatprep.subr.mxu0 0.0
      %880 = vmatpush2.msra.mxu0 0.0
      %881 = vmatprep.subr.mxu0 0.0
      %882 = vmatpush2.msra.mxu0 0.0
      %883 = vmatprep.subr.mxu0 0.0
      %884 = vmatpush2.msra.mxu0 0.0
      %885 = vmatprep.subr.mxu0 0.0
      %886 = vmatpush2.msra.mxu0 0.0
      %887 = vmatprep.subr.mxu0 0.0
      %888 = vmatpush2.msra.mxu0 0.0
      %889 = vmatprep.subr.mxu0 0.0
      %890 = vmatpush2.msra.mxu0 0.0
      %891 = vmatprep.subr.mxu0 0.0
      %892 = vmatpush2.msra.mxu0 0.0
      %893 = vmatprep.subr.mxu0 0.0
      %894 = vmatpush2.msra.mxu0 0.0
      %895 = vmatprep.subr.mxu0 0.0
      %896 = vmatpush2.msra.mxu0 0.0
      %897 = vmatprep.subr.mxu0 0.0
      %898 = vmatpush2.msra.mxu0 0.0
      %899 = vmatprep.mubr.f32.mxu0 0.0
      %900 = vmatmul.mubr.f32.gmra.mxu0 %v684
      %v901 = vpop.f32.mrf.mxu0
      %v902 = vadd.f32 %v748, %v901
      %v903 = vpop.f32.mrf.mxu0
      %904 = vmatprep.mubr.f32.mxu0 0.0
      %905 = vmatmul.mubr.f32.gmra.mxu0 %v685
      %v906 = vpop.f32.mrf.mxu0
      %v907 = vadd.f32 %v748, %v906
      %v908 = vpop.f32.mrf.mxu0
      %909 = vmatprep.mubr.f32.mxu0 0.0
      %910 = vmatmul.mubr.f32.gmra.mxu0 %v686
      %v911 = vpop.f32.mrf.mxu0
      %v912 = vadd.f32 %v748, %v911
      %v913 = vpop.f32.mrf.mxu0
      %914 = vdwg.mxu0
      %v915 = vmul.f32 %v819, %v624
      %v916 = vmul.f32 %v825, %v625
      %v917 = vmul.f32 %v831, %v626
      %v918 = vmul.f32 %v819, %v627
      %v919 = vmul.f32 %v825, %v628
      %v920 = vmul.f32 %v831, %v629
      %v921 = vmul.f32 %v819, %v630
      %v922 = vmul.f32 %v825, %v631
      %v923 = vmul.f32 %v831, %v632
      %v924 = vmul.f32 %v819, %v633
      %v925 = vmul.f32 %v825, %v634
      %v926 = vmul.f32 %v831, %v635
      %927 = vmatprep.subr.mxu0 0.0
      %928 = vmatpush1.xpose.msra.mxu0 0.0
      %929 = vmatprep.subr.mxu0 0.0
      %930 = vmatpush1.xpose.msra.mxu0 0.0
      %931 = vmatprep.subr.mxu0 0.0
      %932 = vmatpush1.xpose.msra.mxu0 0.0
      %933 = vmatprep.subr.mxu0 0.0
      %934 = vmatpush1.xpose.msra.mxu0 0.0
      %935 = vmatprep.subr.mxu0 0.0
      %936 = vmatpush1.xpose.msra.mxu0 0.0
      %937 = vmatprep.subr.mxu0 0.0
      %938 = vmatpush1.xpose.msra.mxu0 0.0
      %939 = vmatprep.subr.mxu0 0.0
      %940 = vmatpush1.xpose.msra.mxu0 0.0
      %941 = vmatprep.subr.mxu0 0.0
      %942 = vmatpush1.xpose.msra.mxu0 0.0
      %943 = vmatprep.subr.mxu0 0.0
      %944 = vmatpush1.xpose.msra.mxu0 0.0
      %945 = vmatprep.subr.mxu0 0.0
      %946 = vmatpush1.xpose.msra.mxu0 0.0
      %947 = vmatprep.subr.mxu0 0.0
      %948 = vmatpush1.xpose.msra.mxu0 0.0
      %949 = vmatprep.subr.mxu0 0.0
      %950 = vmatpush1.xpose.msra.mxu0 0.0
      %951 = vmatprep.subr.mxu0 0.0
      %952 = vmatpush1.xpose.msra.mxu0 0.0
      %953 = vmatprep.subr.mxu0 0.0
      %954 = vmatpush1.xpose.msra.mxu0 %v833
      %955 = vmatprep.subr.mxu0 0.0
      %956 = vmatpush1.xpose.msra.mxu0 %v827
      %957 = vmatprep.subr.mxu0 0.0
      %958 = vmatpush1.xpose.msra.mxu0 %v821
      %959 = vmatprep.subr.mxu0 0.0
      %960 = vmatpush2.xpose.msra.mxu0 0.0
      %961 = vmatprep.subr.mxu0 0.0
      %962 = vmatpush2.xpose.msra.mxu0 0.0
      %963 = vmatprep.subr.mxu0 0.0
      %964 = vmatpush2.xpose.msra.mxu0 0.0
      %965 = vmatprep.subr.mxu0 0.0
      %966 = vmatpush2.xpose.msra.mxu0 0.0
      %967 = vmatprep.subr.mxu0 0.0
      %968 = vmatpush2.xpose.msra.mxu0 0.0
      %969 = vmatprep.subr.mxu0 0.0
      %970 = vmatpush2.xpose.msra.mxu0 0.0
      %971 = vmatprep.subr.mxu0 0.0
      %972 = vmatpush2.xpose.msra.mxu0 0.0
      %973 = vmatprep.subr.mxu0 0.0
      %974 = vmatpush2.xpose.msra.mxu0 0.0
      %975 = vmatprep.subr.mxu0 0.0
      %976 = vmatpush2.xpose.msra.mxu0 0.0
      %977 = vmatprep.subr.mxu0 0.0
      %978 = vmatpush2.xpose.msra.mxu0 0.0
      %979 = vmatprep.subr.mxu0 0.0
      %980 = vmatpush2.xpose.msra.mxu0 0.0
      %981 = vmatprep.subr.mxu0 0.0
      %982 = vmatpush2.xpose.msra.mxu0 0.0
      %983 = vmatprep.subr.mxu0 0.0
      %984 = vmatpush2.xpose.msra.mxu0 0.0
      %985 = vmatprep.subr.mxu0 0.0
      %986 = vmatpush2.xpose.msra.mxu0 0.0
      %987 = vmatprep.subr.mxu0 0.0
      %988 = vmatpush2.xpose.msra.mxu0 0.0
      %989 = vmatprep.subr.mxu0 0.0
      %990 = vmatpush2.xpose.msra.mxu0 0.0
      %991 = vmatprep.mubr.f32.mxu0 0.0
      %992 = vmatmul.mubr.f32.gmra.mxu0 %v915
      %v993 = vpop.f32.mrf.mxu0
      %v994 = vadd.f32 %v450, %v993
      %v995 = vpop.f32.mrf.mxu0
      %996 = vmatprep.mubr.f32.mxu0 0.0
      %997 = vmatmul.mubr.f32.gmra.mxu0 %v916
      %v998 = vpop.f32.mrf.mxu0
      %v999 = vadd.f32 %v450, %v998
      %v1000 = vpop.f32.mrf.mxu0
      %1001 = vmatprep.mubr.f32.mxu0 0.0
      %1002 = vmatmul.mubr.f32.gmra.mxu0 %v917
      %v1003 = vpop.f32.mrf.mxu0
      %v1004 = vadd.f32 %v450, %v1003
      %v1005 = vpop.f32.mrf.mxu0
      %1006 = vmatprep.mubr.f32.mxu0 0.0
      %1007 = vmatmul.mubr.f32.gmra.mxu0 %v918
      %v1008 = vpop.f32.mrf.mxu0
      %v1009 = vadd.f32 %v450, %v1008
      %v1010 = vpop.f32.mrf.mxu0
      %1011 = vmatprep.mubr.f32.mxu0 0.0
      %1012 = vmatmul.mubr.f32.gmra.mxu0 %v919
      %v1013 = vpop.f32.mrf.mxu0
      %v1014 = vadd.f32 %v450, %v1013
      %v1015 = vpop.f32.mrf.mxu0
      %1016 = vmatprep.mubr.f32.mxu0 0.0
      %1017 = vmatmul.mubr.f32.gmra.mxu0 %v920
      %v1018 = vpop.f32.mrf.mxu0
      %v1019 = vadd.f32 %v450, %v1018
      %v1020 = vpop.f32.mrf.mxu0
      %1021 = vmatprep.mubr.f32.mxu0 0.0
      %1022 = vmatmul.mubr.f32.gmra.mxu0 %v921
      %v1023 = vpop.f32.mrf.mxu0
      %v1024 = vadd.f32 %v450, %v1023
      %v1025 = vpop.f32.mrf.mxu0
      %1026 = vmatprep.mubr.f32.mxu0 0.0
      %1027 = vmatmul.mubr.f32.gmra.mxu0 %v922
      %v1028 = vpop.f32.mrf.mxu0
      %v1029 = vadd.f32 %v450, %v1028
      %v1030 = vpop.f32.mrf.mxu0
      %1031 = vmatprep.mubr.f32.mxu0 0.0
      %1032 = vmatmul.mubr.f32.gmra.mxu0 %v923
      %v1033 = vpop.f32.mrf.mxu0
      %v1034 = vadd.f32 %v450, %v1033
      %v1035 = vpop.f32.mrf.mxu0
      %1036 = vmatprep.mubr.f32.mxu0 0.0
      %1037 = vmatmul.mubr.f32.gmra.mxu0 %v924
      %v1038 = vpop.f32.mrf.mxu0
      %v1039 = vadd.f32 %v450, %v1038
      %v1040 = vpop.f32.mrf.mxu0
      %1041 = vmatprep.mubr.f32.mxu0 0.0
      %1042 = vmatmul.mubr.f32.gmra.mxu0 %v925
      %v1043 = vpop.f32.mrf.mxu0
      %v1044 = vadd.f32 %v450, %v1043
      %v1045 = vpop.f32.mrf.mxu0
      %1046 = vmatprep.mubr.f32.mxu0 0.0
      %1047 = vmatmul.mubr.f32.gmra.mxu0 %v926
      %v1048 = vpop.f32.mrf.mxu0
      %v1049 = vadd.f32 %v450, %v1048
      %v1050 = vpop.f32.mrf.mxu0
      %1051 = vdwg.mxu0
      %vm1052 = vcmask 195584
      %v1053 = vsel %vm1052, %v994, -inf
      %1054 = vmax.xlane.f32.xlu0 %v1053
      %v1055 = vpop.xlane.xlu0 %1054
      %v1056 = vsel %vm1052, %v999, -inf
      %1057 = vmax.xlane.f32.xlu0 %v1056
      %v1058 = vpop.xlane.xlu0 %1057
      %v1059 = vsel %vm1052, %v1004, -inf
      %1060 = vmax.xlane.f32.xlu0 %v1059
      %v1061 = vpop.xlane.xlu0 %1060
      %v1062 = vsel %vm1052, %v1009, -inf
      %1063 = vmax.xlane.f32.xlu0 %v1062
      %v1064 = vpop.xlane.xlu0 %1063
      %v1065 = vsel %vm1052, %v1014, -inf
      %1066 = vmax.xlane.f32.xlu0 %v1065
      %v1067 = vpop.xlane.xlu0 %1066
      %v1068 = vsel %vm1052, %v1019, -inf
      %1069 = vmax.xlane.f32.xlu0 %v1068
      %v1070 = vpop.xlane.xlu0 %1069
      %v1071 = vsel %vm1052, %v1024, -inf
      %1072 = vmax.xlane.f32.xlu0 %v1071
      %v1073 = vpop.xlane.xlu0 %1072
      %v1074 = vsel %vm1052, %v1029, -inf
      %1075 = vmax.xlane.f32.xlu0 %v1074
      %v1076 = vpop.xlane.xlu0 %1075
      %v1077 = vsel %vm1052, %v1034, -inf
      %1078 = vmax.xlane.f32.xlu0 %v1077
      %v1079 = vpop.xlane.xlu0 %1078
      %v1080 = vsel %vm1052, %v1039, -inf
      %1081 = vmax.xlane.f32.xlu0 %v1080
      %v1082 = vpop.xlane.xlu0 %1081
      %v1083 = vsel %vm1052, %v1044, -inf
      %1084 = vmax.xlane.f32.xlu0 %v1083
      %v1085 = vpop.xlane.xlu0 %1084
      %v1086 = vsel %vm1052, %v1049, -inf
      %1087 = vmax.xlane.f32.xlu0 %v1086
      %v1088 = vpop.xlane.xlu0 %1087
      %v1089 = vsub.f32 %v994, %v1055
      %v1090 = vsub.f32 %v999, %v1058
      %v1091 = vsub.f32 %v1004, %v1061
      %v1092 = vsub.f32 %v1009, %v1064
      %v1093 = vsub.f32 %v1014, %v1067
      %v1094 = vsub.f32 %v1019, %v1070
      %v1095 = vsub.f32 %v1024, %v1073
      %v1096 = vsub.f32 %v1029, %v1076
      %v1097 = vsub.f32 %v1034, %v1079
      %v1098 = vsub.f32 %v1039, %v1082
      %v1099 = vsub.f32 %v1044, %v1085
      %v1100 = vsub.f32 %v1049, %v1088
      %v1101 = vmul.f32 %v1089, 1.442695
      %v1102 = vpow.pop %v1101
      %v1103 = vmul.f32 %v1090, 1.442695
      %v1104 = vpow.pop %v1103
      %v1105 = vmul.f32 %v1091, 1.442695
      %v1106 = vpow.pop %v1105
      %v1107 = vmul.f32 %v1092, 1.442695
      %v1108 = vpow.pop %v1107
      %v1109 = vmul.f32 %v1093, 1.442695
      %v1110 = vpow.pop %v1109
      %v1111 = vmul.f32 %v1094, 1.442695
      %v1112 = vpow.pop %v1111
      %v1113 = vmul.f32 %v1095, 1.442695
      %v1114 = vpow.pop %v1113
      %v1115 = vmul.f32 %v1096, 1.442695
      %v1116 = vpow.pop %v1115
      %v1117 = vmul.f32 %v1097, 1.442695
      %v1118 = vpow.pop %v1117
      %v1119 = vmul.f32 %v1098, 1.442695
      %v1120 = vpow.pop %v1119
      %v1121 = vmul.f32 %v1099, 1.442695
      %v1122 = vpow.pop %v1121
      %v1123 = vmul.f32 %v1100, 1.442695
      %v1124 = vpow.pop %v1123
      %v1125 = vsel %vm1052, %v1102, 0.0
      %1126 = vadd.xlane.f32.xlu0 %v1125
      %v1127 = vpop.xlane.xlu0 %1126
      %v1128 = vsel %vm1052, %v1104, 0.0
      %1129 = vadd.xlane.f32.xlu0 %v1128
      %v1130 = vpop.xlane.xlu0 %1129
      %v1131 = vsel %vm1052, %v1106, 0.0
      %1132 = vadd.xlane.f32.xlu0 %v1131
      %v1133 = vpop.xlane.xlu0 %1132
      %v1134 = vsel %vm1052, %v1108, 0.0
      %1135 = vadd.xlane.f32.xlu0 %v1134
      %v1136 = vpop.xlane.xlu0 %1135
      %v1137 = vsel %vm1052, %v1110, 0.0
      %1138 = vadd.xlane.f32.xlu0 %v1137
      %v1139 = vpop.xlane.xlu0 %1138
      %v1140 = vsel %vm1052, %v1112, 0.0
      %1141 = vadd.xlane.f32.xlu0 %v1140
      %v1142 = vpop.xlane.xlu0 %1141
      %v1143 = vsel %vm1052, %v1114, 0.0
      %1144 = vadd.xlane.f32.xlu0 %v1143
      %v1145 = vpop.xlane.xlu0 %1144
      %v1146 = vsel %vm1052, %v1116, 0.0
      %1147 = vadd.xlane.f32.xlu0 %v1146
      %v1148 = vpop.xlane.xlu0 %1147
      %v1149 = vsel %vm1052, %v1118, 0.0
      %1150 = vadd.xlane.f32.xlu0 %v1149
      %v1151 = vpop.xlane.xlu0 %1150
      %v1152 = vsel %vm1052, %v1120, 0.0
      %1153 = vadd.xlane.f32.xlu0 %v1152
      %v1154 = vpop.xlane.xlu0 %1153
      %v1155 = vsel %vm1052, %v1122, 0.0
      %1156 = vadd.xlane.f32.xlu0 %v1155
      %v1157 = vpop.xlane.xlu0 %1156
      %v1158 = vsel %vm1052, %v1124, 0.0
      %1159 = vadd.xlane.f32.xlu0 %v1158
      %v1160 = vpop.xlane.xlu0 %1159
      %v1161 = vrcp.pop %v1127
      %v1162 = vrcp.pop %v1130
      %v1163 = vrcp.pop %v1133
      %v1164 = vrcp.pop %v1136
      %v1165 = vrcp.pop %v1139
      %v1166 = vrcp.pop %v1142
      %v1167 = vrcp.pop %v1145
      %v1168 = vrcp.pop %v1148
      %v1169 = vrcp.pop %v1151
      %v1170 = vrcp.pop %v1154
      %v1171 = vrcp.pop %v1157
      %v1172 = vrcp.pop %v1160
      %v1173 = vmul.f32 %v1102, %v1161
      %v1174 = vmul.f32 %v1104, %v1162
      %v1175 = vmul.f32 %v1106, %v1163
      %v1176 = vmul.f32 %v1108, %v1164
      %v1177 = vmul.f32 %v1110, %v1165
      %v1178 = vmul.f32 %v1112, %v1166
      %v1179 = vmul.f32 %v1114, %v1167
      %v1180 = vmul.f32 %v1116, %v1168
      %v1181 = vmul.f32 %v1118, %v1169
      %v1182 = vmul.f32 %v1120, %v1170
      %v1183 = vmul.f32 %v1122, %v1171
      %v1184 = vmul.f32 %v1124, %v1172
      %v1186 = vsel %vm1052, %v1173, 0
      %v1189 = vsel %vm1052, %v1174, 0
      %v1192 = vsel %vm1052, %v1175, 0
      %v1195 = vsel %vm1052, %v1176, 0
      %v1198 = vsel %vm1052, %v1177, 0
      %v1201 = vsel %vm1052, %v1178, 0
      %v1204 = vsel %vm1052, %v1179, 0
      %v1207 = vsel %vm1052, %v1180, 0
      %v1210 = vsel %vm1052, %v1181, 0
      %v1213 = vsel %vm1052, %v1182, 0
      %v1216 = vsel %vm1052, %v1183, 0
      %v1219 = vsel %vm1052, %v1184, 0
      %1221 = vmatprep.subr.mxu0 0.0
      %1222 = vmatpush1.msra.mxu0 0.0
      %1223 = vmatprep.subr.mxu0 0.0
      %1224 = vmatpush1.msra.mxu0 0.0
      %1225 = vmatprep.subr.mxu0 0.0
      %1226 = vmatpush1.msra.mxu0 0.0
      %1227 = vmatprep.subr.mxu0 0.0
      %1228 = vmatpush1.msra.mxu0 0.0
      %1229 = vmatprep.subr.mxu0 0.0
      %1230 = vmatpush1.msra.mxu0 0.0
      %1231 = vmatprep.subr.mxu0 0.0
      %1232 = vmatpush1.msra.mxu0 0.0
      %1233 = vmatprep.subr.mxu0 0.0
      %1234 = vmatpush1.msra.mxu0 0.0
      %1235 = vmatprep.subr.mxu0 0.0
      %1236 = vmatpush1.msra.mxu0 0.0
      %1237 = vmatprep.subr.mxu0 0.0
      %1238 = vmatpush1.msra.mxu0 0.0
      %1239 = vmatprep.subr.mxu0 0.0
      %1240 = vmatpush1.msra.mxu0 0.0
      %1241 = vmatprep.subr.mxu0 0.0
      %1242 = vmatpush1.msra.mxu0 0.0
      %1243 = vmatprep.subr.mxu0 0.0
      %1244 = vmatpush1.msra.mxu0 0.0
      %1245 = vmatprep.subr.mxu0 0.0
      %1246 = vmatpush1.msra.mxu0 0.0
      %1247 = vmatprep.subr.mxu0 0.0
      %1248 = vmatpush1.msra.mxu0 %v912
      %1249 = vmatprep.subr.mxu0 0.0
      %1250 = vmatpush1.msra.mxu0 %v907
      %1251 = vmatprep.subr.mxu0 0.0
      %1252 = vmatpush1.msra.mxu0 %v902
      %1253 = vmatprep.subr.mxu0 0.0
      %1254 = vmatpush2.msra.mxu0 0.0
      %1255 = vmatprep.subr.mxu0 0.0
      %1256 = vmatpush2.msra.mxu0 0.0
      %1257 = vmatprep.subr.mxu0 0.0
      %1258 = vmatpush2.msra.mxu0 0.0
      %1259 = vmatprep.subr.mxu0 0.0
      %1260 = vmatpush2.msra.mxu0 0.0
      %1261 = vmatprep.subr.mxu0 0.0
      %1262 = vmatpush2.msra.mxu0 0.0
      %1263 = vmatprep.subr.mxu0 0.0
      %1264 = vmatpush2.msra.mxu0 0.0
      %1265 = vmatprep.subr.mxu0 0.0
      %1266 = vmatpush2.msra.mxu0 0.0
      %1267 = vmatprep.subr.mxu0 0.0
      %1268 = vmatpush2.msra.mxu0 0.0
      %1269 = vmatprep.subr.mxu0 0.0
      %1270 = vmatpush2.msra.mxu0 0.0
      %1271 = vmatprep.subr.mxu0 0.0
      %1272 = vmatpush2.msra.mxu0 0.0
      %1273 = vmatprep.subr.mxu0 0.0
      %1274 = vmatpush2.msra.mxu0 0.0
      %1275 = vmatprep.subr.mxu0 0.0
      %1276 = vmatpush2.msra.mxu0 0.0
      %1277 = vmatprep.subr.mxu0 0.0
      %1278 = vmatpush2.msra.mxu0 0.0
      %1279 = vmatprep.subr.mxu0 0.0
      %1280 = vmatpush2.msra.mxu0 0.0
      %1281 = vmatprep.subr.mxu0 0.0
      %1282 = vmatpush2.msra.mxu0 0.0
      %1283 = vmatprep.subr.mxu0 0.0
      %1284 = vmatpush2.msra.mxu0 0.0
      %1285 = vmatprep.mubr.f32.mxu0 0.0
      %1286 = vmatmul.mubr.f32.gmra.mxu0 %v1186
      %v1287 = vpop.f32.mrf.mxu0
      %v1288 = vadd.f32 0.0, %v1287
      %v1289 = vpop.f32.mrf.mxu0
      %1290 = vmatprep.mubr.f32.mxu0 0.0
      %1291 = vmatmul.mubr.f32.gmra.mxu0 %v1189
      %v1292 = vpop.f32.mrf.mxu0
      %v1293 = vadd.f32 0.0, %v1292
      %v1294 = vpop.f32.mrf.mxu0
      %1295 = vmatprep.mubr.f32.mxu0 0.0
      %1296 = vmatmul.mubr.f32.gmra.mxu0 %v1192
      %v1297 = vpop.f32.mrf.mxu0
      %v1298 = vadd.f32 0.0, %v1297
      %v1299 = vpop.f32.mrf.mxu0
      %1300 = vmatprep.mubr.f32.mxu0 0.0
      %1301 = vmatmul.mubr.f32.gmra.mxu0 %v1195
      %v1302 = vpop.f32.mrf.mxu0
      %v1303 = vadd.f32 0.0, %v1302
      %v1304 = vpop.f32.mrf.mxu0
      %1305 = vmatprep.mubr.f32.mxu0 0.0
      %1306 = vmatmul.mubr.f32.gmra.mxu0 %v1198
      %v1307 = vpop.f32.mrf.mxu0
      %v1308 = vadd.f32 0.0, %v1307
      %v1309 = vpop.f32.mrf.mxu0
      %1310 = vmatprep.mubr.f32.mxu0 0.0
      %1311 = vmatmul.mubr.f32.gmra.mxu0 %v1201
      %v1312 = vpop.f32.mrf.mxu0
      %v1313 = vadd.f32 0.0, %v1312
      %v1314 = vpop.f32.mrf.mxu0
      %1315 = vmatprep.mubr.f32.mxu0 0.0
      %1316 = vmatmul.mubr.f32.gmra.mxu0 %v1204
      %v1317 = vpop.f32.mrf.mxu0
      %v1318 = vadd.f32 0.0, %v1317
      %v1319 = vpop.f32.mrf.mxu0
      %1320 = vmatprep.mubr.f32.mxu0 0.0
      %1321 = vmatmul.mubr.f32.gmra.mxu0 %v1207
      %v1322 = vpop.f32.mrf.mxu0
      %v1323 = vadd.f32 0.0, %v1322
      %v1324 = vpop.f32.mrf.mxu0
      %1325 = vmatprep.mubr.f32.mxu0 0.0
      %1326 = vmatmul.mubr.f32.gmra.mxu0 %v1210
      %v1327 = vpop.f32.mrf.mxu0
      %v1328 = vadd.f32 0.0, %v1327
      %v1329 = vpop.f32.mrf.mxu0
      %1330 = vmatprep.mubr.f32.mxu0 0.0
      %1331 = vmatmul.mubr.f32.gmra.mxu0 %v1213
      %v1332 = vpop.f32.mrf.mxu0
      %v1333 = vadd.f32 0.0, %v1332
      %v1334 = vpop.f32.mrf.mxu0
      %1335 = vmatprep.mubr.f32.mxu0 0.0
      %1336 = vmatmul.mubr.f32.gmra.mxu0 %v1216
      %v1337 = vpop.f32.mrf.mxu0
      %v1338 = vadd.f32 0.0, %v1337
      %v1339 = vpop.f32.mrf.mxu0
      %1340 = vmatprep.mubr.f32.mxu0 0.0
      %1341 = vmatmul.mubr.f32.gmra.mxu0 %v1219
      %v1342 = vpop.f32.mrf.mxu0
      %v1343 = vadd.f32 0.0, %v1342
      %v1344 = vpop.f32.mrf.mxu0
      %1345 = vdwg.mxu0
      %v1346 = vmul.f32 %v1288, %v624
      %v1347 = vmul.f32 %v1293, %v625
      %v1348 = vmul.f32 %v1298, %v626
      %v1349 = vmul.f32 %v1303, %v627
      %v1350 = vmul.f32 %v1308, %v628
      %v1351 = vmul.f32 %v1313, %v629
      %v1352 = vmul.f32 %v1318, %v630
      %v1353 = vmul.f32 %v1323, %v631
      %v1354 = vmul.f32 %v1328, %v632
      %v1355 = vmul.f32 %v1333, %v633
      %v1356 = vmul.f32 %v1338, %v634
      %v1357 = vmul.f32 %v1343, %v635
      %v1358 = vadd.f32 %v1346, %v1349
      %v1359 = vadd.f32 %v1347, %v1350
      %v1360 = vadd.f32 %v1348, %v1351
      %v1361 = vadd.f32 %v1358, %v1352
      %v1362 = vadd.f32 %v1359, %v1353
      %v1363 = vadd.f32 %v1360, %v1354
      %v1364 = vadd.f32 %v1361, %v1355
      %v1365 = vadd.f32 %v1362, %v1356
      %v1366 = vadd.f32 %v1363, %v1357
      %v1367 = vld [vmem:[%s7] sm:$0xff]
      %v1368 = vld [vmem:[%s7 + $0x8] sm:$0xff]
      %v1369 = vld [vmem:[%s7 + $0x10] sm:$0xff]
      %v1370 = vld [vmem:[%s7 + $0x18] sm:$0xff]
      %v1371 = vld [vmem:[%s7 + $0x20] sm:$0xff]
      %v1372 = vld [vmem:[%s7 + $0x28] sm:$0xff]
      %v1373 = vld [vmem:[%s7 + $0x30] sm:$0xff]
      %v1374 = vld [vmem:[%s7 + $0x38] sm:$0xff]
      %v1375 = vld [vmem:[%s7 + $0x40] sm:$0xff]
      %v1376 = vld [vmem:[%s7 + $0x48] sm:$0xff]
      %v1377 = vld [vmem:[%s7 + $0x50] sm:$0xff]
      %v1378 = vld [vmem:[%s7 + $0x58] sm:$0xff]
      %v1379 = vld [vmem:[%s7 + $0x60] sm:$0xff]
      %v1380 = vld [vmem:[%s7 + $0x68] sm:$0xff]
      %v1381 = vld [vmem:[%s7 + $0x70] sm:$0xff]
      %v1382 = vld [vmem:[%s7 + $0x78] sm:$0xff]
      %1383 = vmatprep.subr.mxu0 0.0
      %1384 = vmatpush1.msra.mxu0 %v1382
      %1385 = vmatprep.subr.mxu0 0.0
      %1386 = vmatpush1.msra.mxu0 %v1381
      %1387 = vmatprep.subr.mxu0 0.0
      %1388 = vmatpush1.msra.mxu0 %v1380
      %1389 = vmatprep.subr.mxu0 0.0
      %1390 = vmatpush1.msra.mxu0 %v1379
      %1391 = vmatprep.subr.mxu0 0.0
      %1392 = vmatpush1.msra.mxu0 %v1378
      %1393 = vmatprep.subr.mxu0 0.0
      %1394 = vmatpush1.msra.mxu0 %v1377
      %1395 = vmatprep.subr.mxu0 0.0
      %1396 = vmatpush1.msra.mxu0 %v1376
      %1397 = vmatprep.subr.mxu0 0.0
      %1398 = vmatpush1.msra.mxu0 %v1375
      %1399 = vmatprep.subr.mxu0 0.0
      %1400 = vmatpush1.msra.mxu0 %v1374
      %1401 = vmatprep.subr.mxu0 0.0
      %1402 = vmatpush1.msra.mxu0 %v1373
      %1403 = vmatprep.subr.mxu0 0.0
      %1404 = vmatpush1.msra.mxu0 %v1372
      %1405 = vmatprep.subr.mxu0 0.0
      %1406 = vmatpush1.msra.mxu0 %v1371
      %1407 = vmatprep.subr.mxu0 0.0
      %1408 = vmatpush1.msra.mxu0 %v1370
      %1409 = vmatprep.subr.mxu0 0.0
      %1410 = vmatpush1.msra.mxu0 %v1369
      %1411 = vmatprep.subr.mxu0 0.0
      %1412 = vmatpush1.msra.mxu0 %v1368
      %1413 = vmatprep.subr.mxu0 0.0
      %1414 = vmatpush1.msra.mxu0 %v1367
      %1415 = vmatprep.subr.mxu0 0.0
      %1416 = vmatpush2.msra.mxu0 0.0
      %1417 = vmatprep.subr.mxu0 0.0
      %1418 = vmatpush2.msra.mxu0 0.0
      %1419 = vmatprep.subr.mxu0 0.0
      %1420 = vmatpush2.msra.mxu0 0.0
      %1421 = vmatprep.subr.mxu0 0.0
      %1422 = vmatpush2.msra.mxu0 0.0
      %1423 = vmatprep.subr.mxu0 0.0
      %1424 = vmatpush2.msra.mxu0 0.0
      %1425 = vmatprep.subr.mxu0 0.0
      %1426 = vmatpush2.msra.mxu0 0.0
      %1427 = vmatprep.subr.mxu0 0.0
      %1428 = vmatpush2.msra.mxu0 0.0
      %1429 = vmatprep.subr.mxu0 0.0
      %1430 = vmatpush2.msra.mxu0 0.0
      %1431 = vmatprep.subr.mxu0 0.0
      %1432 = vmatpush2.msra.mxu0 0.0
      %1433 = vmatprep.subr.mxu0 0.0
      %1434 = vmatpush2.msra.mxu0 0.0
      %1435 = vmatprep.subr.mxu0 0.0
      %1436 = vmatpush2.msra.mxu0 0.0
      %1437 = vmatprep.subr.mxu0 0.0
      %1438 = vmatpush2.msra.mxu0 0.0
      %1439 = vmatprep.subr.mxu0 0.0
      %1440 = vmatpush2.msra.mxu0 0.0
      %1441 = vmatprep.subr.mxu0 0.0
      %1442 = vmatpush2.msra.mxu0 0.0
      %1443 = vmatprep.subr.mxu0 0.0
      %1444 = vmatpush2.msra.mxu0 0.0
      %1445 = vmatprep.subr.mxu0 0.0
      %1446 = vmatpush2.msra.mxu0 0.0
      %1447 = vmatprep.mubr.f32.mxu0 0.0
      %1448 = vmatmul.mubr.f32.gmra.mxu0 %v1364
      %v1449 = vpop.f32.mrf.mxu0
      %v1450 = vadd.f32 0.0, %v1449
      %v1451 = vpop.f32.mrf.mxu0
      %1452 = vmatprep.mubr.f32.mxu0 0.0
      %1453 = vmatmul.mubr.f32.gmra.mxu0 %v1365
      %v1454 = vpop.f32.mrf.mxu0
      %v1455 = vadd.f32 0.0, %v1454
      %v1456 = vpop.f32.mrf.mxu0
      %1457 = vmatprep.mubr.f32.mxu0 0.0
      %1458 = vmatmul.mubr.f32.gmra.mxu0 %v1366
      %v1459 = vpop.f32.mrf.mxu0
      %v1460 = vadd.f32 0.0, %v1459
      %v1461 = vpop.f32.mrf.mxu0
      %1462 = vdwg.mxu0
      %v1463 = vadd.f32 %v621, %v1450
      %v1464 = vadd.f32 %v622, %v1455
      %v1465 = vadd.f32 %v623, %v1460
      %v1466 = vlaneseq
      %v1467 = vshrl.u32 %v1466, 7
      %v1468 = vsub.s32 4, %v1467
      %v1469 = vrot.slane %v636, %v1468
      %v1470 = vadd.f32 %v1463, %v1469
      %v1471 = vadd.f32 %v1464, %v1469
      %v1472 = vadd.f32 %v1465, %v1469
      %1473 = vadd.xlane.f32.xlu0 %v1470
      %v1474 = vpop.xlane.xlu0 %1473
      %1475 = vadd.xlane.f32.xlu0 %v1471
      %v1476 = vpop.xlane.xlu0 %1475
      %1477 = vadd.xlane.f32.xlu0 %v1472
      %v1478 = vpop.xlane.xlu0 %1477
      %v1479 = vmul.f32 %v1474, 0.03125
      %v1480 = vmul.f32 %v1476, 0.03125
      %v1481 = vmul.f32 %v1478, 0.03125
      %v1482 = vsub.f32 %v1470, %v1479
      %v1483 = vsub.f32 %v1471, %v1480
      %v1484 = vsub.f32 %v1472, %v1481
      %v1485 = vmul.f32 %v1482, %v448
      %v1486 = vmul.f32 %v1483, %v448
      %v1487 = vmul.f32 %v1484, %v448
      %v1488 = vmul.f32 %v1485, %v1485
      %v1489 = vmul.f32 %v1486, %v1486
      %v1490 = vmul.f32 %v1487, %v1487
      %1491 = vadd.xlane.f32.xlu0 %v1488
      %v1492 = vpop.xlane.xlu0 %1491
      %1493 = vadd.xlane.f32.xlu0 %v1489
      %v1494 = vpop.xlane.xlu0 %1493
      %1495 = vadd.xlane.f32.xlu0 %v1490
      %v1496 = vpop.xlane.xlu0 %1495
      %v1497 = vmul.f32 %v1492, 0.03125
      %v1498 = vmul.f32 %v1494, 0.03125
      %v1499 = vmul.f32 %v1496, 0.03125
      %v1500 = vadd.f32 %v1497, 1e-05
      %v1501 = vadd.f32 %v1498, 1e-05
      %v1502 = vadd.f32 %v1499, 1e-05
      %v1503 = vrsqrt.pop %v1500
      %v1504 = vrsqrt.pop %v1501
      %v1505 = vrsqrt.pop %v1502
      %v1506 = vmul.f32 %v1485, %v1503
      %v1507 = vmul.f32 %v1486, %v1504
      %v1508 = vmul.f32 %v1487, %v1505
      %v1509 = vlaneseq
      %v1510 = vshrl.u32 %v1509, 7
      %v1511 = vsub.s32 2, %v1510
      %v1512 = vrot.slane %v636, %v1511
      %v1513 = vmul.f32 %v1506, %v1512
      %v1514 = vmul.f32 %v1507, %v1512
      %v1515 = vmul.f32 %v1508, %v1512
      %v1516 = vlaneseq
      %v1517 = vshrl.u32 %v1516, 7
      %v1518 = vsub.s32 3, %v1517
      %v1519 = vrot.slane %v636, %v1518
      %v1520 = vadd.f32 %v1513, %v1519
      %v1521 = vadd.f32 %v1514, %v1519
      %v1522 = vadd.f32 %v1515, %v1519
      %v1523 = vld [vmem:[%s8] sm:$0xff]
      %v1524 = vld [vmem:[%s8 + $0x8] sm:$0xff]
      %v1525 = vld [vmem:[%s8 + $0x10] sm:$0xff]
      %v1526 = vld [vmem:[%s8 + $0x18] sm:$0xff]
      %v1527 = vld [vmem:[%s8 + $0x20] sm:$0xff]
      %v1528 = vld [vmem:[%s8 + $0x28] sm:$0xff]
      %v1529 = vld [vmem:[%s8 + $0x30] sm:$0xff]
      %v1530 = vld [vmem:[%s8 + $0x38] sm:$0xff]
      %v1531 = vld [vmem:[%s8 + $0x40] sm:$0xff]
      %v1532 = vld [vmem:[%s8 + $0x48] sm:$0xff]
      %v1533 = vld [vmem:[%s8 + $0x50] sm:$0xff]
      %v1534 = vld [vmem:[%s8 + $0x58] sm:$0xff]
      %v1535 = vld [vmem:[%s8 + $0x60] sm:$0xff]
      %v1536 = vld [vmem:[%s8 + $0x68] sm:$0xff]
      %v1537 = vld [vmem:[%s8 + $0x70] sm:$0xff]
      %v1538 = vld [vmem:[%s8 + $0x78] sm:$0xff]
      %v1539 = vlaneseq
      %v1540 = vshrl.u32 %v1539, 7
      %v1541 = vsub.s32 5, %v1540
      %v1542 = vrot.slane %v636, %v1541
      %1543 = vmatprep.subr.mxu0 0.0
      %1544 = vmatpush1.msra.mxu0 %v1538
      %1545 = vmatprep.subr.mxu0 0.0
      %1546 = vmatpush1.msra.mxu0 %v1537
      %1547 = vmatprep.subr.mxu0 0.0
      %1548 = vmatpush1.msra.mxu0 %v1536
      %1549 = vmatprep.subr.mxu0 0.0
      %1550 = vmatpush1.msra.mxu0 %v1535
      %1551 = vmatprep.subr.mxu0 0.0
      %1552 = vmatpush1.msra.mxu0 %v1534
      %1553 = vmatprep.subr.mxu0 0.0
      %1554 = vmatpush1.msra.mxu0 %v1533
      %1555 = vmatprep.subr.mxu0 0.0
      %1556 = vmatpush1.msra.mxu0 %v1532
      %1557 = vmatprep.subr.mxu0 0.0
      %1558 = vmatpush1.msra.mxu0 %v1531
      %1559 = vmatprep.subr.mxu0 0.0
      %1560 = vmatpush1.msra.mxu0 %v1530
      %1561 = vmatprep.subr.mxu0 0.0
      %1562 = vmatpush1.msra.mxu0 %v1529
      %1563 = vmatprep.subr.mxu0 0.0
      %1564 = vmatpush1.msra.mxu0 %v1528
      %1565 = vmatprep.subr.mxu0 0.0
      %1566 = vmatpush1.msra.mxu0 %v1527
      %1567 = vmatprep.subr.mxu0 0.0
      %1568 = vmatpush1.msra.mxu0 %v1526
      %1569 = vmatprep.subr.mxu0 0.0
      %1570 = vmatpush1.msra.mxu0 %v1525
      %1571 = vmatprep.subr.mxu0 0.0
      %1572 = vmatpush1.msra.mxu0 %v1524
      %1573 = vmatprep.subr.mxu0 0.0
      %1574 = vmatpush1.msra.mxu0 %v1523
      %1575 = vmatprep.subr.mxu0 0.0
      %1576 = vmatpush2.msra.mxu0 0.0
      %1577 = vmatprep.subr.mxu0 0.0
      %1578 = vmatpush2.msra.mxu0 0.0
      %1579 = vmatprep.subr.mxu0 0.0
      %1580 = vmatpush2.msra.mxu0 0.0
      %1581 = vmatprep.subr.mxu0 0.0
      %1582 = vmatpush2.msra.mxu0 0.0
      %1583 = vmatprep.subr.mxu0 0.0
      %1584 = vmatpush2.msra.mxu0 0.0
      %1585 = vmatprep.subr.mxu0 0.0
      %1586 = vmatpush2.msra.mxu0 0.0
      %1587 = vmatprep.subr.mxu0 0.0
      %1588 = vmatpush2.msra.mxu0 0.0
      %1589 = vmatprep.subr.mxu0 0.0
      %1590 = vmatpush2.msra.mxu0 0.0
      %1591 = vmatprep.subr.mxu0 0.0
      %1592 = vmatpush2.msra.mxu0 0.0
      %1593 = vmatprep.subr.mxu0 0.0
      %1594 = vmatpush2.msra.mxu0 0.0
      %1595 = vmatprep.subr.mxu0 0.0
      %1596 = vmatpush2.msra.mxu0 0.0
      %1597 = vmatprep.subr.mxu0 0.0
      %1598 = vmatpush2.msra.mxu0 0.0
      %1599 = vmatprep.subr.mxu0 0.0
      %1600 = vmatpush2.msra.mxu0 0.0
      %1601 = vmatprep.subr.mxu0 0.0
      %1602 = vmatpush2.msra.mxu0 0.0
      %1603 = vmatprep.subr.mxu0 0.0
      %1604 = vmatpush2.msra.mxu0 0.0
      %1605 = vmatprep.subr.mxu0 0.0
      %1606 = vmatpush2.msra.mxu0 0.0
      %1607 = vmatprep.mubr.f32.mxu0 0.0
      %1608 = vmatmul.mubr.f32.gmra.mxu0 %v1520
      %v1609 = vpop.f32.mrf.mxu0
      %v1610 = vadd.f32 %v1542, %v1609
      %v1611 = vpop.f32.mrf.mxu0
      %1612 = vmatprep.mubr.f32.mxu0 0.0
      %1613 = vmatmul.mubr.f32.gmra.mxu0 %v1521
      %v1614 = vpop.f32.mrf.mxu0
      %v1615 = vadd.f32 %v1542, %v1614
      %v1616 = vpop.f32.mrf.mxu0
      %1617 = vmatprep.mubr.f32.mxu0 0.0
      %1618 = vmatmul.mubr.f32.gmra.mxu0 %v1522
      %v1619 = vpop.f32.mrf.mxu0
      %v1620 = vadd.f32 %v1542, %v1619
      %v1621 = vpop.f32.mrf.mxu0
      %1622 = vdwg.mxu0
      %v1623 = vmul.f32 %v1610, 1.702
      %v1624 = vmul.f32 %v1615, 1.702
      %v1625 = vmul.f32 %v1620, 1.702
      %v1626 = vxor.u32 %v1623, 2147483648
      %v1627 = vxor.u32 %v1624, 2147483648
      %v1628 = vxor.u32 %v1625, 2147483648
      %v1629 = vmul.f32 %v1626, 1.442695
      %v1630 = vpow.pop %v1629
      %v1631 = vmul.f32 %v1627, 1.442695
      %v1632 = vpow.pop %v1631
      %v1633 = vmul.f32 %v1628, 1.442695
      %v1634 = vpow.pop %v1633
      %v1635 = vadd.f32 %v1630, 1.0
      %v1636 = vadd.f32 %v1632, 1.0
      %v1637 = vadd.f32 %v1634, 1.0
      %v1638 = vrcp.pop %v1635
      %v1639 = vmul.f32 1.0, %v1638
      %v1640 = vrcp.pop %v1636
      %v1641 = vmul.f32 1.0, %v1640
      %v1642 = vrcp.pop %v1637
      %v1643 = vmul.f32 1.0, %v1642
      %v1644 = vmul.f32 %v1610, %v1639
      %v1645 = vmul.f32 %v1615, %v1641
      %v1646 = vmul.f32 %v1620, %v1643
      %v1647 = vld [vmem:[%s9] sm:$0xff]
      %v1648 = vld [vmem:[%s9 + $0x8] sm:$0xff]
      %v1649 = vld [vmem:[%s9 + $0x10] sm:$0xff]
      %v1650 = vld [vmem:[%s9 + $0x18] sm:$0xff]
      %v1651 = vld [vmem:[%s9 + $0x20] sm:$0xff]
      %v1652 = vld [vmem:[%s9 + $0x28] sm:$0xff]
      %v1653 = vld [vmem:[%s9 + $0x30] sm:$0xff]
      %v1654 = vld [vmem:[%s9 + $0x38] sm:$0xff]
      %v1655 = vld [vmem:[%s9 + $0x40] sm:$0xff]
      %v1656 = vld [vmem:[%s9 + $0x48] sm:$0xff]
      %v1657 = vld [vmem:[%s9 + $0x50] sm:$0xff]
      %v1658 = vld [vmem:[%s9 + $0x58] sm:$0xff]
      %v1659 = vld [vmem:[%s9 + $0x60] sm:$0xff]
      %v1660 = vld [vmem:[%s9 + $0x68] sm:$0xff]
      %v1661 = vld [vmem:[%s9 + $0x70] sm:$0xff]
      %v1662 = vld [vmem:[%s9 + $0x78] sm:$0xff]
      %1663 = vmatprep.subr.mxu0 0.0
      %1664 = vmatpush1.msra.mxu0 %v1662
      %1665 = vmatprep.subr.mxu0 0.0
      %1666 = vmatpush1.msra.mxu0 %v1661
      %1667 = vmatprep.subr.mxu0 0.0
      %1668 = vmatpush1.msra.mxu0 %v1660
      %1669 = vmatprep.subr.mxu0 0.0
      %1670 = vmatpush1.msra.mxu0 %v1659
      %1671 = vmatprep.subr.mxu0 0.0
      %1672 = vmatpush1.msra.mxu0 %v1658
      %1673 = vmatprep.subr.mxu0 0.0
      %1674 = vmatpush1.msra.mxu0 %v1657
      %1675 = vmatprep.subr.mxu0 0.0
      %1676 = vmatpush1.msra.mxu0 %v1656
      %1677 = vmatprep.subr.mxu0 0.0
      %1678 = vmatpush1.msra.mxu0 %v1655
      %1679 = vmatprep.subr.mxu0 0.0
      %1680 = vmatpush1.msra.mxu0 %v1654
      %1681 = vmatprep.subr.mxu0 0.0
      %1682 = vmatpush1.msra.mxu0 %v1653
      %1683 = vmatprep.subr.mxu0 0.0
      %1684 = vmatpush1.msra.mxu0 %v1652
      %1685 = vmatprep.subr.mxu0 0.0
      %1686 = vmatpush1.msra.mxu0 %v1651
      %1687 = vmatprep.subr.mxu0 0.0
      %1688 = vmatpush1.msra.mxu0 %v1650
      %1689 = vmatprep.subr.mxu0 0.0
      %1690 = vmatpush1.msra.mxu0 %v1649
      %1691 = vmatprep.subr.mxu0 0.0
      %1692 = vmatpush1.msra.mxu0 %v1648
      %1693 = vmatprep.subr.mxu0 0.0
      %1694 = vmatpush1.msra.mxu0 %v1647
      %1695 = vmatprep.subr.mxu0 0.0
      %1696 = vmatpush2.msra.mxu0 0.0
      %1697 = vmatprep.subr.mxu0 0.0
      %1698 = vmatpush2.msra.mxu0 0.0
      %1699 = vmatprep.subr.mxu0 0.0
      %1700 = vmatpush2.msra.mxu0 0.0
      %1701 = vmatprep.subr.mxu0 0.0
      %1702 = vmatpush2.msra.mxu0 0.0
      %1703 = vmatprep.subr.mxu0 0.0
      %1704 = vmatpush2.msra.mxu0 0.0
      %1705 = vmatprep.subr.mxu0 0.0
      %1706 = vmatpush2.msra.mxu0 0.0
      %1707 = vmatprep.subr.mxu0 0.0
      %1708 = vmatpush2.msra.mxu0 0.0
      %1709 = vmatprep.subr.mxu0 0.0
      %1710 = vmatpush2.msra.mxu0 0.0
      %1711 = vmatprep.subr.mxu0 0.0
      %1712 = vmatpush2.msra.mxu0 0.0
      %1713 = vmatprep.subr.mxu0 0.0
      %1714 = vmatpush2.msra.mxu0 0.0
      %1715 = vmatprep.subr.mxu0 0.0
      %1716 = vmatpush2.msra.mxu0 0.0
      %1717 = vmatprep.subr.mxu0 0.0
      %1718 = vmatpush2.msra.mxu0 0.0
      %1719 = vmatprep.subr.mxu0 0.0
      %1720 = vmatpush2.msra.mxu0 0.0
      %1721 = vmatprep.subr.mxu0 0.0
      %1722 = vmatpush2.msra.mxu0 0.0
      %1723 = vmatprep.subr.mxu0 0.0
      %1724 = vmatpush2.msra.mxu0 0.0
      %1725 = vmatprep.subr.mxu0 0.0
      %1726 = vmatpush2.msra.mxu0 0.0
      %1727 = vmatprep.mubr.f32.mxu0 0.0
      %1728 = vmatmul.mubr.f32.gmra.mxu0 %v1644
      %v1729 = vpop.f32.mrf.mxu0
      %v1730 = vadd.f32 0.0, %v1729
      %v1731 = vpop.f32.mrf.mxu0
      %1732 = vmatprep.mubr.f32.mxu0 0.0
      %1733 = vmatmul.mubr.f32.gmra.mxu0 %v1645
      %v1734 = vpop.f32.mrf.mxu0
      %v1735 = vadd.f32 0.0, %v1734
      %v1736 = vpop.f32.mrf.mxu0
      %1737 = vmatprep.mubr.f32.mxu0 0.0
      %1738 = vmatmul.mubr.f32.gmra.mxu0 %v1646
      %v1739 = vpop.f32.mrf.mxu0
      %v1740 = vadd.f32 0.0, %v1739
      %v1741 = vpop.f32.mrf.mxu0
      %1742 = vdwg.mxu0
      %v1743 = vadd.f32 %v1470, %v1730
      %v1744 = vadd.f32 %v1471, %v1735
      %v1745 = vadd.f32 %v1472, %v1740
      %v1746 = vlaneseq
      %v1747 = vshrl.u32 %v1746, 7
      %v1748 = vsub.s32 6, %v1747
      %v1749 = vrot.slane %v636, %v1748
      %v1750 = vadd.f32 %v1743, %v1749
      %v1751 = vadd.f32 %v1744, %v1749
      %v1752 = vadd.f32 %v1745, %v1749
      %s1753 = scalar_lea.vmem %s10, 8
      %v1754 = vld [vmem:[%s1753] sm:$0xff]
      %1755 = vadd.xlane.f32.xlu0 %v1750
      %v1756 = vpop.xlane.xlu0 %1755
      %1757 = vadd.xlane.f32.xlu0 %v1751
      %v1758 = vpop.xlane.xlu0 %1757
      %1759 = vadd.xlane.f32.xlu0 %v1752
      %v1760 = vpop.xlane.xlu0 %1759
      %v1761 = vmul.f32 %v1756, 0.03125
      %v1762 = vmul.f32 %v1758, 0.03125
      %v1763 = vmul.f32 %v1760, 0.03125
      %v1764 = vsub.f32 %v1750, %v1761
      %v1765 = vsub.f32 %v1751, %v1762
      %v1766 = vsub.f32 %v1752, %v1763
      %v1767 = vmul.f32 %v1764, %v448
      %v1768 = vmul.f32 %v1765, %v448
      %v1769 = vmul.f32 %v1766, %v448
      %v1770 = vmul.f32 %v1767, %v1767
      %v1771 = vmul.f32 %v1768, %v1768
      %v1772 = vmul.f32 %v1769, %v1769
      %1773 = vadd.xlane.f32.xlu0 %v1770
      %v1774 = vpop.xlane.xlu0 %1773
      %1775 = vadd.xlane.f32.xlu0 %v1771
      %v1776 = vpop.xlane.xlu0 %1775
      %1777 = vadd.xlane.f32.xlu0 %v1772
      %v1778 = vpop.xlane.xlu0 %1777
      %v1779 = vmul.f32 %v1774, 0.03125
      %v1780 = vmul.f32 %v1776, 0.03125
      %v1781 = vmul.f32 %v1778, 0.03125
      %v1782 = vadd.f32 %v1779, 1e-05
      %v1783 = vadd.f32 %v1780, 1e-05
      %v1784 = vadd.f32 %v1781, 1e-05
      %v1785 = vrsqrt.pop %v1782
      %v1786 = vrsqrt.pop %v1783
      %v1787 = vrsqrt.pop %v1784
      %v1788 = vmul.f32 %v1767, %v1785
      %v1789 = vmul.f32 %v1768, %v1786
      %v1790 = vmul.f32 %v1769, %v1787
      %v1791 = vlaneseq
      %v1792 = vshrl.u32 %v1791, 7
      %v1793 = vsub.s32 0, %v1792
      %v1794 = vrot.slane %v1754, %v1793
      %v1795 = vmul.f32 %v1788, %v1794
      %v1796 = vmul.f32 %v1789, %v1794
      %v1797 = vmul.f32 %v1790, %v1794
      %v1798 = vlaneseq
      %v1799 = vshrl.u32 %v1798, 7
      %v1800 = vsub.s32 1, %v1799
      %v1801 = vrot.slane %v1754, %v1800
      %v1802 = vadd.f32 %v1795, %v1801
      %v1803 = vadd.f32 %v1796, %v1801
      %v1804 = vadd.f32 %v1797, %v1801
      %s1805 = scalar_lea.vmem %s5, 384
      %v1806 = vld [vmem:[%s1805] sm:$0xff]
      %v1807 = vld [vmem:[%s1805 + $0x8] sm:$0xff]
      %v1808 = vld [vmem:[%s1805 + $0x10] sm:$0xff]
      %v1809 = vld [vmem:[%s1805 + $0x18] sm:$0xff]
      %v1810 = vld [vmem:[%s1805 + $0x20] sm:$0xff]
      %v1811 = vld [vmem:[%s1805 + $0x28] sm:$0xff]
      %v1812 = vld [vmem:[%s1805 + $0x30] sm:$0xff]
      %v1813 = vld [vmem:[%s1805 + $0x38] sm:$0xff]
      %v1814 = vld [vmem:[%s1805 + $0x40] sm:$0xff]
      %v1815 = vld [vmem:[%s1805 + $0x48] sm:$0xff]
      %v1816 = vld [vmem:[%s1805 + $0x50] sm:$0xff]
      %v1817 = vld [vmem:[%s1805 + $0x58] sm:$0xff]
      %v1818 = vld [vmem:[%s1805 + $0x60] sm:$0xff]
      %v1819 = vld [vmem:[%s1805 + $0x68] sm:$0xff]
      %v1820 = vld [vmem:[%s1805 + $0x70] sm:$0xff]
      %v1821 = vld [vmem:[%s1805 + $0x78] sm:$0xff]
      %v1822 = vld [vmem:[%s1805 + $0x80] sm:$0xff]
      %v1823 = vld [vmem:[%s1805 + $0x88] sm:$0xff]
      %v1824 = vld [vmem:[%s1805 + $0x90] sm:$0xff]
      %v1825 = vld [vmem:[%s1805 + $0x98] sm:$0xff]
      %v1826 = vld [vmem:[%s1805 + $0xa0] sm:$0xff]
      %v1827 = vld [vmem:[%s1805 + $0xa8] sm:$0xff]
      %v1828 = vld [vmem:[%s1805 + $0xb0] sm:$0xff]
      %v1829 = vld [vmem:[%s1805 + $0xb8] sm:$0xff]
      %v1830 = vld [vmem:[%s1805 + $0xc0] sm:$0xff]
      %v1831 = vld [vmem:[%s1805 + $0xc8] sm:$0xff]
      %v1832 = vld [vmem:[%s1805 + $0xd0] sm:$0xff]
      %v1833 = vld [vmem:[%s1805 + $0xd8] sm:$0xff]
      %v1834 = vld [vmem:[%s1805 + $0xe0] sm:$0xff]
      %v1835 = vld [vmem:[%s1805 + $0xe8] sm:$0xff]
      %v1836 = vld [vmem:[%s1805 + $0xf0] sm:$0xff]
      %v1837 = vld [vmem:[%s1805 + $0xf8] sm:$0xff]
      %v1838 = vld [vmem:[%s1805 + $0x100] sm:$0xff]
      %v1839 = vld [vmem:[%s1805 + $0x108] sm:$0xff]
      %v1840 = vld [vmem:[%s1805 + $0x110] sm:$0xff]
      %v1841 = vld [vmem:[%s1805 + $0x118] sm:$0xff]
      %v1842 = vld [vmem:[%s1805 + $0x120] sm:$0xff]
      %v1843 = vld [vmem:[%s1805 + $0x128] sm:$0xff]
      %v1844 = vld [vmem:[%s1805 + $0x130] sm:$0xff]
      %v1845 = vld [vmem:[%s1805 + $0x138] sm:$0xff]
      %v1846 = vld [vmem:[%s1805 + $0x140] sm:$0xff]
      %v1847 = vld [vmem:[%s1805 + $0x148] sm:$0xff]
      %v1848 = vld [vmem:[%s1805 + $0x150] sm:$0xff]
      %v1849 = vld [vmem:[%s1805 + $0x158] sm:$0xff]
      %v1850 = vld [vmem:[%s1805 + $0x160] sm:$0xff]
      %v1851 = vld [vmem:[%s1805 + $0x168] sm:$0xff]
      %v1852 = vld [vmem:[%s1805 + $0x170] sm:$0xff]
      %v1853 = vld [vmem:[%s1805 + $0x178] sm:$0xff]
      %s1854 = scalar_lea.vmem %s6, 3
      %v1855 = vld [vmem:[%s1854] sm:$0x7]
      %v1857 = vlaneseq
      %v1858 = vshrl.u32 %v1857, 7
      %v1859 = vsub.s32 0, %v1858
      %v1860 = vrot.slane %v1855, %v1859
      %v1861 = vlaneseq
      %v1862 = vshrl.u32 %v1861, 7
      %v1863 = vsub.s32 1, %v1862
      %v1864 = vrot.slane %v1855, %v1863
      %v1865 = vlaneseq
      %v1866 = vshrl.u32 %v1865, 7
      %v1867 = vsub.s32 2, %v1866
      %v1868 = vrot.slane %v1855, %v1867
      %1872 = vmatprep.subr.mxu0 %v1852
      %1873 = vmatpush1.msra.mxu0 %v1851
      %1874 = vmatprep.subr.mxu0 %v1849
      %1875 = vmatpush1.msra.mxu0 %v1848
      %1876 = vmatprep.subr.mxu0 %v1846
      %1877 = vmatpush1.msra.mxu0 %v1845
      %1878 = vmatprep.subr.mxu0 %v1843
      %1879 = vmatpush1.msra.mxu0 %v1842
      %1880 = vmatprep.subr.mxu0 %v1840
      %1881 = vmatpush1.msra.mxu0 %v1839
      %1882 = vmatprep.subr.mxu0 %v1837
      %1883 = vmatpush1.msra.mxu0 %v1836
      %1884 = vmatprep.subr.mxu0 %v1834
      %1885 = vmatpush1.msra.mxu0 %v1833
      %1886 = vmatprep.subr.mxu0 %v1831
      %1887 = vmatpush1.msra.mxu0 %v1830
      %1888 = vmatprep.subr.mxu0 %v1828
      %1889 = vmatpush1.msra.mxu0 %v1827
      %1890 = vmatprep.subr.mxu0 %v1825
      %1891 = vmatpush1.msra.mxu0 %v1824
      %1892 = vmatprep.subr.mxu0 %v1822
      %1893 = vmatpush1.msra.mxu0 %v1821
      %1894 = vmatprep.subr.mxu0 %v1819
      %1895 = vmatpush1.msra.mxu0 %v1818
      %1896 = vmatprep.subr.mxu0 %v1816
      %1897 = vmatpush1.msra.mxu0 %v1815
      %1898 = vmatprep.subr.mxu0 %v1813
      %1899 = vmatpush1.msra.mxu0 %v1812
      %1900 = vmatprep.subr.mxu0 %v1810
      %1901 = vmatpush1.msra.mxu0 %v1809
      %1902 = vmatprep.subr.mxu0 %v1807
      %1903 = vmatpush1.msra.mxu0 %v1806
      %1904 = vmatprep.subr.mxu0 0.0
      %1905 = vmatpush2.msra.mxu0 0.0
      %1906 = vmatprep.subr.mxu0 0.0
      %1907 = vmatpush2.msra.mxu0 0.0
      %1908 = vmatprep.subr.mxu0 0.0
      %1909 = vmatpush2.msra.mxu0 0.0
      %1910 = vmatprep.subr.mxu0 0.0
      %1911 = vmatpush2.msra.mxu0 0.0
      %1912 = vmatprep.subr.mxu0 0.0
      %1913 = vmatpush2.msra.mxu0 0.0
      %1914 = vmatprep.subr.mxu0 0.0
      %1915 = vmatpush2.msra.mxu0 0.0
      %1916 = vmatprep.subr.mxu0 0.0
      %1917 = vmatpush2.msra.mxu0 0.0
      %1918 = vmatprep.subr.mxu0 0.0
      %1919 = vmatpush2.msra.mxu0 0.0
      %1920 = vmatprep.subr.mxu0 0.0
      %1921 = vmatpush2.msra.mxu0 0.0
      %1922 = vmatprep.subr.mxu0 0.0
      %1923 = vmatpush2.msra.mxu0 0.0
      %1924 = vmatprep.subr.mxu0 0.0
      %1925 = vmatpush2.msra.mxu0 0.0
      %1926 = vmatprep.subr.mxu0 0.0
      %1927 = vmatpush2.msra.mxu0 0.0
      %1928 = vmatprep.subr.mxu0 0.0
      %1929 = vmatpush2.msra.mxu0 0.0
      %1930 = vmatprep.subr.mxu0 0.0
      %1931 = vmatpush2.msra.mxu0 0.0
      %1932 = vmatprep.subr.mxu0 0.0
      %1933 = vmatpush2.msra.mxu0 0.0
      %1934 = vmatprep.subr.mxu0 0.0
      %1935 = vmatpush2.msra.mxu0 0.0
      %1936 = vmatprep.mubr.f32.mxu0 0.0
      %1937 = vmatmul.mubr.f32.gmra.mxu0 %v1802
      %v1938 = vpop.f32.mrf.mxu0
      %v1939 = vadd.f32 %v1860, %v1938
      %v1940 = vpop.f32.mrf.mxu0
      %v1941 = vadd.f32 %v1864, %v1940
      %1942 = vmatprep.mubr.f32.mxu0 0.0
      %1943 = vmatmul.mubr.f32.gmra.mxu0 %v1803
      %v1944 = vpop.f32.mrf.mxu0
      %v1945 = vadd.f32 %v1860, %v1944
      %v1946 = vpop.f32.mrf.mxu0
      %v1947 = vadd.f32 %v1864, %v1946
      %1948 = vmatprep.mubr.f32.mxu0 0.0
      %1949 = vmatmul.mubr.f32.gmra.mxu0 %v1804
      %v1950 = vpop.f32.mrf.mxu0
      %v1951 = vadd.f32 %v1860, %v1950
      %v1952 = vpop.f32.mrf.mxu0
      %v1953 = vadd.f32 %v1864, %v1952
      %1954 = vdwg.mxu0
      %1955 = vmatprep.subr.mxu0 0.0
      %1956 = vmatpush1.msra.mxu0 %v1853
      %1957 = vmatprep.subr.mxu0 0.0
      %1958 = vmatpush1.msra.mxu0 %v1850
      %1959 = vmatprep.subr.mxu0 0.0
      %1960 = vmatpush1.msra.mxu0 %v1847
      %1961 = vmatprep.subr.mxu0 0.0
      %1962 = vmatpush1.msra.mxu0 %v1844
      %1963 = vmatprep.subr.mxu0 0.0
      %1964 = vmatpush1.msra.mxu0 %v1841
      %1965 = vmatprep.subr.mxu0 0.0
      %1966 = vmatpush1.msra.mxu0 %v1838
      %1967 = vmatprep.subr.mxu0 0.0
      %1968 = vmatpush1.msra.mxu0 %v1835
      %1969 = vmatprep.subr.mxu0 0.0
      %1970 = vmatpush1.msra.mxu0 %v1832
      %1971 = vmatprep.subr.mxu0 0.0
      %1972 = vmatpush1.msra.mxu0 %v1829
      %1973 = vmatprep.subr.mxu0 0.0
      %1974 = vmatpush1.msra.mxu0 %v1826
      %1975 = vmatprep.subr.mxu0 0.0
      %1976 = vmatpush1.msra.mxu0 %v1823
      %1977 = vmatprep.subr.mxu0 0.0
      %1978 = vmatpush1.msra.mxu0 %v1820
      %1979 = vmatprep.subr.mxu0 0.0
      %1980 = vmatpush1.msra.mxu0 %v1817
      %1981 = vmatprep.subr.mxu0 0.0
      %1982 = vmatpush1.msra.mxu0 %v1814
      %1983 = vmatprep.subr.mxu0 0.0
      %1984 = vmatpush1.msra.mxu0 %v1811
      %1985 = vmatprep.subr.mxu0 0.0
      %1986 = vmatpush1.msra.mxu0 %v1808
      %1987 = vmatprep.subr.mxu0 0.0
      %1988 = vmatpush2.msra.mxu0 0.0
      %1989 = vmatprep.subr.mxu0 0.0
      %1990 = vmatpush2.msra.mxu0 0.0
      %1991 = vmatprep.subr.mxu0 0.0
      %1992 = vmatpush2.msra.mxu0 0.0
      %1993 = vmatprep.subr.mxu0 0.0
      %1994 = vmatpush2.msra.mxu0 0.0
      %1995 = vmatprep.subr.mxu0 0.0
      %1996 = vmatpush2.msra.mxu0 0.0
      %1997 = vmatprep.subr.mxu0 0.0
      %1998 = vmatpush2.msra.mxu0 0.0
      %1999 = vmatprep.subr.mxu0 0.0
      %2000 = vmatpush2.msra.mxu0 0.0
      %2001 = vmatprep.subr.mxu0 0.0
      %2002 = vmatpush2.msra.mxu0 0.0
      %2003 = vmatprep.subr.mxu0 0.0
      %2004 = vmatpush2.msra.mxu0 0.0
      %2005 = vmatprep.subr.mxu0 0.0
      %2006 = vmatpush2.msra.mxu0 0.0
      %2007 = vmatprep.subr.mxu0 0.0
      %2008 = vmatpush2.msra.mxu0 0.0
      %2009 = vmatprep.subr.mxu0 0.0
      %2010 = vmatpush2.msra.mxu0 0.0
      %2011 = vmatprep.subr.mxu0 0.0
      %2012 = vmatpush2.msra.mxu0 0.0
      %2013 = vmatprep.subr.mxu0 0.0
      %2014 = vmatpush2.msra.mxu0 0.0
      %2015 = vmatprep.subr.mxu0 0.0
      %2016 = vmatpush2.msra.mxu0 0.0
      %2017 = vmatprep.subr.mxu0 0.0
      %2018 = vmatpush2.msra.mxu0 0.0
      %2019 = vmatprep.mubr.f32.mxu0 0.0
      %2020 = vmatmul.mubr.f32.gmra.mxu0 %v1802
      %v2021 = vpop.f32.mrf.mxu0
      %v2022 = vadd.f32 %v1868, %v2021
      %v2023 = vpop.f32.mrf.mxu0
      %2024 = vmatprep.mubr.f32.mxu0 0.0
      %2025 = vmatmul.mubr.f32.gmra.mxu0 %v1803
      %v2026 = vpop.f32.mrf.mxu0
      %v2027 = vadd.f32 %v1868, %v2026
      %v2028 = vpop.f32.mrf.mxu0
      %2029 = vmatprep.mubr.f32.mxu0 0.0
      %2030 = vmatmul.mubr.f32.gmra.mxu0 %v1804
      %v2031 = vpop.f32.mrf.mxu0
      %v2032 = vadd.f32 %v1868, %v2031
      %v2033 = vpop.f32.mrf.mxu0
      %2034 = vdwg.mxu0
      %v2035 = vmul.f32 %v1939, %v624
      %v2036 = vmul.f32 %v1945, %v625
      %v2037 = vmul.f32 %v1951, %v626
      %v2038 = vmul.f32 %v1939, %v627
      %v2039 = vmul.f32 %v1945, %v628
      %v2040 = vmul.f32 %v1951, %v629
      %v2041 = vmul.f32 %v1939, %v630
      %v2042 = vmul.f32 %v1945, %v631
      %v2043 = vmul.f32 %v1951, %v632
      %v2044 = vmul.f32 %v1939, %v633
      %v2045 = vmul.f32 %v1945, %v634
      %v2046 = vmul.f32 %v1951, %v635
      %2047 = vmatprep.subr.mxu0 0.0
      %2048 = vmatpush1.xpose.msra.mxu0 0.0
      %2049 = vmatprep.subr.mxu0 0.0
      %2050 = vmatpush1.xpose.msra.mxu0 0.0
      %2051 = vmatprep.subr.mxu0 0.0
      %2052 = vmatpush1.xpose.msra.mxu0 0.0
      %2053 = vmatprep.subr.mxu0 0.0
      %2054 = vmatpush1.xpose.msra.mxu0 0.0
      %2055 = vmatprep.subr.mxu0 0.0
      %2056 = vmatpush1.xpose.msra.mxu0 0.0
      %2057 = vmatprep.subr.mxu0 0.0
      %2058 = vmatpush1.xpose.msra.mxu0 0.0
      %2059 = vmatprep.subr.mxu0 0.0
      %2060 = vmatpush1.xpose.msra.mxu0 0.0
      %2061 = vmatprep.subr.mxu0 0.0
      %2062 = vmatpush1.xpose.msra.mxu0 0.0
      %2063 = vmatprep.subr.mxu0 0.0
      %2064 = vmatpush1.xpose.msra.mxu0 0.0
      %2065 = vmatprep.subr.mxu0 0.0
      %2066 = vmatpush1.xpose.msra.mxu0 0.0
      %2067 = vmatprep.subr.mxu0 0.0
      %2068 = vmatpush1.xpose.msra.mxu0 0.0
      %2069 = vmatprep.subr.mxu0 0.0
      %2070 = vmatpush1.xpose.msra.mxu0 0.0
      %2071 = vmatprep.subr.mxu0 0.0
      %2072 = vmatpush1.xpose.msra.mxu0 0.0
      %2073 = vmatprep.subr.mxu0 0.0
      %2074 = vmatpush1.xpose.msra.mxu0 %v1953
      %2075 = vmatprep.subr.mxu0 0.0
      %2076 = vmatpush1.xpose.msra.mxu0 %v1947
      %2077 = vmatprep.subr.mxu0 0.0
      %2078 = vmatpush1.xpose.msra.mxu0 %v1941
      %2079 = vmatprep.subr.mxu0 0.0
      %2080 = vmatpush2.xpose.msra.mxu0 0.0
      %2081 = vmatprep.subr.mxu0 0.0
      %2082 = vmatpush2.xpose.msra.mxu0 0.0
      %2083 = vmatprep.subr.mxu0 0.0
      %2084 = vmatpush2.xpose.msra.mxu0 0.0
      %2085 = vmatprep.subr.mxu0 0.0
      %2086 = vmatpush2.xpose.msra.mxu0 0.0
      %2087 = vmatprep.subr.mxu0 0.0
      %2088 = vmatpush2.xpose.msra.mxu0 0.0
      %2089 = vmatprep.subr.mxu0 0.0
      %2090 = vmatpush2.xpose.msra.mxu0 0.0
      %2091 = vmatprep.subr.mxu0 0.0
      %2092 = vmatpush2.xpose.msra.mxu0 0.0
      %2093 = vmatprep.subr.mxu0 0.0
      %2094 = vmatpush2.xpose.msra.mxu0 0.0
      %2095 = vmatprep.subr.mxu0 0.0
      %2096 = vmatpush2.xpose.msra.mxu0 0.0
      %2097 = vmatprep.subr.mxu0 0.0
      %2098 = vmatpush2.xpose.msra.mxu0 0.0
      %2099 = vmatprep.subr.mxu0 0.0
      %2100 = vmatpush2.xpose.msra.mxu0 0.0
      %2101 = vmatprep.subr.mxu0 0.0
      %2102 = vmatpush2.xpose.msra.mxu0 0.0
      %2103 = vmatprep.subr.mxu0 0.0
      %2104 = vmatpush2.xpose.msra.mxu0 0.0
      %2105 = vmatprep.subr.mxu0 0.0
      %2106 = vmatpush2.xpose.msra.mxu0 0.0
      %2107 = vmatprep.subr.mxu0 0.0
      %2108 = vmatpush2.xpose.msra.mxu0 0.0
      %2109 = vmatprep.subr.mxu0 0.0
      %2110 = vmatpush2.xpose.msra.mxu0 0.0
      %2111 = vmatprep.mubr.f32.mxu0 0.0
      %2112 = vmatmul.mubr.f32.gmra.mxu0 %v2035
      %v2113 = vpop.f32.mrf.mxu0
      %v2114 = vadd.f32 %v450, %v2113
      %v2115 = vpop.f32.mrf.mxu0
      %2116 = vmatprep.mubr.f32.mxu0 0.0
      %2117 = vmatmul.mubr.f32.gmra.mxu0 %v2036
      %v2118 = vpop.f32.mrf.mxu0
      %v2119 = vadd.f32 %v450, %v2118
      %v2120 = vpop.f32.mrf.mxu0
      %2121 = vmatprep.mubr.f32.mxu0 0.0
      %2122 = vmatmul.mubr.f32.gmra.mxu0 %v2037
      %v2123 = vpop.f32.mrf.mxu0
      %v2124 = vadd.f32 %v450, %v2123
      %v2125 = vpop.f32.mrf.mxu0
      %2126 = vmatprep.mubr.f32.mxu0 0.0
      %2127 = vmatmul.mubr.f32.gmra.mxu0 %v2038
      %v2128 = vpop.f32.mrf.mxu0
      %v2129 = vadd.f32 %v450, %v2128
      %v2130 = vpop.f32.mrf.mxu0
      %2131 = vmatprep.mubr.f32.mxu0 0.0
      %2132 = vmatmul.mubr.f32.gmra.mxu0 %v2039
      %v2133 = vpop.f32.mrf.mxu0
      %v2134 = vadd.f32 %v450, %v2133
      %v2135 = vpop.f32.mrf.mxu0
      %2136 = vmatprep.mubr.f32.mxu0 0.0
      %2137 = vmatmul.mubr.f32.gmra.mxu0 %v2040
      %v2138 = vpop.f32.mrf.mxu0
      %v2139 = vadd.f32 %v450, %v2138
      %v2140 = vpop.f32.mrf.mxu0
      %2141 = vmatprep.mubr.f32.mxu0 0.0
      %2142 = vmatmul.mubr.f32.gmra.mxu0 %v2041
      %v2143 = vpop.f32.mrf.mxu0
      %v2144 = vadd.f32 %v450, %v2143
      %v2145 = vpop.f32.mrf.mxu0
      %2146 = vmatprep.mubr.f32.mxu0 0.0
      %2147 = vmatmul.mubr.f32.gmra.mxu0 %v2042
      %v2148 = vpop.f32.mrf.mxu0
      %v2149 = vadd.f32 %v450, %v2148
      %v2150 = vpop.f32.mrf.mxu0
      %2151 = vmatprep.mubr.f32.mxu0 0.0
      %2152 = vmatmul.mubr.f32.gmra.mxu0 %v2043
      %v2153 = vpop.f32.mrf.mxu0
      %v2154 = vadd.f32 %v450, %v2153
      %v2155 = vpop.f32.mrf.mxu0
      %2156 = vmatprep.mubr.f32.mxu0 0.0
      %2157 = vmatmul.mubr.f32.gmra.mxu0 %v2044
      %v2158 = vpop.f32.mrf.mxu0
      %v2159 = vadd.f32 %v450, %v2158
      %v2160 = vpop.f32.mrf.mxu0
      %2161 = vmatprep.mubr.f32.mxu0 0.0
      %2162 = vmatmul.mubr.f32.gmra.mxu0 %v2045
      %v2163 = vpop.f32.mrf.mxu0
      %v2164 = vadd.f32 %v450, %v2163
      %v2165 = vpop.f32.mrf.mxu0
      %2166 = vmatprep.mubr.f32.mxu0 0.0
      %2167 = vmatmul.mubr.f32.gmra.mxu0 %v2046
      %v2168 = vpop.f32.mrf.mxu0
      %v2169 = vadd.f32 %v450, %v2168
      %v2170 = vpop.f32.mrf.mxu0
      %2171 = vdwg.mxu0
      %v2172 = vsel %vm1052, %v2114, -inf
      %2173 = vmax.xlane.f32.xlu0 %v2172
      %v2174 = vpop.xlane.xlu0 %2173
      %v2175 = vsel %vm1052, %v2119, -inf
      %2176 = vmax.xlane.f32.xlu0 %v2175
      %v2177 = vpop.xlane.xlu0 %2176
      %v2178 = vsel %vm1052, %v2124, -inf
      %2179 = vmax.xlane.f32.xlu0 %v2178
      %v2180 = vpop.xlane.xlu0 %2179
      %v2181 = vsel %vm1052, %v2129, -inf
      %2182 = vmax.xlane.f32.xlu0 %v2181
      %v2183 = vpop.xlane.xlu0 %2182
      %v2184 = vsel %vm1052, %v2134, -inf
      %2185 = vmax.xlane.f32.xlu0 %v2184
      %v2186 = vpop.xlane.xlu0 %2185
      %v2187 = vsel %vm1052, %v2139, -inf
      %2188 = vmax.xlane.f32.xlu0 %v2187
      %v2189 = vpop.xlane.xlu0 %2188
      %v2190 = vsel %vm1052, %v2144, -inf
      %2191 = vmax.xlane.f32.xlu0 %v2190
      %v2192 = vpop.xlane.xlu0 %2191
      %v2193 = vsel %vm1052, %v2149, -inf
      %2194 = vmax.xlane.f32.xlu0 %v2193
      %v2195 = vpop.xlane.xlu0 %2194
      %v2196 = vsel %vm1052, %v2154, -inf
      %2197 = vmax.xlane.f32.xlu0 %v2196
      %v2198 = vpop.xlane.xlu0 %2197
      %v2199 = vsel %vm1052, %v2159, -inf
      %2200 = vmax.xlane.f32.xlu0 %v2199
      %v2201 = vpop.xlane.xlu0 %2200
      %v2202 = vsel %vm1052, %v2164, -inf
      %2203 = vmax.xlane.f32.xlu0 %v2202
      %v2204 = vpop.xlane.xlu0 %2203
      %v2205 = vsel %vm1052, %v2169, -inf
      %2206 = vmax.xlane.f32.xlu0 %v2205
      %v2207 = vpop.xlane.xlu0 %2206
      %v2208 = vsub.f32 %v2114, %v2174
      %v2209 = vsub.f32 %v2119, %v2177
      %v2210 = vsub.f32 %v2124, %v2180
      %v2211 = vsub.f32 %v2129, %v2183
      %v2212 = vsub.f32 %v2134, %v2186
      %v2213 = vsub.f32 %v2139, %v2189
      %v2214 = vsub.f32 %v2144, %v2192
      %v2215 = vsub.f32 %v2149, %v2195
      %v2216 = vsub.f32 %v2154, %v2198
      %v2217 = vsub.f32 %v2159, %v2201
      %v2218 = vsub.f32 %v2164, %v2204
      %v2219 = vsub.f32 %v2169, %v2207
      %v2220 = vmul.f32 %v2208, 1.442695
      %v2221 = vpow.pop %v2220
      %v2222 = vmul.f32 %v2209, 1.442695
      %v2223 = vpow.pop %v2222
      %v2224 = vmul.f32 %v2210, 1.442695
      %v2225 = vpow.pop %v2224
      %v2226 = vmul.f32 %v2211, 1.442695
      %v2227 = vpow.pop %v2226
      %v2228 = vmul.f32 %v2212, 1.442695
      %v2229 = vpow.pop %v2228
      %v2230 = vmul.f32 %v2213, 1.442695
      %v2231 = vpow.pop %v2230
      %v2232 = vmul.f32 %v2214, 1.442695
      %v2233 = vpow.pop %v2232
      %v2234 = vmul.f32 %v2215, 1.442695
      %v2235 = vpow.pop %v2234
      %v2236 = vmul.f32 %v2216, 1.442695
      %v2237 = vpow.pop %v2236
      %v2238 = vmul.f32 %v2217, 1.442695
      %v2239 = vpow.pop %v2238
      %v2240 = vmul.f32 %v2218, 1.442695
      %v2241 = vpow.pop %v2240
      %v2242 = vmul.f32 %v2219, 1.442695
      %v2243 = vpow.pop %v2242
      %v2244 = vsel %vm1052, %v2221, 0.0
      %2245 = vadd.xlane.f32.xlu0 %v2244
      %v2246 = vpop.xlane.xlu0 %2245
      %v2247 = vsel %vm1052, %v2223, 0.0
      %2248 = vadd.xlane.f32.xlu0 %v2247
      %v2249 = vpop.xlane.xlu0 %2248
      %v2250 = vsel %vm1052, %v2225, 0.0
      %2251 = vadd.xlane.f32.xlu0 %v2250
      %v2252 = vpop.xlane.xlu0 %2251
      %v2253 = vsel %vm1052, %v2227, 0.0
      %2254 = vadd.xlane.f32.xlu0 %v2253
      %v2255 = vpop.xlane.xlu0 %2254
      %v2256 = vsel %vm1052, %v2229, 0.0
      %2257 = vadd.xlane.f32.xlu0 %v2256
      %v2258 = vpop.xlane.xlu0 %2257
      %v2259 = vsel %vm1052, %v2231, 0.0
      %2260 = vadd.xlane.f32.xlu0 %v2259
      %v2261 = vpop.xlane.xlu0 %2260
      %v2262 = vsel %vm1052, %v2233, 0.0
      %2263 = vadd.xlane.f32.xlu0 %v2262
      %v2264 = vpop.xlane.xlu0 %2263
      %v2265 = vsel %vm1052, %v2235, 0.0
      %2266 = vadd.xlane.f32.xlu0 %v2265
      %v2267 = vpop.xlane.xlu0 %2266
      %v2268 = vsel %vm1052, %v2237, 0.0
      %2269 = vadd.xlane.f32.xlu0 %v2268
      %v2270 = vpop.xlane.xlu0 %2269
      %v2271 = vsel %vm1052, %v2239, 0.0
      %2272 = vadd.xlane.f32.xlu0 %v2271
      %v2273 = vpop.xlane.xlu0 %2272
      %v2274 = vsel %vm1052, %v2241, 0.0
      %2275 = vadd.xlane.f32.xlu0 %v2274
      %v2276 = vpop.xlane.xlu0 %2275
      %v2277 = vsel %vm1052, %v2243, 0.0
      %2278 = vadd.xlane.f32.xlu0 %v2277
      %v2279 = vpop.xlane.xlu0 %2278
      %v2280 = vrcp.pop %v2246
      %v2281 = vrcp.pop %v2249
      %v2282 = vrcp.pop %v2252
      %v2283 = vrcp.pop %v2255
      %v2284 = vrcp.pop %v2258
      %v2285 = vrcp.pop %v2261
      %v2286 = vrcp.pop %v2264
      %v2287 = vrcp.pop %v2267
      %v2288 = vrcp.pop %v2270
      %v2289 = vrcp.pop %v2273
      %v2290 = vrcp.pop %v2276
      %v2291 = vrcp.pop %v2279
      %v2292 = vmul.f32 %v2221, %v2280
      %v2293 = vmul.f32 %v2223, %v2281
      %v2294 = vmul.f32 %v2225, %v2282
      %v2295 = vmul.f32 %v2227, %v2283
      %v2296 = vmul.f32 %v2229, %v2284
      %v2297 = vmul.f32 %v2231, %v2285
      %v2298 = vmul.f32 %v2233, %v2286
      %v2299 = vmul.f32 %v2235, %v2287
      %v2300 = vmul.f32 %v2237, %v2288
      %v2301 = vmul.f32 %v2239, %v2289
      %v2302 = vmul.f32 %v2241, %v2290
      %v2303 = vmul.f32 %v2243, %v2291
      %v2305 = vsel %vm1052, %v2292, 0
      %v2308 = vsel %vm1052, %v2293, 0
      %v2311 = vsel %vm1052, %v2294, 0
      %v2314 = vsel %vm1052, %v2295, 0
      %v2317 = vsel %vm1052, %v2296, 0
      %v2320 = vsel %vm1052, %v2297, 0
      %v2323 = vsel %vm1052, %v2298, 0
      %v2326 = vsel %vm1052, %v2299, 0
      %v2329 = vsel %vm1052, %v2300, 0
      %v2332 = vsel %vm1052, %v2301, 0
      %v2335 = vsel %vm1052, %v2302, 0
      %v2338 = vsel %vm1052, %v2303, 0
      %2340 = vmatprep.subr.mxu0 0.0
      %2341 = vmatpush1.msra.mxu0 0.0
      %2342 = vmatprep.subr.mxu0 0.0
      %2343 = vmatpush1.msra.mxu0 0.0
      %2344 = vmatprep.subr.mxu0 0.0
      %2345 = vmatpush1.msra.mxu0 0.0
      %2346 = vmatprep.subr.mxu0 0.0
      %2347 = vmatpush1.msra.mxu0 0.0
      %2348 = vmatprep.subr.mxu0 0.0
      %2349 = vmatpush1.msra.mxu0 0.0
      %2350 = vmatprep.subr.mxu0 0.0
      %2351 = vmatpush1.msra.mxu0 0.0
      %2352 = vmatprep.subr.mxu0 0.0
      %2353 = vmatpush1.msra.mxu0 0.0
      %2354 = vmatprep.subr.mxu0 0.0
      %2355 = vmatpush1.msra.mxu0 0.0
      %2356 = vmatprep.subr.mxu0 0.0
      %2357 = vmatpush1.msra.mxu0 0.0
      %2358 = vmatprep.subr.mxu0 0.0
      %2359 = vmatpush1.msra.mxu0 0.0
      %2360 = vmatprep.subr.mxu0 0.0
      %2361 = vmatpush1.msra.mxu0 0.0
      %2362 = vmatprep.subr.mxu0 0.0
      %2363 = vmatpush1.msra.mxu0 0.0
      %2364 = vmatprep.subr.mxu0 0.0
      %2365 = vmatpush1.msra.mxu0 0.0
      %2366 = vmatprep.subr.mxu0 0.0
      %2367 = vmatpush1.msra.mxu0 %v2032
      %2368 = vmatprep.subr.mxu0 0.0
      %2369 = vmatpush1.msra.mxu0 %v2027
      %2370 = vmatprep.subr.mxu0 0.0
      %2371 = vmatpush1.msra.mxu0 %v2022
      %2372 = vmatprep.subr.mxu0 0.0
      %2373 = vmatpush2.msra.mxu0 0.0
      %2374 = vmatprep.subr.mxu0 0.0
      %2375 = vmatpush2.msra.mxu0 0.0
      %2376 = vmatprep.subr.mxu0 0.0
      %2377 = vmatpush2.msra.mxu0 0.0
      %2378 = vmatprep.subr.mxu0 0.0
      %2379 = vmatpush2.msra.mxu0 0.0
      %2380 = vmatprep.subr.mxu0 0.0
      %2381 = vmatpush2.msra.mxu0 0.0
      %2382 = vmatprep.subr.mxu0 0.0
      %2383 = vmatpush2.msra.mxu0 0.0
      %2384 = vmatprep.subr.mxu0 0.0
      %2385 = vmatpush2.msra.mxu0 0.0
      %2386 = vmatprep.subr.mxu0 0.0
      %2387 = vmatpush2.msra.mxu0 0.0
      %2388 = vmatprep.subr.mxu0 0.0
      %2389 = vmatpush2.msra.mxu0 0.0
      %2390 = vmatprep.subr.mxu0 0.0
      %2391 = vmatpush2.msra.mxu0 0.0
      %2392 = vmatprep.subr.mxu0 0.0
      %2393 = vmatpush2.msra.mxu0 0.0
      %2394 = vmatprep.subr.mxu0 0.0
      %2395 = vmatpush2.msra.mxu0 0.0
      %2396 = vmatprep.subr.mxu0 0.0
      %2397 = vmatpush2.msra.mxu0 0.0
      %2398 = vmatprep.subr.mxu0 0.0
      %2399 = vmatpush2.msra.mxu0 0.0
      %2400 = vmatprep.subr.mxu0 0.0
      %2401 = vmatpush2.msra.mxu0 0.0
      %2402 = vmatprep.subr.mxu0 0.0
      %2403 = vmatpush2.msra.mxu0 0.0
      %2404 = vmatprep.mubr.f32.mxu0 0.0
      %2405 = vmatmul.mubr.f32.gmra.mxu0 %v2305
      %v2406 = vpop.f32.mrf.mxu0
      %v2407 = vadd.f32 0.0, %v2406
      %v2408 = vpop.f32.mrf.mxu0
      %2409 = vmatprep.mubr.f32.mxu0 0.0
      %2410 = vmatmul.mubr.f32.gmra.mxu0 %v2308
      %v2411 = vpop.f32.mrf.mxu0
      %v2412 = vadd.f32 0.0, %v2411
      %v2413 = vpop.f32.mrf.mxu0
      %2414 = vmatprep.mubr.f32.mxu0 0.0
      %2415 = vmatmul.mubr.f32.gmra.mxu0 %v2311
      %v2416 = vpop.f32.mrf.mxu0
      %v2417 = vadd.f32 0.0, %v2416
      %v2418 = vpop.f32.mrf.mxu0
      %2419 = vmatprep.mubr.f32.mxu0 0.0
      %2420 = vmatmul.mubr.f32.gmra.mxu0 %v2314
      %v2421 = vpop.f32.mrf.mxu0
      %v2422 = vadd.f32 0.0, %v2421
      %v2423 = vpop.f32.mrf.mxu0
      %2424 = vmatprep.mubr.f32.mxu0 0.0
      %2425 = vmatmul.mubr.f32.gmra.mxu0 %v2317
      %v2426 = vpop.f32.mrf.mxu0
      %v2427 = vadd.f32 0.0, %v2426
      %v2428 = vpop.f32.mrf.mxu0
      %2429 = vmatprep.mubr.f32.mxu0 0.0
      %2430 = vmatmul.mubr.f32.gmra.mxu0 %v2320
      %v2431 = vpop.f32.mrf.mxu0
      %v2432 = vadd.f32 0.0, %v2431
      %v2433 = vpop.f32.mrf.mxu0
      %2434 = vmatprep.mubr.f32.mxu0 0.0
      %2435 = vmatmul.mubr.f32.gmra.mxu0 %v2323
      %v2436 = vpop.f32.mrf.mxu0
      %v2437 = vadd.f32 0.0, %v2436
      %v2438 = vpop.f32.mrf.mxu0
      %2439 = vmatprep.mubr.f32.mxu0 0.0
      %2440 = vmatmul.mubr.f32.gmra.mxu0 %v2326
      %v2441 = vpop.f32.mrf.mxu0
      %v2442 = vadd.f32 0.0, %v2441
      %v2443 = vpop.f32.mrf.mxu0
      %2444 = vmatprep.mubr.f32.mxu0 0.0
      %2445 = vmatmul.mubr.f32.gmra.mxu0 %v2329
      %v2446 = vpop.f32.mrf.mxu0
      %v2447 = vadd.f32 0.0, %v2446
      %v2448 = vpop.f32.mrf.mxu0
      %2449 = vmatprep.mubr.f32.mxu0 0.0
      %2450 = vmatmul.mubr.f32.gmra.mxu0 %v2332
      %v2451 = vpop.f32.mrf.mxu0
      %v2452 = vadd.f32 0.0, %v2451
      %v2453 = vpop.f32.mrf.mxu0
      %2454 = vmatprep.mubr.f32.mxu0 0.0
      %2455 = vmatmul.mubr.f32.gmra.mxu0 %v2335
      %v2456 = vpop.f32.mrf.mxu0
      %v2457 = vadd.f32 0.0, %v2456
      %v2458 = vpop.f32.mrf.mxu0
      %2459 = vmatprep.mubr.f32.mxu0 0.0
      %2460 = vmatmul.mubr.f32.gmra.mxu0 %v2338
      %v2461 = vpop.f32.mrf.mxu0
      %v2462 = vadd.f32 0.0, %v2461
      %v2463 = vpop.f32.mrf.mxu0
      %2464 = vdwg.mxu0
      %v2465 = vmul.f32 %v2407, %v624
      %v2466 = vmul.f32 %v2412, %v625
      %v2467 = vmul.f32 %v2417, %v626
      %v2468 = vmul.f32 %v2422, %v627
      %v2469 = vmul.f32 %v2427, %v628
      %v2470 = vmul.f32 %v2432, %v629
      %v2471 = vmul.f32 %v2437, %v630
      %v2472 = vmul.f32 %v2442, %v631
      %v2473 = vmul.f32 %v2447, %v632
      %v2474 = vmul.f32 %v2452, %v633
      %v2475 = vmul.f32 %v2457, %v634
      %v2476 = vmul.f32 %v2462, %v635
      %v2477 = vadd.f32 %v2465, %v2468
      %v2478 = vadd.f32 %v2466, %v2469
      %v2479 = vadd.f32 %v2467, %v2470
      %v2480 = vadd.f32 %v2477, %v2471
      %v2481 = vadd.f32 %v2478, %v2472
      %v2482 = vadd.f32 %v2479, %v2473
      %v2483 = vadd.f32 %v2480, %v2474
      %v2484 = vadd.f32 %v2481, %v2475
      %v2485 = vadd.f32 %v2482, %v2476
      %s2486 = scalar_lea.vmem %s7, 128
      %v2487 = vld [vmem:[%s2486] sm:$0xff]
      %v2488 = vld [vmem:[%s2486 + $0x8] sm:$0xff]
      %v2489 = vld [vmem:[%s2486 + $0x10] sm:$0xff]
      %v2490 = vld [vmem:[%s2486 + $0x18] sm:$0xff]
      %v2491 = vld [vmem:[%s2486 + $0x20] sm:$0xff]
      %v2492 = vld [vmem:[%s2486 + $0x28] sm:$0xff]
      %v2493 = vld [vmem:[%s2486 + $0x30] sm:$0xff]
      %v2494 = vld [vmem:[%s2486 + $0x38] sm:$0xff]
      %v2495 = vld [vmem:[%s2486 + $0x40] sm:$0xff]
      %v2496 = vld [vmem:[%s2486 + $0x48] sm:$0xff]
      %v2497 = vld [vmem:[%s2486 + $0x50] sm:$0xff]
      %v2498 = vld [vmem:[%s2486 + $0x58] sm:$0xff]
      %v2499 = vld [vmem:[%s2486 + $0x60] sm:$0xff]
      %v2500 = vld [vmem:[%s2486 + $0x68] sm:$0xff]
      %v2501 = vld [vmem:[%s2486 + $0x70] sm:$0xff]
      %v2502 = vld [vmem:[%s2486 + $0x78] sm:$0xff]
      %2503 = vmatprep.subr.mxu0 0.0
      %2504 = vmatpush1.msra.mxu0 %v2502
      %2505 = vmatprep.subr.mxu0 0.0
      %2506 = vmatpush1.msra.mxu0 %v2501
      %2507 = vmatprep.subr.mxu0 0.0
      %2508 = vmatpush1.msra.mxu0 %v2500
      %2509 = vmatprep.subr.mxu0 0.0
      %2510 = vmatpush1.msra.mxu0 %v2499
      %2511 = vmatprep.subr.mxu0 0.0
      %2512 = vmatpush1.msra.mxu0 %v2498
      %2513 = vmatprep.subr.mxu0 0.0
      %2514 = vmatpush1.msra.mxu0 %v2497
      %2515 = vmatprep.subr.mxu0 0.0
      %2516 = vmatpush1.msra.mxu0 %v2496
      %2517 = vmatprep.subr.mxu0 0.0
      %2518 = vmatpush1.msra.mxu0 %v2495
      %2519 = vmatprep.subr.mxu0 0.0
      %2520 = vmatpush1.msra.mxu0 %v2494
      %2521 = vmatprep.subr.mxu0 0.0
      %2522 = vmatpush1.msra.mxu0 %v2493
      %2523 = vmatprep.subr.mxu0 0.0
      %2524 = vmatpush1.msra.mxu0 %v2492
      %2525 = vmatprep.subr.mxu0 0.0
      %2526 = vmatpush1.msra.mxu0 %v2491
      %2527 = vmatprep.subr.mxu0 0.0
      %2528 = vmatpush1.msra.mxu0 %v2490
      %2529 = vmatprep.subr.mxu0 0.0
      %2530 = vmatpush1.msra.mxu0 %v2489
      %2531 = vmatprep.subr.mxu0 0.0
      %2532 = vmatpush1.msra.mxu0 %v2488
      %2533 = vmatprep.subr.mxu0 0.0
      %2534 = vmatpush1.msra.mxu0 %v2487
      %2535 = vmatprep.subr.mxu0 0.0
      %2536 = vmatpush2.msra.mxu0 0.0
      %2537 = vmatprep.subr.mxu0 0.0
      %2538 = vmatpush2.msra.mxu0 0.0
      %2539 = vmatprep.subr.mxu0 0.0
      %2540 = vmatpush2.msra.mxu0 0.0
      %2541 = vmatprep.subr.mxu0 0.0
      %2542 = vmatpush2.msra.mxu0 0.0
      %2543 = vmatprep.subr.mxu0 0.0
      %2544 = vmatpush2.msra.mxu0 0.0
      %2545 = vmatprep.subr.mxu0 0.0
      %2546 = vmatpush2.msra.mxu0 0.0
      %2547 = vmatprep.subr.mxu0 0.0
      %2548 = vmatpush2.msra.mxu0 0.0
      %2549 = vmatprep.subr.mxu0 0.0
      %2550 = vmatpush2.msra.mxu0 0.0
      %2551 = vmatprep.subr.mxu0 0.0
      %2552 = vmatpush2.msra.mxu0 0.0
      %2553 = vmatprep.subr.mxu0 0.0
      %2554 = vmatpush2.msra.mxu0 0.0
      %2555 = vmatprep.subr.mxu0 0.0
      %2556 = vmatpush2.msra.mxu0 0.0
      %2557 = vmatprep.subr.mxu0 0.0
      %2558 = vmatpush2.msra.mxu0 0.0
      %2559 = vmatprep.subr.mxu0 0.0
      %2560 = vmatpush2.msra.mxu0 0.0
      %2561 = vmatprep.subr.mxu0 0.0
      %2562 = vmatpush2.msra.mxu0 0.0
      %2563 = vmatprep.subr.mxu0 0.0
      %2564 = vmatpush2.msra.mxu0 0.0
      %2565 = vmatprep.subr.mxu0 0.0
      %2566 = vmatpush2.msra.mxu0 0.0
      %2567 = vmatprep.mubr.f32.mxu0 0.0
      %2568 = vmatmul.mubr.f32.gmra.mxu0 %v2483
      %v2569 = vpop.f32.mrf.mxu0
      %v2570 = vadd.f32 0.0, %v2569
      %v2571 = vpop.f32.mrf.mxu0
      %2572 = vmatprep.mubr.f32.mxu0 0.0
      %2573 = vmatmul.mubr.f32.gmra.mxu0 %v2484
      %v2574 = vpop.f32.mrf.mxu0
      %v2575 = vadd.f32 0.0, %v2574
      %v2576 = vpop.f32.mrf.mxu0
      %2577 = vmatprep.mubr.f32.mxu0 0.0
      %2578 = vmatmul.mubr.f32.gmra.mxu0 %v2485
      %v2579 = vpop.f32.mrf.mxu0
      %v2580 = vadd.f32 0.0, %v2579
      %v2581 = vpop.f32.mrf.mxu0
      %2582 = vdwg.mxu0
      %v2583 = vadd.f32 %v1750, %v2570
      %v2584 = vadd.f32 %v1751, %v2575
      %v2585 = vadd.f32 %v1752, %v2580
      %v2586 = vlaneseq
      %v2587 = vshrl.u32 %v2586, 7
      %v2588 = vsub.s32 4, %v2587
      %v2589 = vrot.slane %v1754, %v2588
      %v2590 = vadd.f32 %v2583, %v2589
      %v2591 = vadd.f32 %v2584, %v2589
      %v2592 = vadd.f32 %v2585, %v2589
      %2593 = vadd.xlane.f32.xlu0 %v2590
      %v2594 = vpop.xlane.xlu0 %2593
      %2595 = vadd.xlane.f32.xlu0 %v2591
      %v2596 = vpop.xlane.xlu0 %2595
      %2597 = vadd.xlane.f32.xlu0 %v2592
      %v2598 = vpop.xlane.xlu0 %2597
      %v2599 = vmul.f32 %v2594, 0.03125
      %v2600 = vmul.f32 %v2596, 0.03125
      %v2601 = vmul.f32 %v2598, 0.03125
      %v2602 = vsub.f32 %v2590, %v2599
      %v2603 = vsub.f32 %v2591, %v2600
      %v2604 = vsub.f32 %v2592, %v2601
      %v2605 = vmul.f32 %v2602, %v448
      %v2606 = vmul.f32 %v2603, %v448
      %v2607 = vmul.f32 %v2604, %v448
      %v2608 = vmul.f32 %v2605, %v2605
      %v2609 = vmul.f32 %v2606, %v2606
      %v2610 = vmul.f32 %v2607, %v2607
      %2611 = vadd.xlane.f32.xlu0 %v2608
      %v2612 = vpop.xlane.xlu0 %2611
      %2613 = vadd.xlane.f32.xlu0 %v2609
      %v2614 = vpop.xlane.xlu0 %2613
      %2615 = vadd.xlane.f32.xlu0 %v2610
      %v2616 = vpop.xlane.xlu0 %2615
      %v2617 = vmul.f32 %v2612, 0.03125
      %v2618 = vmul.f32 %v2614, 0.03125
      %v2619 = vmul.f32 %v2616, 0.03125
      %v2620 = vadd.f32 %v2617, 1e-05
      %v2621 = vadd.f32 %v2618, 1e-05
      %v2622 = vadd.f32 %v2619, 1e-05
      %v2623 = vrsqrt.pop %v2620
      %v2624 = vrsqrt.pop %v2621
      %v2625 = vrsqrt.pop %v2622
      %v2626 = vmul.f32 %v2605, %v2623
      %v2627 = vmul.f32 %v2606, %v2624
      %v2628 = vmul.f32 %v2607, %v2625
      %v2629 = vlaneseq
      %v2630 = vshrl.u32 %v2629, 7
      %v2631 = vsub.s32 2, %v2630
      %v2632 = vrot.slane %v1754, %v2631
      %v2633 = vmul.f32 %v2626, %v2632
      %v2634 = vmul.f32 %v2627, %v2632
      %v2635 = vmul.f32 %v2628, %v2632
      %v2636 = vlaneseq
      %v2637 = vshrl.u32 %v2636, 7
      %v2638 = vsub.s32 3, %v2637
      %v2639 = vrot.slane %v1754, %v2638
      %v2640 = vadd.f32 %v2633, %v2639
      %v2641 = vadd.f32 %v2634, %v2639
      %v2642 = vadd.f32 %v2635, %v2639
      %s2643 = scalar_lea.vmem %s8, 128
      %v2644 = vld [vmem:[%s2643] sm:$0xff]
      %v2645 = vld [vmem:[%s2643 + $0x8] sm:$0xff]
      %v2646 = vld [vmem:[%s2643 + $0x10] sm:$0xff]
      %v2647 = vld [vmem:[%s2643 + $0x18] sm:$0xff]
      %v2648 = vld [vmem:[%s2643 + $0x20] sm:$0xff]
      %v2649 = vld [vmem:[%s2643 + $0x28] sm:$0xff]
      %v2650 = vld [vmem:[%s2643 + $0x30] sm:$0xff]
      %v2651 = vld [vmem:[%s2643 + $0x38] sm:$0xff]
      %v2652 = vld [vmem:[%s2643 + $0x40] sm:$0xff]
      %v2653 = vld [vmem:[%s2643 + $0x48] sm:$0xff]
      %v2654 = vld [vmem:[%s2643 + $0x50] sm:$0xff]
      %v2655 = vld [vmem:[%s2643 + $0x58] sm:$0xff]
      %v2656 = vld [vmem:[%s2643 + $0x60] sm:$0xff]
      %v2657 = vld [vmem:[%s2643 + $0x68] sm:$0xff]
      %v2658 = vld [vmem:[%s2643 + $0x70] sm:$0xff]
      %v2659 = vld [vmem:[%s2643 + $0x78] sm:$0xff]
      %v2660 = vlaneseq
      %v2661 = vshrl.u32 %v2660, 7
      %v2662 = vsub.s32 5, %v2661
      %v2663 = vrot.slane %v1754, %v2662
      %2664 = vmatprep.subr.mxu0 0.0
      %2665 = vmatpush1.msra.mxu0 %v2659
      %2666 = vmatprep.subr.mxu0 0.0
      %2667 = vmatpush1.msra.mxu0 %v2658
      %2668 = vmatprep.subr.mxu0 0.0
      %2669 = vmatpush1.msra.mxu0 %v2657
      %2670 = vmatprep.subr.mxu0 0.0
      %2671 = vmatpush1.msra.mxu0 %v2656
      %2672 = vmatprep.subr.mxu0 0.0
      %2673 = vmatpush1.msra.mxu0 %v2655
      %2674 = vmatprep.subr.mxu0 0.0
      %2675 = vmatpush1.msra.mxu0 %v2654
      %2676 = vmatprep.subr.mxu0 0.0
      %2677 = vmatpush1.msra.mxu0 %v2653
      %2678 = vmatprep.subr.mxu0 0.0
      %2679 = vmatpush1.msra.mxu0 %v2652
      %2680 = vmatprep.subr.mxu0 0.0
      %2681 = vmatpush1.msra.mxu0 %v2651
      %2682 = vmatprep.subr.mxu0 0.0
      %2683 = vmatpush1.msra.mxu0 %v2650
      %2684 = vmatprep.subr.mxu0 0.0
      %2685 = vmatpush1.msra.mxu0 %v2649
      %2686 = vmatprep.subr.mxu0 0.0
      %2687 = vmatpush1.msra.mxu0 %v2648
      %2688 = vmatprep.subr.mxu0 0.0
      %2689 = vmatpush1.msra.mxu0 %v2647
      %2690 = vmatprep.subr.mxu0 0.0
      %2691 = vmatpush1.msra.mxu0 %v2646
      %2692 = vmatprep.subr.mxu0 0.0
      %2693 = vmatpush1.msra.mxu0 %v2645
      %2694 = vmatprep.subr.mxu0 0.0
      %2695 = vmatpush1.msra.mxu0 %v2644
      %2696 = vmatprep.subr.mxu0 0.0
      %2697 = vmatpush2.msra.mxu0 0.0
      %2698 = vmatprep.subr.mxu0 0.0
      %2699 = vmatpush2.msra.mxu0 0.0
      %2700 = vmatprep.subr.mxu0 0.0
      %2701 = vmatpush2.msra.mxu0 0.0
      %2702 = vmatprep.subr.mxu0 0.0
      %2703 = vmatpush2.msra.mxu0 0.0
      %2704 = vmatprep.subr.mxu0 0.0
      %2705 = vmatpush2.msra.mxu0 0.0
      %2706 = vmatprep.subr.mxu0 0.0
      %2707 = vmatpush2.msra.mxu0 0.0
      %2708 = vmatprep.subr.mxu0 0.0
      %2709 = vmatpush2.msra.mxu0 0.0
      %2710 = vmatprep.subr.mxu0 0.0
      %2711 = vmatpush2.msra.mxu0 0.0
      %2712 = vmatprep.subr.mxu0 0.0
      %2713 = vmatpush2.msra.mxu0 0.0
      %2714 = vmatprep.subr.mxu0 0.0
      %2715 = vmatpush2.msra.mxu0 0.0
      %2716 = vmatprep.subr.mxu0 0.0
      %2717 = vmatpush2.msra.mxu0 0.0
      %2718 = vmatprep.subr.mxu0 0.0
      %2719 = vmatpush2.msra.mxu0 0.0
      %2720 = vmatprep.subr.mxu0 0.0
      %2721 = vmatpush2.msra.mxu0 0.0
      %2722 = vmatprep.subr.mxu0 0.0
      %2723 = vmatpush2.msra.mxu0 0.0
      %2724 = vmatprep.subr.mxu0 0.0
      %2725 = vmatpush2.msra.mxu0 0.0
      %2726 = vmatprep.subr.mxu0 0.0
      %2727 = vmatpush2.msra.mxu0 0.0
      %2728 = vmatprep.mubr.f32.mxu0 0.0
      %2729 = vmatmul.mubr.f32.gmra.mxu0 %v2640
      %v2730 = vpop.f32.mrf.mxu0
      %v2731 = vadd.f32 %v2663, %v2730
      %v2732 = vpop.f32.mrf.mxu0
      %2733 = vmatprep.mubr.f32.mxu0 0.0
      %2734 = vmatmul.mubr.f32.gmra.mxu0 %v2641
      %v2735 = vpop.f32.mrf.mxu0
      %v2736 = vadd.f32 %v2663, %v2735
      %v2737 = vpop.f32.mrf.mxu0
      %2738 = vmatprep.mubr.f32.mxu0 0.0
      %2739 = vmatmul.mubr.f32.gmra.mxu0 %v2642
      %v2740 = vpop.f32.mrf.mxu0
      %v2741 = vadd.f32 %v2663, %v2740
      %v2742 = vpop.f32.mrf.mxu0
      %2743 = vdwg.mxu0
      %v2744 = vmul.f32 %v2731, 1.702
      %v2745 = vmul.f32 %v2736, 1.702
      %v2746 = vmul.f32 %v2741, 1.702
      %v2747 = vxor.u32 %v2744, 2147483648
      %v2748 = vxor.u32 %v2745, 2147483648
      %v2749 = vxor.u32 %v2746, 2147483648
      %v2750 = vmul.f32 %v2747, 1.442695
      %v2751 = vpow.pop %v2750
      %v2752 = vmul.f32 %v2748, 1.442695
      %v2753 = vpow.pop %v2752
      %v2754 = vmul.f32 %v2749, 1.442695
      %v2755 = vpow.pop %v2754
      %v2756 = vadd.f32 %v2751, 1.0
      %v2757 = vadd.f32 %v2753, 1.0
      %v2758 = vadd.f32 %v2755, 1.0
      %v2759 = vrcp.pop %v2756
      %v2760 = vmul.f32 1.0, %v2759
      %v2761 = vrcp.pop %v2757
      %v2762 = vmul.f32 1.0, %v2761
      %v2763 = vrcp.pop %v2758
      %v2764 = vmul.f32 1.0, %v2763
      %v2765 = vmul.f32 %v2731, %v2760
      %v2766 = vmul.f32 %v2736, %v2762
      %v2767 = vmul.f32 %v2741, %v2764
      %s2768 = scalar_lea.vmem %s9, 128
      %v2769 = vld [vmem:[%s2768] sm:$0xff]
      %v2770 = vld [vmem:[%s2768 + $0x8] sm:$0xff]
      %v2771 = vld [vmem:[%s2768 + $0x10] sm:$0xff]
      %v2772 = vld [vmem:[%s2768 + $0x18] sm:$0xff]
      %v2773 = vld [vmem:[%s2768 + $0x20] sm:$0xff]
      %v2774 = vld [vmem:[%s2768 + $0x28] sm:$0xff]
      %v2775 = vld [vmem:[%s2768 + $0x30] sm:$0xff]
      %v2776 = vld [vmem:[%s2768 + $0x38] sm:$0xff]
      %v2777 = vld [vmem:[%s2768 + $0x40] sm:$0xff]
      %v2778 = vld [vmem:[%s2768 + $0x48] sm:$0xff]
      %v2779 = vld [vmem:[%s2768 + $0x50] sm:$0xff]
      %v2780 = vld [vmem:[%s2768 + $0x58] sm:$0xff]
      %v2781 = vld [vmem:[%s2768 + $0x60] sm:$0xff]
      %v2782 = vld [vmem:[%s2768 + $0x68] sm:$0xff]
      %v2783 = vld [vmem:[%s2768 + $0x70] sm:$0xff]
      %v2784 = vld [vmem:[%s2768 + $0x78] sm:$0xff]
      %2785 = vmatprep.subr.mxu0 0.0
      %2786 = vmatpush1.msra.mxu0 %v2784
      %2787 = vmatprep.subr.mxu0 0.0
      %2788 = vmatpush1.msra.mxu0 %v2783
      %2789 = vmatprep.subr.mxu0 0.0
      %2790 = vmatpush1.msra.mxu0 %v2782
      %2791 = vmatprep.subr.mxu0 0.0
      %2792 = vmatpush1.msra.mxu0 %v2781
      %2793 = vmatprep.subr.mxu0 0.0
      %2794 = vmatpush1.msra.mxu0 %v2780
      %2795 = vmatprep.subr.mxu0 0.0
      %2796 = vmatpush1.msra.mxu0 %v2779
      %2797 = vmatprep.subr.mxu0 0.0
      %2798 = vmatpush1.msra.mxu0 %v2778
      %2799 = vmatprep.subr.mxu0 0.0
      %2800 = vmatpush1.msra.mxu0 %v2777
      %2801 = vmatprep.subr.mxu0 0.0
      %2802 = vmatpush1.msra.mxu0 %v2776
      %2803 = vmatprep.subr.mxu0 0.0
      %2804 = vmatpush1.msra.mxu0 %v2775
      %2805 = vmatprep.subr.mxu0 0.0
      %2806 = vmatpush1.msra.mxu0 %v2774
      %2807 = vmatprep.subr.mxu0 0.0
      %2808 = vmatpush1.msra.mxu0 %v2773
      %2809 = vmatprep.subr.mxu0 0.0
      %2810 = vmatpush1.msra.mxu0 %v2772
      %2811 = vmatprep.subr.mxu0 0.0
      %2812 = vmatpush1.msra.mxu0 %v2771
      %2813 = vmatprep.subr.mxu0 0.0
      %2814 = vmatpush1.msra.mxu0 %v2770
      %2815 = vmatprep.subr.mxu0 0.0
      %2816 = vmatpush1.msra.mxu0 %v2769
      %2817 = vmatprep.subr.mxu0 0.0
      %2818 = vmatpush2.msra.mxu0 0.0
      %2819 = vmatprep.subr.mxu0 0.0
      %2820 = vmatpush2.msra.mxu0 0.0
      %2821 = vmatprep.subr.mxu0 0.0
      %2822 = vmatpush2.msra.mxu0 0.0
      %2823 = vmatprep.subr.mxu0 0.0
      %2824 = vmatpush2.msra.mxu0 0.0
      %2825 = vmatprep.subr.mxu0 0.0
      %2826 = vmatpush2.msra.mxu0 0.0
      %2827 = vmatprep.subr.mxu0 0.0
      %2828 = vmatpush2.msra.mxu0 0.0
      %2829 = vmatprep.subr.mxu0 0.0
      %2830 = vmatpush2.msra.mxu0 0.0
      %2831 = vmatprep.subr.mxu0 0.0
      %2832 = vmatpush2.msra.mxu0 0.0
      %2833 = vmatprep.subr.mxu0 0.0
      %2834 = vmatpush2.msra.mxu0 0.0
      %2835 = vmatprep.subr.mxu0 0.0
      %2836 = vmatpush2.msra.mxu0 0.0
      %2837 = vmatprep.subr.mxu0 0.0
      %2838 = vmatpush2.msra.mxu0 0.0
      %2839 = vmatprep.subr.mxu0 0.0
      %2840 = vmatpush2.msra.mxu0 0.0
      %2841 = vmatprep.subr.mxu0 0.0
      %2842 = vmatpush2.msra.mxu0 0.0
      %2843 = vmatprep.subr.mxu0 0.0
      %2844 = vmatpush2.msra.mxu0 0.0
      %2845 = vmatprep.subr.mxu0 0.0
      %2846 = vmatpush2.msra.mxu0 0.0
      %2847 = vmatprep.subr.mxu0 0.0
      %2848 = vmatpush2.msra.mxu0 0.0
      %2849 = vmatprep.mubr.f32.mxu0 0.0
      %2850 = vmatmul.mubr.f32.gmra.mxu0 %v2765
      %v2851 = vpop.f32.mrf.mxu0
      %v2852 = vadd.f32 0.0, %v2851
      %v2853 = vpop.f32.mrf.mxu0
      %2854 = vmatprep.mubr.f32.mxu0 0.0
      %2855 = vmatmul.mubr.f32.gmra.mxu0 %v2766
      %v2856 = vpop.f32.mrf.mxu0
      %v2857 = vpop.f32.mrf.mxu0
      %2858 = vmatprep.mubr.f32.mxu0 0.0
      %2859 = vmatmul.mubr.f32.gmra.mxu0 %v2767
      %v2860 = vpop.f32.mrf.mxu0
      %v2861 = vpop.f32.mrf.mxu0
      %2862 = vdwg.mxu0
      %v2863 = vadd.f32 %v2590, %v2852
      %v2864 = vlaneseq
      %v2865 = vshrl.u32 %v2864, 7
      %v2866 = vsub.s32 6, %v2865
      %v2867 = vrot.slane %v1754, %v2866
      %v2868 = vadd.f32 %v2863, %v2867
      %v2869 = vld [vmem:[%s11] sm:$0x1]
      %v2870 = vld [vmem:[%s11 + $0x1] sm:$0x1]
      %2871 = vadd.xlane.f32.xlu0 %v2868
      %v2872 = vpop.xlane.xlu0 %2871
      %v2873 = vmul.f32 %v2872, 0.03125
      %v2874 = vsub.f32 %v2868, %v2873
      %v2875 = vmul.f32 %v2874, %v448
      %v2876 = vmul.f32 %v2875, %v2875
      %2877 = vadd.xlane.f32.xlu0 %v2876
      %v2878 = vpop.xlane.xlu0 %2877
      %v2879 = vmul.f32 %v2878, 0.03125
      %v2880 = vadd.f32 %v2879, 1e-05
      %v2881 = vrsqrt.pop %v2880
      %v2882 = vmul.f32 %v2875, %v2881
      %v2883 = vlaneseq
      %v2884 = vshrl.u32 %v2883, 7
      %v2885 = vsub.s32 0, %v2884
      %v2886 = vrot.slane %v2869, %v2885
      %v2887 = vmul.f32 %v2882, %v2886
      %v2888 = vlaneseq
      %v2889 = vshrl.u32 %v2888, 7
      %v2890 = vsub.s32 0, %v2889
      %v2891 = vrot.slane %v2870, %v2890
      %v2892 = vadd.f32 %v2887, %v2891
      %v2893 = vld [vmem:[%s12] sm:$0xff]
      %v2894 = vld [vmem:[%s12 + $0x8] sm:$0xff]
      %v2895 = vld [vmem:[%s12 + $0x10] sm:$0xff]
      %v2896 = vld [vmem:[%s12 + $0x18] sm:$0xff]
      %v2897 = vld [vmem:[%s12 + $0x20] sm:$0xff]
      %v2898 = vld [vmem:[%s12 + $0x28] sm:$0xff]
      %v2899 = vld [vmem:[%s12 + $0x30] sm:$0xff]
      %v2900 = vld [vmem:[%s12 + $0x38] sm:$0xff]
      %v2901 = vld [vmem:[%s12 + $0x40] sm:$0xff]
      %v2902 = vld [vmem:[%s12 + $0x48] sm:$0xff]
      %v2903 = vld [vmem:[%s12 + $0x50] sm:$0xff]
      %v2904 = vld [vmem:[%s12 + $0x58] sm:$0xff]
      %v2905 = vld [vmem:[%s12 + $0x60] sm:$0xff]
      %v2906 = vld [vmem:[%s12 + $0x68] sm:$0xff]
      %v2907 = vld [vmem:[%s12 + $0x70] sm:$0xff]
      %v2908 = vld [vmem:[%s12 + $0x78] sm:$0xff]
      %2909 = vmatprep.subr.mxu0 0.0
      %2910 = vmatpush1.msra.mxu0 %v2908
      %2911 = vmatprep.subr.mxu0 0.0
      %2912 = vmatpush1.msra.mxu0 %v2907
      %2913 = vmatprep.subr.mxu0 0.0
      %2914 = vmatpush1.msra.mxu0 %v2906
      %2915 = vmatprep.subr.mxu0 0.0
      %2916 = vmatpush1.msra.mxu0 %v2905
      %2917 = vmatprep.subr.mxu0 0.0
      %2918 = vmatpush1.msra.mxu0 %v2904
      %2919 = vmatprep.subr.mxu0 0.0
      %2920 = vmatpush1.msra.mxu0 %v2903
      %2921 = vmatprep.subr.mxu0 0.0
      %2922 = vmatpush1.msra.mxu0 %v2902
      %2923 = vmatprep.subr.mxu0 0.0
      %2924 = vmatpush1.msra.mxu0 %v2901
      %2925 = vmatprep.subr.mxu0 0.0
      %2926 = vmatpush1.msra.mxu0 %v2900
      %2927 = vmatprep.subr.mxu0 0.0
      %2928 = vmatpush1.msra.mxu0 %v2899
      %2929 = vmatprep.subr.mxu0 0.0
      %2930 = vmatpush1.msra.mxu0 %v2898
      %2931 = vmatprep.subr.mxu0 0.0
      %2932 = vmatpush1.msra.mxu0 %v2897
      %2933 = vmatprep.subr.mxu0 0.0
      %2934 = vmatpush1.msra.mxu0 %v2896
      %2935 = vmatprep.subr.mxu0 0.0
      %2936 = vmatpush1.msra.mxu0 %v2895
      %2937 = vmatprep.subr.mxu0 0.0
      %2938 = vmatpush1.msra.mxu0 %v2894
      %2939 = vmatprep.subr.mxu0 0.0
      %2940 = vmatpush1.msra.mxu0 %v2893
      %2941 = vmatprep.subr.mxu0 0.0
      %2942 = vmatpush2.msra.mxu0 0.0
      %2943 = vmatprep.subr.mxu0 0.0
      %2944 = vmatpush2.msra.mxu0 0.0
      %2945 = vmatprep.subr.mxu0 0.0
      %2946 = vmatpush2.msra.mxu0 0.0
      %2947 = vmatprep.subr.mxu0 0.0
      %2948 = vmatpush2.msra.mxu0 0.0
      %2949 = vmatprep.subr.mxu0 0.0
      %2950 = vmatpush2.msra.mxu0 0.0
      %2951 = vmatprep.subr.mxu0 0.0
      %2952 = vmatpush2.msra.mxu0 0.0
      %2953 = vmatprep.subr.mxu0 0.0
      %2954 = vmatpush2.msra.mxu0 0.0
      %2955 = vmatprep.subr.mxu0 0.0
      %2956 = vmatpush2.msra.mxu0 0.0
      %2957 = vmatprep.subr.mxu0 0.0
      %2958 = vmatpush2.msra.mxu0 0.0
      %2959 = vmatprep.subr.mxu0 0.0
      %2960 = vmatpush2.msra.mxu0 0.0
      %2961 = vmatprep.subr.mxu0 0.0
      %2962 = vmatpush2.msra.mxu0 0.0
      %2963 = vmatprep.subr.mxu0 0.0
      %2964 = vmatpush2.msra.mxu0 0.0
      %2965 = vmatprep.subr.mxu0 0.0
      %2966 = vmatpush2.msra.mxu0 0.0
      %2967 = vmatprep.subr.mxu0 0.0
      %2968 = vmatpush2.msra.mxu0 0.0
      %2969 = vmatprep.subr.mxu0 0.0
      %2970 = vmatpush2.msra.mxu0 0.0
      %2971 = vmatprep.subr.mxu0 0.0
      %2972 = vmatpush2.msra.mxu0 0.0
      %2973 = vmatprep.mubr.f32.mxu0 0.0
      %2974 = vmatmul.mubr.f32.gmra.mxu0 %v2892
      %v2975 = vpop.f32.mrf.mxu0
      %v2976 = vadd.f32 0.0, %v2975
      %v2977 = vpop.f32.mrf.mxu0
      %2978 = vdwg.mxu0
      %2979 = vst [vmem:[%s443] sm:$0xff] %v2976
      %p2980 = scmp.lt.s32.totalorder %s24, 1
      %s2981 = scalar_select %p2980, %s24, 1
      %s2982 = smul.addr %s2981, 8
      %s2983 = scalar_lea.vmem %s13, %s2982
      // Predicated region
      $region73: #{vision_encoder_zs.1} parent=71 // pred_check
        %p2984 = pneg %p320
      $region74: #{vision_encoder_zs.1} parent=71 // pred_check_branch
        %2986 = sbr.rel (%p2984) target = $region76
      $region75: #{vision_encoder_zs.1} parent=71 // pred_region
        _
      $region76: #{vision_encoder_zs.1} parent=71 // pred_fallthru
        _
    $region72: #{vision_encoder_zs.1} parent=5 // pred_fallthru
      _
    %p2987 = scmp.le.s32.totalorder 2, %s19
    // Predicated region
    $region77: #{vision_encoder_zs.1} parent=5 // pred_check
      %p2988 = pneg %p2987
    $region78: #{vision_encoder_zs.1} parent=5 // pred_check_branch
      %2990 = sbr.rel (%p2988) target = $region80
    $region79: #{vision_encoder_zs.1} parent=5 // pred_region
      %s2991 = ssub.s32 %s19, 2
      // Predicated region
      $region81: #{vision_encoder_zs.1} parent=79 // pred_check
        %p2992 = pneg %p326
      $region82: #{vision_encoder_zs.1} parent=79 // pred_check_branch
        %2994 = sbr.rel (%p2992) target = $region84
      $region83: #{vision_encoder_zs.1} parent=79 // pred_region
        %p2995 = scmp.lt.s32.totalorder %s25, 1
        %s2996 = scalar_select %p2995, %s25, 1
        %s2997 = smul.addr %s2996, 8
        %s2998 = scalar_lea.vmem %s13, %s2997
      $region84: #{vision_encoder_zs.1} parent=79 // pred_fallthru
        _
    $region80: #{vision_encoder_zs.1} parent=5 // pred_fallthru
      _
  $region6: #{vision_encoder_zs.1} parent=0 // loop_footer
    %s23 = sadd.s32 1, %s19
  $region7: #{vision_encoder_zs.1} parent=0 // loop_footer_branch
    %18 = sbr.rel target = $region3
  $region8: #{vision_encoder_zs.1} parent=0 // loop_exit
    _

</llo_original>
